<compile_context>
chip_gen: v5e
topology: v5e:2x2
jax: 0.10.0
libtpu: 0.0.40
codegen_flags: <defaults>
</compile_context>

<pallas_src>
import math
import jax
import jax.numpy as jnp
from jax.experimental import pallas as pl
from jax.experimental.pallas import tpu as pltpu

# ----------------------------- config (gpt-nano) -----------------------------
N_LAYER = 3
N_HEAD = 3
N_EMBD = 48
VOCAB_SIZE = 64
BLOCK_SIZE = 8
LN_EPS = 1e-5

HEAD_DIM = N_EMBD // N_HEAD          # 16
C_PAD = 128                          # lane-padded channel dim (48 -> 128)
QKV_PAD = 256                        # lane-padded 3*C dim   (144 -> 256)
FC_PAD = 256                         # lane-padded 4*C dim   (192 -> 256)
VOCAB_PAD = 128                      # lane-padded vocab dim (64 -> 128)


# ------------------------------ fused Pallas kernel --------------------------
def gpt_fused_kernel(
    idx_ref,                         # SMEM (B, T) int32
    wte_ref, wpe_ref,                # VMEM (VOCAB_PAD, C_PAD), (BLOCK_SIZE, C_PAD) f32
    ln1w_ref, ln1b_ref,              # (1, C_PAD) f32 (current layer)
    wqkv_ref, bqkv_ref,              # (C_PAD, QKV_PAD) bf16, (1, QKV_PAD) f32
    wap_ref, bap_ref,                # (N_EMBD, C_PAD) bf16, (1, C_PAD) f32
    ln2w_ref, ln2b_ref,              # (1, C_PAD) f32
    wfc_ref, bfc_ref,                # (C_PAD, FC_PAD) bf16, (1, FC_PAD) f32
    wmp_ref, bmp_ref,                # (FC_PAD, C_PAD) bf16, (1, C_PAD) f32
    wlm_ref, blm_ref,                # (C_PAD, VOCAB_PAD) bf16, (1, VOCAB_PAD) f32
    o_ref,                           # (B, T, VOCAB_PAD) f32
    x_scr,                           # VMEM (B, T, C_PAD) f32 residual stream
):
    f32, bf16 = jnp.float32, jnp.bfloat16
    l = pl.program_id(0)
    B, T = idx_ref.shape
    C, HD, NH = N_EMBD, HEAD_DIM, N_HEAD

    # -------- layer 0: fused token + position embedding (drop == identity) ---
    @pl.when(l == 0)
    def _():
        for b in range(B):
            for t in range(T):
                tok = idx_ref[b, t]
                x_scr[b, t, :] = wte_ref[tok, :] + wpe_ref[t, :]

    x = x_scr[...]                                       # (B, T, C_PAD)

    # lane mask of the true channels (LayerNorm variance); padded lanes of x
    # stay exactly 0 through every residual (padded weight rows/cols are 0).
    lane = jax.lax.broadcasted_iota(jnp.int32, (1, 1, C_PAD), 2)
    cmask = (lane < C).astype(f32)
    inv_c = 1.0 / C

    # additive causal mask (0 on/below diagonal, -1e30 above)
    row = jax.lax.broadcasted_iota(jnp.int32, (T, T), 0)
    col = jax.lax.broadcasted_iota(jnp.int32, (T, T), 1)
    mask_add = jnp.where(col <= row, 0.0, -1e30).astype(f32)

    scale = 1.0 / math.sqrt(HD)
    gelu_c = math.sqrt(2.0 / math.pi)

    def ln_stats(v):
        # mean over true channels (padded lanes are exactly 0), masked variance
        mu = jnp.sum(v, axis=-1, keepdims=True) * inv_c
        cent = v - mu
        var = jnp.sum(cent * cent * cmask, axis=-1, keepdims=True) * inv_c
        return cent * jax.lax.rsqrt(var + LN_EPS)

    def mm(a, w):
        # (B, T, K) @ (K, N) -> (B, T, N); bf16 MXU inputs (w already bf16),
        # f32 accumulation.
        Bv, Tv, K = a.shape
        y = jax.lax.dot_general(
            a.reshape(Bv * Tv, K).astype(bf16), w,
            dimension_numbers=(((1,), (0,)), ((), ())),
            preferred_element_type=f32)
        return y.reshape(Bv, Tv, w.shape[-1])

    # ---------------- ln_1 + causal self-attention (heads batched) -----------
    h1 = ln_stats(x) * ln1w_ref[...] + ln1b_ref[...]
    qkv = (mm(h1, wqkv_ref[...]) + bqkv_ref[...]).astype(bf16)   # cast once

    def heads(base):
        # gather head h into batch position h*B + b  -> (NH*B, T, HD)
        return jnp.concatenate(
            [qkv[:, :, base + h * HD: base + (h + 1) * HD] for h in range(NH)],
            axis=0)

    qz, kz, vz = heads(0), heads(C), heads(2 * C)
    att = jnp.einsum('ztd,zsd->zts', qz, kz,
                     preferred_element_type=f32) * scale          # (NH*B, T, T)
    att = att + mask_add
    att = att - jnp.max(att, axis=-1, keepdims=True)
    p = jnp.exp(att)
    p = p * pl.reciprocal(jnp.sum(p, axis=-1, keepdims=True), approx=True)
    yz = jnp.einsum('zts,zsd->ztd', p.astype(bf16), vz,
                    preferred_element_type=f32)                   # (NH*B, T, HD)
    # concat heads back along lanes -> (B, T, C); single merged c_proj matmul
    y_cat = jnp.concatenate([yz[h * B:(h + 1) * B] for h in range(NH)], axis=-1)
    x = x + mm(y_cat, wap_ref[...]) + bap_ref[...]

    # ---------------- ln_2 + MLP (NewGELU) -----------------------------------
    h2 = ln_stats(x) * ln2w_ref[...] + ln2b_ref[...]
    hfc = mm(h2, wfc_ref[...]) + bfc_ref[...]                     # (B, T, FC_PAD)
    g = 0.5 * hfc * (1.0 + jnp.tanh(gelu_c * (hfc + 0.044715 * hfc * hfc * hfc)))
    x = x + mm(g, wmp_ref[...]) + bmp_ref[...]

    x_scr[...] = x

    # -------- final LayerNorm (affine folded into lm_head) + logits ----------
    @pl.when(l == N_LAYER - 1)
    def _():
        o_ref[...] = mm(ln_stats(x), wlm_ref[...]) + blm_ref[...]


# ------------------------------ JAX wrapper -----------------------------------
def _per_layer_spec(shape):
    nd = len(shape)
    return pl.BlockSpec((None,) + shape, lambda l, _n=nd: (l,) + (0,) * _n)


def _const_spec(shape):
    nd = len(shape)
    return pl.BlockSpec(shape, lambda l, _n=nd: (0,) * _n)


@jax.jit
def gpt_forward(idx, packed):
    # idx: (B, T) int32 token ids
    B, T = idx.shape
    assert T <= BLOCK_SIZE

    in_specs = [
        pl.BlockSpec(memory_space=pltpu.MemorySpace.SMEM),        # idx
        _const_spec((VOCAB_PAD, C_PAD)),                          # wte
        _const_spec((BLOCK_SIZE, C_PAD)),                         # wpe
        _per_layer_spec((1, C_PAD)),                              # ln1_w
        _per_layer_spec((1, C_PAD)),                              # ln1_b
        _per_layer_spec((C_PAD, QKV_PAD)),                        # w_qkv
        _per_layer_spec((1, QKV_PAD)),                            # b_qkv
        _per_layer_spec((N_EMBD, C_PAD)),                         # w_ap
        _per_layer_spec((1, C_PAD)),                              # b_ap
        _per_layer_spec((1, C_PAD)),                              # ln2_w
        _per_layer_spec((1, C_PAD)),                              # ln2_b
        _per_layer_spec((C_PAD, FC_PAD)),                         # w_fc
        _per_layer_spec((1, FC_PAD)),                             # b_fc
        _per_layer_spec((FC_PAD, C_PAD)),                         # w_mp
        _per_layer_spec((1, C_PAD)),                              # b_mp
        _const_spec((C_PAD, VOCAB_PAD)),                          # w_lm (folded)
        _const_spec((1, VOCAB_PAD)),                              # b_lm (folded)
    ]

    grid_spec = pltpu.PrefetchScalarGridSpec(
        num_scalar_prefetch=0,
        grid=(N_LAYER,),
        in_specs=in_specs,
        out_specs=pl.BlockSpec((B, T, VOCAB_PAD), lambda l: (0, 0, 0)),
        scratch_shapes=[pltpu.VMEM((B, T, C_PAD), jnp.float32)],
    )

    logits_p = pl.pallas_call(
        gpt_fused_kernel,
        out_shape=jax.ShapeDtypeStruct((B, T, VOCAB_PAD), jnp.float32),
        grid_spec=grid_spec,
        compiler_params=pltpu.CompilerParams(
            dimension_semantics=("arbitrary",),
            vmem_limit_bytes=32 * 1024 * 1024),
    )(
        idx,
        packed['wte'], packed['wpe'],
        packed['ln1_w'], packed['ln1_b'],
        packed['w_qkv'], packed['b_qkv'],
        packed['w_ap'], packed['b_ap'],
        packed['ln2_w'], packed['ln2_b'],
        packed['w_fc'], packed['b_fc'],
        packed['w_mp'], packed['b_mp'],
        packed['w_lm'], packed['b_lm'],
    )
    return logits_p[:, :, :VOCAB_SIZE]                            # drop vocab padding


# ---------------------------- parameter init ----------------------------------
def init_params(key):
    """True-shape params: Linear weights stored (in_features, out_features)."""
    C = N_EMBD
    std = 0.02
    proj_std = 0.02 / math.sqrt(2 * N_LAYER)      # special c_proj init in GPT.__init__
    keys = iter(jax.random.split(key, 4 + 4 * N_LAYER))

    def nrm(shape, s):
        return jax.random.normal(next(keys), shape, dtype=jnp.float32) * s

    params = {
        'wte': nrm((VOCAB_SIZE, C), std),
        'wpe': nrm((BLOCK_SIZE, C), std),
        'lnf_w': jnp.ones((C,), jnp.float32),
        'lnf_b': jnp.zeros((C,), jnp.float32),
        'w_lm': nrm((C, VOCAB_SIZE), std),        # lm_head (no bias)
        'blocks': [],
    }
    for _ in range(N_LAYER):
        params['blocks'].append({
            'ln1_w': jnp.ones((C,), jnp.float32),
            'ln1_b': jnp.zeros((C,), jnp.float32),
            'w_qkv': nrm((C, 3 * C), std),
            'b_qkv': jnp.zeros((3 * C,), jnp.float32),
            'w_attn_proj': nrm((C, C), proj_std),
            'b_attn_proj': jnp.zeros((C,), jnp.float32),
            'ln2_w': jnp.ones((C,), jnp.float32),
            'ln2_b': jnp.zeros((C,), jnp.float32),
            'w_fc': nrm((C, 4 * C), std),
            'b_fc': jnp.zeros((4 * C,), jnp.float32),
            'w_mlp_proj': nrm((4 * C, C), proj_std),
            'b_mlp_proj': jnp.zeros((C,), jnp.float32),
        })
    return params


def pack_params(params):
    """Pad / repack params into the layer-stacked kernel layout (bf16 weights)."""
    C = N_EMBD
    bf16 = jnp.bfloat16

    def pad2(a, r, c):
        return jnp.pad(a, ((0, r - a.shape[0]), (0, c - a.shape[1])))

    def padv(v, n):
        return jnp.pad(v, (0, n - v.shape[0])).reshape(1, n)

    names = ('ln1_w', 'ln1_b', 'w_qkv', 'b_qkv', 'w_ap', 'b_ap',
             'ln2_w', 'ln2_b', 'w_fc', 'b_fc', 'w_mp', 'b_mp')
    acc = {k: [] for k in names}

    for blk in params['blocks']:
        acc['ln1_w'].append(padv(blk['ln1_w'], C_PAD))
        acc['ln1_b'].append(padv(blk['ln1_b'], C_PAD))
        acc['w_qkv'].append(pad2(blk['w_qkv'], C_PAD, QKV_PAD).astype(bf16))
        acc['b_qkv'].append(padv(blk['b_qkv'], QKV_PAD))
        # c_proj kept dense: (NH*HD, C_PAD) with padded output lanes zero
        acc['w_ap'].append(
            jnp.pad(blk['w_attn_proj'], ((0, 0), (0, C_PAD - C))).astype(bf16))
        acc['b_ap'].append(padv(blk['b_attn_proj'], C_PAD))
        acc['ln2_w'].append(padv(blk['ln2_w'], C_PAD))
        acc['ln2_b'].append(padv(blk['ln2_b'], C_PAD))
        acc['w_fc'].append(pad2(blk['w_fc'], C_PAD, FC_PAD).astype(bf16))
        acc['b_fc'].append(padv(blk['b_fc'], FC_PAD))
        acc['w_mp'].append(pad2(blk['w_mlp_proj'], FC_PAD, C_PAD).astype(bf16))
        acc['b_mp'].append(padv(blk['b_mlp_proj'], C_PAD))

    packed = {k: jnp.stack(v) for k, v in acc.items()}

    # embeddings stay f32 (tiny); padded cols are zero
    packed['wte'] = pad2(params['wte'], VOCAB_PAD, C_PAD)
    packed['wpe'] = pad2(params['wpe'], BLOCK_SIZE, C_PAD)

    # fold final LayerNorm affine into the lm_head:
    #   ln_f(x) @ W = normalize(x) @ (diag(lnf_w) W) + lnf_b @ W
    w_lm_folded = params['lnf_w'][:, None] * params['w_lm']        # (C, V)
    b_lm_folded = params['lnf_b'] @ params['w_lm']                 # (V,)
    packed['w_lm'] = pad2(w_lm_folded, C_PAD, VOCAB_PAD).astype(bf16)
    packed['b_lm'] = jnp.pad(b_lm_folded,
                             (0, VOCAB_PAD - VOCAB_SIZE)).reshape(1, VOCAB_PAD)
    return packed


# ----------------------------------- main --------------------------------------
if __name__ == "__main__":
    key = jax.random.PRNGKey(0)
    pkey, ikey = jax.random.split(key)
    params = init_params(pkey)
    packed = pack_params(params)

    B, T = 2, 8
    idx = jax.random.randint(ikey, (B, T), 0, VOCAB_SIZE, dtype=jnp.int32)

    logits = gpt_forward(idx, packed)
    logits = jax.block_until_ready(logits)
    assert logits.shape == (B, T, VOCAB_SIZE)
    assert bool(jnp.all(jnp.isfinite(logits)))
    print("KERNEL_OK")
</pallas_src>

<mosaic_0001>
module attributes {stable_mosaic.version = 11 : i64} {
  func.func @gpt_fused_kernel(%arg0: i32, %arg1: memref<2x8xi32, #tpu.memory_space<smem>>, %arg2: memref<128x128xf32, #tpu.memory_space<vmem>>, %arg3: memref<8x128xf32, #tpu.memory_space<vmem>>, %arg4: memref<1x1x128xf32, #tpu.memory_space<vmem>>, %arg5: memref<1x1x128xf32, #tpu.memory_space<vmem>>, %arg6: memref<1x128x256xbf16, #tpu.memory_space<vmem>>, %arg7: memref<1x1x256xf32, #tpu.memory_space<vmem>>, %arg8: memref<1x48x128xbf16, #tpu.memory_space<vmem>>, %arg9: memref<1x1x128xf32, #tpu.memory_space<vmem>>, %arg10: memref<1x1x128xf32, #tpu.memory_space<vmem>>, %arg11: memref<1x1x128xf32, #tpu.memory_space<vmem>>, %arg12: memref<1x128x256xbf16, #tpu.memory_space<vmem>>, %arg13: memref<1x1x256xf32, #tpu.memory_space<vmem>>, %arg14: memref<1x256x128xbf16, #tpu.memory_space<vmem>>, %arg15: memref<1x1x128xf32, #tpu.memory_space<vmem>>, %arg16: memref<128x128xbf16, #tpu.memory_space<vmem>>, %arg17: memref<1x128xf32, #tpu.memory_space<vmem>>, %arg18: memref<2x8x128xf32, #tpu.memory_space<vmem>>, %arg19: memref<2x8x128xf32, #tpu.memory_space<vmem>>) attributes {dimension_semantics = [#tpu.dimension_semantics<arbitrary>], iteration_bounds = array<i64: 3>, scalar_prefetch = 0 : i64, scratch_operands = 1 : i64, tpu.core_type = #tpu.core_type<tc>, window_params = [{transform_indices = @transform_0, window_bounds = array<i64: 2, 8>}, {pipeline_mode = #tpu.pipeline_mode<synchronous>, transform_indices = @transform_1, window_bounds = array<i64: 128, 128>}, {pipeline_mode = #tpu.pipeline_mode<synchronous>, transform_indices = @transform_2, window_bounds = array<i64: 8, 128>}, {transform_indices = @transform_3, window_bounds = array<i64: 1, 1, 128>}, {transform_indices = @transform_4, window_bounds = array<i64: 1, 1, 128>}, {transform_indices = @transform_5, window_bounds = array<i64: 1, 128, 256>}, {transform_indices = @transform_6, window_bounds = array<i64: 1, 1, 256>}, {transform_indices = @transform_7, window_bounds = array<i64: 1, 48, 128>}, {transform_indices = @transform_8, window_bounds = array<i64: 1, 1, 128>}, {transform_indices = @transform_9, window_bounds = array<i64: 1, 1, 128>}, {transform_indices = @transform_10, window_bounds = array<i64: 1, 1, 128>}, {transform_indices = @transform_11, window_bounds = array<i64: 1, 128, 256>}, {transform_indices = @transform_12, window_bounds = array<i64: 1, 1, 256>}, {transform_indices = @transform_13, window_bounds = array<i64: 1, 256, 128>}, {transform_indices = @transform_14, window_bounds = array<i64: 1, 1, 128>}, {pipeline_mode = #tpu.pipeline_mode<synchronous>, transform_indices = @transform_15, window_bounds = array<i64: 128, 128>}, {pipeline_mode = #tpu.pipeline_mode<synchronous>, transform_indices = @transform_16, window_bounds = array<i64: 1, 128>}, {pipeline_mode = #tpu.pipeline_mode<synchronous>, transform_indices = @transform_17, window_bounds = array<i64: 2, 8, 128>}]} {
    %c0_i32 = arith.constant 0 : i32
    %0 = arith.cmpi eq, %arg0, %c0_i32 : i32
    %1 = arith.extui %0 : i1 to i32
    %c0_i32_0 = arith.constant 0 : i32
    %2 = arith.cmpi ne, %1, %c0_i32_0 : i32
    scf.if %2 {
      %c0_67 = arith.constant 0 : index
      %c0_68 = arith.constant 0 : index
      %169 = memref.load %arg1[%c0_67, %c0_68] : memref<2x8xi32, #tpu.memory_space<smem>>
      %170 = arith.index_cast %169 : i32 to index
      %c0_69 = arith.constant 0 : index
      %171 = vector.load %arg2[%170, %c0_69] : memref<128x128xf32, #tpu.memory_space<vmem>>, vector<1x128xf32>
      %172 = vector.shape_cast %171 : vector<1x128xf32> to vector<128xf32>
      %c0_70 = arith.constant 0 : index
      %c0_71 = arith.constant 0 : index
      %173 = vector.load %arg3[%c0_70, %c0_71] : memref<8x128xf32, #tpu.memory_space<vmem>>, vector<1x128xf32>
      %174 = vector.shape_cast %173 : vector<1x128xf32> to vector<128xf32>
      %175 = arith.addf %172, %174 : vector<128xf32>
      %c0_72 = arith.constant 0 : index
      %c0_73 = arith.constant 0 : index
      %c0_74 = arith.constant 0 : index
      %176 = vector.load %arg19[%c0_72, %c0_73, %c0_74] : memref<2x8x128xf32, #tpu.memory_space<vmem>>, vector<1x1x128xf32>
      %177 = vector.shape_cast %176 : vector<1x1x128xf32> to vector<128xf32>
      %178 = vector.shape_cast %175 : vector<128xf32> to vector<1x1x128xf32>
      tpu.vector_store %arg19[%c0_72, %c0_73, %c0_74], %178 {strides = array<i32>} : memref<2x8x128xf32, #tpu.memory_space<vmem>>, vector<1x1x128xf32>,
      %c0_75 = arith.constant 0 : index
      %c1 = arith.constant 1 : index
      %179 = memref.load %arg1[%c0_75, %c1] : memref<2x8xi32, #tpu.memory_space<smem>>
      %180 = arith.index_cast %179 : i32 to index
      %c0_76 = arith.constant 0 : index
      %181 = vector.load %arg2[%180, %c0_76] : memref<128x128xf32, #tpu.memory_space<vmem>>, vector<1x128xf32>
      %182 = vector.shape_cast %181 : vector<1x128xf32> to vector<128xf32>
      %c1_77 = arith.constant 1 : index
      %c0_78 = arith.constant 0 : index
      %183 = vector.load %arg3[%c1_77, %c0_78] : memref<8x128xf32, #tpu.memory_space<vmem>>, vector<1x128xf32>
      %184 = vector.shape_cast %183 : vector<1x128xf32> to vector<128xf32>
      %185 = arith.addf %182, %184 : vector<128xf32>
      %c0_79 = arith.constant 0 : index
      %c1_80 = arith.constant 1 : index
      %c0_81 = arith.constant 0 : index
      %186 = vector.load %arg19[%c0_79, %c1_80, %c0_81] : memref<2x8x128xf32, #tpu.memory_space<vmem>>, vector<1x1x128xf32>
      %187 = vector.shape_cast %186 : vector<1x1x128xf32> to vector<128xf32>
      %188 = vector.shape_cast %185 : vector<128xf32> to vector<1x1x128xf32>
      tpu.vector_store %arg19[%c0_79, %c1_80, %c0_81], %188 {strides = array<i32>} : memref<2x8x128xf32, #tpu.memory_space<vmem>>, vector<1x1x128xf32>,
      %c0_82 = arith.constant 0 : index
      %c2 = arith.constant 2 : index
      %189 = memref.load %arg1[%c0_82, %c2] : memref<2x8xi32, #tpu.memory_space<smem>>
      %190 = arith.index_cast %189 : i32 to index
      %c0_83 = arith.constant 0 : index
      %191 = vector.load %arg2[%190, %c0_83] : memref<128x128xf32, #tpu.memory_space<vmem>>, vector<1x128xf32>
      %192 = vector.shape_cast %191 : vector<1x128xf32> to vector<128xf32>
      %c2_84 = arith.constant 2 : index
      %c0_85 = arith.constant 0 : index
      %193 = vector.load %arg3[%c2_84, %c0_85] : memref<8x128xf32, #tpu.memory_space<vmem>>, vector<1x128xf32>
      %194 = vector.shape_cast %193 : vector<1x128xf32> to vector<128xf32>
      %195 = arith.addf %192, %194 : vector<128xf32>
      %c0_86 = arith.constant 0 : index
      %c2_87 = arith.constant 2 : index
      %c0_88 = arith.constant 0 : index
      %196 = vector.load %arg19[%c0_86, %c2_87, %c0_88] : memref<2x8x128xf32, #tpu.memory_space<vmem>>, vector<1x1x128xf32>
      %197 = vector.shape_cast %196 : vector<1x1x128xf32> to vector<128xf32>
      %198 = vector.shape_cast %195 : vector<128xf32> to vector<1x1x128xf32>
      tpu.vector_store %arg19[%c0_86, %c2_87, %c0_88], %198 {strides = array<i32>} : memref<2x8x128xf32, #tpu.memory_space<vmem>>, vector<1x1x128xf32>,
      %c0_89 = arith.constant 0 : index
      %c3 = arith.constant 3 : index
      %199 = memref.load %arg1[%c0_89, %c3] : memref<2x8xi32, #tpu.memory_space<smem>>
      %200 = arith.index_cast %199 : i32 to index
      %c0_90 = arith.constant 0 : index
      %201 = vector.load %arg2[%200, %c0_90] : memref<128x128xf32, #tpu.memory_space<vmem>>, vector<1x128xf32>
      %202 = vector.shape_cast %201 : vector<1x128xf32> to vector<128xf32>
      %c3_91 = arith.constant 3 : index
      %c0_92 = arith.constant 0 : index
      %203 = vector.load %arg3[%c3_91, %c0_92] : memref<8x128xf32, #tpu.memory_space<vmem>>, vector<1x128xf32>
      %204 = vector.shape_cast %203 : vector<1x128xf32> to vector<128xf32>
      %205 = arith.addf %202, %204 : vector<128xf32>
      %c0_93 = arith.constant 0 : index
      %c3_94 = arith.constant 3 : index
      %c0_95 = arith.constant 0 : index
      %206 = vector.load %arg19[%c0_93, %c3_94, %c0_95] : memref<2x8x128xf32, #tpu.memory_space<vmem>>, vector<1x1x128xf32>
      %207 = vector.shape_cast %206 : vector<1x1x128xf32> to vector<128xf32>
      %208 = vector.shape_cast %205 : vector<128xf32> to vector<1x1x128xf32>
      tpu.vector_store %arg19[%c0_93, %c3_94, %c0_95], %208 {strides = array<i32>} : memref<2x8x128xf32, #tpu.memory_space<vmem>>, vector<1x1x128xf32>,
      %c0_96 = arith.constant 0 : index
      %c4 = arith.constant 4 : index
      %209 = memref.load %arg1[%c0_96, %c4] : memref<2x8xi32, #tpu.memory_space<smem>>
      %210 = arith.index_cast %209 : i32 to index
      %c0_97 = arith.constant 0 : index
      %211 = vector.load %arg2[%210, %c0_97] : memref<128x128xf32, #tpu.memory_space<vmem>>, vector<1x128xf32>
      %212 = vector.shape_cast %211 : vector<1x128xf32> to vector<128xf32>
      %c4_98 = arith.constant 4 : index
      %c0_99 = arith.constant 0 : index
      %213 = vector.load %arg3[%c4_98, %c0_99] : memref<8x128xf32, #tpu.memory_space<vmem>>, vector<1x128xf32>
      %214 = vector.shape_cast %213 : vector<1x128xf32> to vector<128xf32>
      %215 = arith.addf %212, %214 : vector<128xf32>
      %c0_100 = arith.constant 0 : index
      %c4_101 = arith.constant 4 : index
      %c0_102 = arith.constant 0 : index
      %216 = vector.load %arg19[%c0_100, %c4_101, %c0_102] : memref<2x8x128xf32, #tpu.memory_space<vmem>>, vector<1x1x128xf32>
      %217 = vector.shape_cast %216 : vector<1x1x128xf32> to vector<128xf32>
      %218 = vector.shape_cast %215 : vector<128xf32> to vector<1x1x128xf32>
      tpu.vector_store %arg19[%c0_100, %c4_101, %c0_102], %218 {strides = array<i32>} : memref<2x8x128xf32, #tpu.memory_space<vmem>>, vector<1x1x128xf32>,
      %c0_103 = arith.constant 0 : index
      %c5 = arith.constant 5 : index
      %219 = memref.load %arg1[%c0_103, %c5] : memref<2x8xi32, #tpu.memory_space<smem>>
      %220 = arith.index_cast %219 : i32 to index
      %c0_104 = arith.constant 0 : index
      %221 = vector.load %arg2[%220, %c0_104] : memref<128x128xf32, #tpu.memory_space<vmem>>, vector<1x128xf32>
      %222 = vector.shape_cast %221 : vector<1x128xf32> to vector<128xf32>
      %c5_105 = arith.constant 5 : index
      %c0_106 = arith.constant 0 : index
      %223 = vector.load %arg3[%c5_105, %c0_106] : memref<8x128xf32, #tpu.memory_space<vmem>>, vector<1x128xf32>
      %224 = vector.shape_cast %223 : vector<1x128xf32> to vector<128xf32>
      %225 = arith.addf %222, %224 : vector<128xf32>
      %c0_107 = arith.constant 0 : index
      %c5_108 = arith.constant 5 : index
      %c0_109 = arith.constant 0 : index
      %226 = vector.load %arg19[%c0_107, %c5_108, %c0_109] : memref<2x8x128xf32, #tpu.memory_space<vmem>>, vector<1x1x128xf32>
      %227 = vector.shape_cast %226 : vector<1x1x128xf32> to vector<128xf32>
      %228 = vector.shape_cast %225 : vector<128xf32> to vector<1x1x128xf32>
      tpu.vector_store %arg19[%c0_107, %c5_108, %c0_109], %228 {strides = array<i32>} : memref<2x8x128xf32, #tpu.memory_space<vmem>>, vector<1x1x128xf32>,
      %c0_110 = arith.constant 0 : index
      %c6 = arith.constant 6 : index
      %229 = memref.load %arg1[%c0_110, %c6] : memref<2x8xi32, #tpu.memory_space<smem>>
      %230 = arith.index_cast %229 : i32 to index
      %c0_111 = arith.constant 0 : index
      %231 = vector.load %arg2[%230, %c0_111] : memref<128x128xf32, #tpu.memory_space<vmem>>, vector<1x128xf32>
      %232 = vector.shape_cast %231 : vector<1x128xf32> to vector<128xf32>
      %c6_112 = arith.constant 6 : index
      %c0_113 = arith.constant 0 : index
      %233 = vector.load %arg3[%c6_112, %c0_113] : memref<8x128xf32, #tpu.memory_space<vmem>>, vector<1x128xf32>
      %234 = vector.shape_cast %233 : vector<1x128xf32> to vector<128xf32>
      %235 = arith.addf %232, %234 : vector<128xf32>
      %c0_114 = arith.constant 0 : index
      %c6_115 = arith.constant 6 : index
      %c0_116 = arith.constant 0 : index
      %236 = vector.load %arg19[%c0_114, %c6_115, %c0_116] : memref<2x8x128xf32, #tpu.memory_space<vmem>>, vector<1x1x128xf32>
      %237 = vector.shape_cast %236 : vector<1x1x128xf32> to vector<128xf32>
      %238 = vector.shape_cast %235 : vector<128xf32> to vector<1x1x128xf32>
      tpu.vector_store %arg19[%c0_114, %c6_115, %c0_116], %238 {strides = array<i32>} : memref<2x8x128xf32, #tpu.memory_space<vmem>>, vector<1x1x128xf32>,
      %c0_117 = arith.constant 0 : index
      %c7 = arith.constant 7 : index
      %239 = memref.load %arg1[%c0_117, %c7] : memref<2x8xi32, #tpu.memory_space<smem>>
      %240 = arith.index_cast %239 : i32 to index
      %c0_118 = arith.constant 0 : index
      %241 = vector.load %arg2[%240, %c0_118] : memref<128x128xf32, #tpu.memory_space<vmem>>, vector<1x128xf32>
      %242 = vector.shape_cast %241 : vector<1x128xf32> to vector<128xf32>
      %c7_119 = arith.constant 7 : index
      %c0_120 = arith.constant 0 : index
      %243 = vector.load %arg3[%c7_119, %c0_120] : memref<8x128xf32, #tpu.memory_space<vmem>>, vector<1x128xf32>
      %244 = vector.shape_cast %243 : vector<1x128xf32> to vector<128xf32>
      %245 = arith.addf %242, %244 : vector<128xf32>
      %c0_121 = arith.constant 0 : index
      %c7_122 = arith.constant 7 : index
      %c0_123 = arith.constant 0 : index
      %246 = vector.load %arg19[%c0_121, %c7_122, %c0_123] : memref<2x8x128xf32, #tpu.memory_space<vmem>>, vector<1x1x128xf32>
      %247 = vector.shape_cast %246 : vector<1x1x128xf32> to vector<128xf32>
      %248 = vector.shape_cast %245 : vector<128xf32> to vector<1x1x128xf32>
      tpu.vector_store %arg19[%c0_121, %c7_122, %c0_123], %248 {strides = array<i32>} : memref<2x8x128xf32, #tpu.memory_space<vmem>>, vector<1x1x128xf32>,
      %c1_124 = arith.constant 1 : index
      %c0_125 = arith.constant 0 : index
      %249 = memref.load %arg1[%c1_124, %c0_125] : memref<2x8xi32, #tpu.memory_space<smem>>
      %250 = arith.index_cast %249 : i32 to index
      %c0_126 = arith.constant 0 : index
      %251 = vector.load %arg2[%250, %c0_126] : memref<128x128xf32, #tpu.memory_space<vmem>>, vector<1x128xf32>
      %252 = vector.shape_cast %251 : vector<1x128xf32> to vector<128xf32>
      %c0_127 = arith.constant 0 : index
      %c0_128 = arith.constant 0 : index
      %253 = vector.load %arg3[%c0_127, %c0_128] : memref<8x128xf32, #tpu.memory_space<vmem>>, vector<1x128xf32>
      %254 = vector.shape_cast %253 : vector<1x128xf32> to vector<128xf32>
      %255 = arith.addf %252, %254 : vector<128xf32>
      %c1_129 = arith.constant 1 : index
      %c0_130 = arith.constant 0 : index
      %c0_131 = arith.constant 0 : index
      %256 = vector.load %arg19[%c1_129, %c0_130, %c0_131] : memref<2x8x128xf32, #tpu.memory_space<vmem>>, vector<1x1x128xf32>
      %257 = vector.shape_cast %256 : vector<1x1x128xf32> to vector<128xf32>
      %258 = vector.shape_cast %255 : vector<128xf32> to vector<1x1x128xf32>
      tpu.vector_store %arg19[%c1_129, %c0_130, %c0_131], %258 {strides = array<i32>} : memref<2x8x128xf32, #tpu.memory_space<vmem>>, vector<1x1x128xf32>,
      %c1_132 = arith.constant 1 : index
      %c1_133 = arith.constant 1 : index
      %259 = memref.load %arg1[%c1_132, %c1_133] : memref<2x8xi32, #tpu.memory_space<smem>>
      %260 = arith.index_cast %259 : i32 to index
      %c0_134 = arith.constant 0 : index
      %261 = vector.load %arg2[%260, %c0_134] : memref<128x128xf32, #tpu.memory_space<vmem>>, vector<1x128xf32>
      %262 = vector.shape_cast %261 : vector<1x128xf32> to vector<128xf32>
      %c1_135 = arith.constant 1 : index
      %c0_136 = arith.constant 0 : index
      %263 = vector.load %arg3[%c1_135, %c0_136] : memref<8x128xf32, #tpu.memory_space<vmem>>, vector<1x128xf32>
      %264 = vector.shape_cast %263 : vector<1x128xf32> to vector<128xf32>
      %265 = arith.addf %262, %264 : vector<128xf32>
      %c1_137 = arith.constant 1 : index
      %c1_138 = arith.constant 1 : index
      %c0_139 = arith.constant 0 : index
      %266 = vector.load %arg19[%c1_137, %c1_138, %c0_139] : memref<2x8x128xf32, #tpu.memory_space<vmem>>, vector<1x1x128xf32>
      %267 = vector.shape_cast %266 : vector<1x1x128xf32> to vector<128xf32>
      %268 = vector.shape_cast %265 : vector<128xf32> to vector<1x1x128xf32>
      tpu.vector_store %arg19[%c1_137, %c1_138, %c0_139], %268 {strides = array<i32>} : memref<2x8x128xf32, #tpu.memory_space<vmem>>, vector<1x1x128xf32>,
      %c1_140 = arith.constant 1 : index
      %c2_141 = arith.constant 2 : index
      %269 = memref.load %arg1[%c1_140, %c2_141] : memref<2x8xi32, #tpu.memory_space<smem>>
      %270 = arith.index_cast %269 : i32 to index
      %c0_142 = arith.constant 0 : index
      %271 = vector.load %arg2[%270, %c0_142] : memref<128x128xf32, #tpu.memory_space<vmem>>, vector<1x128xf32>
      %272 = vector.shape_cast %271 : vector<1x128xf32> to vector<128xf32>
      %c2_143 = arith.constant 2 : index
      %c0_144 = arith.constant 0 : index
      %273 = vector.load %arg3[%c2_143, %c0_144] : memref<8x128xf32, #tpu.memory_space<vmem>>, vector<1x128xf32>
      %274 = vector.shape_cast %273 : vector<1x128xf32> to vector<128xf32>
      %275 = arith.addf %272, %274 : vector<128xf32>
      %c1_145 = arith.constant 1 : index
      %c2_146 = arith.constant 2 : index
      %c0_147 = arith.constant 0 : index
      %276 = vector.load %arg19[%c1_145, %c2_146, %c0_147] : memref<2x8x128xf32, #tpu.memory_space<vmem>>, vector<1x1x128xf32>
      %277 = vector.shape_cast %276 : vector<1x1x128xf32> to vector<128xf32>
      %278 = vector.shape_cast %275 : vector<128xf32> to vector<1x1x128xf32>
      tpu.vector_store %arg19[%c1_145, %c2_146, %c0_147], %278 {strides = array<i32>} : memref<2x8x128xf32, #tpu.memory_space<vmem>>, vector<1x1x128xf32>,
      %c1_148 = arith.constant 1 : index
      %c3_149 = arith.constant 3 : index
      %279 = memref.load %arg1[%c1_148, %c3_149] : memref<2x8xi32, #tpu.memory_space<smem>>
      %280 = arith.index_cast %279 : i32 to index
      %c0_150 = arith.constant 0 : index
      %281 = vector.load %arg2[%280, %c0_150] : memref<128x128xf32, #tpu.memory_space<vmem>>, vector<1x128xf32>
      %282 = vector.shape_cast %281 : vector<1x128xf32> to vector<128xf32>
      %c3_151 = arith.constant 3 : index
      %c0_152 = arith.constant 0 : index
      %283 = vector.load %arg3[%c3_151, %c0_152] : memref<8x128xf32, #tpu.memory_space<vmem>>, vector<1x128xf32>
      %284 = vector.shape_cast %283 : vector<1x128xf32> to vector<128xf32>
      %285 = arith.addf %282, %284 : vector<128xf32>
      %c1_153 = arith.constant 1 : index
      %c3_154 = arith.constant 3 : index
      %c0_155 = arith.constant 0 : index
      %286 = vector.load %arg19[%c1_153, %c3_154, %c0_155] : memref<2x8x128xf32, #tpu.memory_space<vmem>>, vector<1x1x128xf32>
      %287 = vector.shape_cast %286 : vector<1x1x128xf32> to vector<128xf32>
      %288 = vector.shape_cast %285 : vector<128xf32> to vector<1x1x128xf32>
      tpu.vector_store %arg19[%c1_153, %c3_154, %c0_155], %288 {strides = array<i32>} : memref<2x8x128xf32, #tpu.memory_space<vmem>>, vector<1x1x128xf32>,
      %c1_156 = arith.constant 1 : index
      %c4_157 = arith.constant 4 : index
      %289 = memref.load %arg1[%c1_156, %c4_157] : memref<2x8xi32, #tpu.memory_space<smem>>
      %290 = arith.index_cast %289 : i32 to index
      %c0_158 = arith.constant 0 : index
      %291 = vector.load %arg2[%290, %c0_158] : memref<128x128xf32, #tpu.memory_space<vmem>>, vector<1x128xf32>
      %292 = vector.shape_cast %291 : vector<1x128xf32> to vector<128xf32>
      %c4_159 = arith.constant 4 : index
      %c0_160 = arith.constant 0 : index
      %293 = vector.load %arg3[%c4_159, %c0_160] : memref<8x128xf32, #tpu.memory_space<vmem>>, vector<1x128xf32>
      %294 = vector.shape_cast %293 : vector<1x128xf32> to vector<128xf32>
      %295 = arith.addf %292, %294 : vector<128xf32>
      %c1_161 = arith.constant 1 : index
      %c4_162 = arith.constant 4 : index
      %c0_163 = arith.constant 0 : index
      %296 = vector.load %arg19[%c1_161, %c4_162, %c0_163] : memref<2x8x128xf32, #tpu.memory_space<vmem>>, vector<1x1x128xf32>
      %297 = vector.shape_cast %296 : vector<1x1x128xf32> to vector<128xf32>
      %298 = vector.shape_cast %295 : vector<128xf32> to vector<1x1x128xf32>
      tpu.vector_store %arg19[%c1_161, %c4_162, %c0_163], %298 {strides = array<i32>} : memref<2x8x128xf32, #tpu.memory_space<vmem>>, vector<1x1x128xf32>,
      %c1_164 = arith.constant 1 : index
      %c5_165 = arith.constant 5 : index
      %299 = memref.load %arg1[%c1_164, %c5_165] : memref<2x8xi32, #tpu.memory_space<smem>>
      %300 = arith.index_cast %299 : i32 to index
      %c0_166 = arith.constant 0 : index
      %301 = vector.load %arg2[%300, %c0_166] : memref<128x128xf32, #tpu.memory_space<vmem>>, vector<1x128xf32>
      %302 = vector.shape_cast %301 : vector<1x128xf32> to vector<128xf32>
      %c5_167 = arith.constant 5 : index
      %c0_168 = arith.constant 0 : index
      %303 = vector.load %arg3[%c5_167, %c0_168] : memref<8x128xf32, #tpu.memory_space<vmem>>, vector<1x128xf32>
      %304 = vector.shape_cast %303 : vector<1x128xf32> to vector<128xf32>
      %305 = arith.addf %302, %304 : vector<128xf32>
      %c1_169 = arith.constant 1 : index
      %c5_170 = arith.constant 5 : index
      %c0_171 = arith.constant 0 : index
      %306 = vector.load %arg19[%c1_169, %c5_170, %c0_171] : memref<2x8x128xf32, #tpu.memory_space<vmem>>, vector<1x1x128xf32>
      %307 = vector.shape_cast %306 : vector<1x1x128xf32> to vector<128xf32>
      %308 = vector.shape_cast %305 : vector<128xf32> to vector<1x1x128xf32>
      tpu.vector_store %arg19[%c1_169, %c5_170, %c0_171], %308 {strides = array<i32>} : memref<2x8x128xf32, #tpu.memory_space<vmem>>, vector<1x1x128xf32>,
      %c1_172 = arith.constant 1 : index
      %c6_173 = arith.constant 6 : index
      %309 = memref.load %arg1[%c1_172, %c6_173] : memref<2x8xi32, #tpu.memory_space<smem>>
      %310 = arith.index_cast %309 : i32 to index
      %c0_174 = arith.constant 0 : index
      %311 = vector.load %arg2[%310, %c0_174] : memref<128x128xf32, #tpu.memory_space<vmem>>, vector<1x128xf32>
      %312 = vector.shape_cast %311 : vector<1x128xf32> to vector<128xf32>
      %c6_175 = arith.constant 6 : index
      %c0_176 = arith.constant 0 : index
      %313 = vector.load %arg3[%c6_175, %c0_176] : memref<8x128xf32, #tpu.memory_space<vmem>>, vector<1x128xf32>
      %314 = vector.shape_cast %313 : vector<1x128xf32> to vector<128xf32>
      %315 = arith.addf %312, %314 : vector<128xf32>
      %c1_177 = arith.constant 1 : index
      %c6_178 = arith.constant 6 : index
      %c0_179 = arith.constant 0 : index
      %316 = vector.load %arg19[%c1_177, %c6_178, %c0_179] : memref<2x8x128xf32, #tpu.memory_space<vmem>>, vector<1x1x128xf32>
      %317 = vector.shape_cast %316 : vector<1x1x128xf32> to vector<128xf32>
      %318 = vector.shape_cast %315 : vector<128xf32> to vector<1x1x128xf32>
      tpu.vector_store %arg19[%c1_177, %c6_178, %c0_179], %318 {strides = array<i32>} : memref<2x8x128xf32, #tpu.memory_space<vmem>>, vector<1x1x128xf32>,
      %c1_180 = arith.constant 1 : index
      %c7_181 = arith.constant 7 : index
      %319 = memref.load %arg1[%c1_180, %c7_181] : memref<2x8xi32, #tpu.memory_space<smem>>
      %320 = arith.index_cast %319 : i32 to index
      %c0_182 = arith.constant 0 : index
      %321 = vector.load %arg2[%320, %c0_182] : memref<128x128xf32, #tpu.memory_space<vmem>>, vector<1x128xf32>
      %322 = vector.shape_cast %321 : vector<1x128xf32> to vector<128xf32>
      %c7_183 = arith.constant 7 : index
      %c0_184 = arith.constant 0 : index
      %323 = vector.load %arg3[%c7_183, %c0_184] : memref<8x128xf32, #tpu.memory_space<vmem>>, vector<1x128xf32>
      %324 = vector.shape_cast %323 : vector<1x128xf32> to vector<128xf32>
      %325 = arith.addf %322, %324 : vector<128xf32>
      %c1_185 = arith.constant 1 : index
      %c7_186 = arith.constant 7 : index
      %c0_187 = arith.constant 0 : index
      %326 = vector.load %arg19[%c1_185, %c7_186, %c0_187] : memref<2x8x128xf32, #tpu.memory_space<vmem>>, vector<1x1x128xf32>
      %327 = vector.shape_cast %326 : vector<1x1x128xf32> to vector<128xf32>
      %328 = vector.shape_cast %325 : vector<128xf32> to vector<1x1x128xf32>
      tpu.vector_store %arg19[%c1_185, %c7_186, %c0_187], %328 {strides = array<i32>} : memref<2x8x128xf32, #tpu.memory_space<vmem>>, vector<1x1x128xf32>,
    } else {
    }
    %c0 = arith.constant 0 : index
    %c0_1 = arith.constant 0 : index
    %c0_2 = arith.constant 0 : index
    %3 = vector.load %arg19[%c0, %c0_1, %c0_2] : memref<2x8x128xf32, #tpu.memory_space<vmem>>, vector<2x8x128xf32>
    %4 = tpu.iota {dimensions = array<i32: 2>} : vector<1x1x128xi32>
    %c48_i32 = arith.constant 48 : i32
    %5 = vector.broadcast %c48_i32 : i32 to vector<1x1x128xi32>
    %6 = arith.cmpi slt, %4, %5 : vector<1x1x128xi32>
    %7 = arith.extui %6 : vector<1x1x128xi1> to vector<1x1x128xi32>
    %8 = arith.sitofp %7 : vector<1x1x128xi32> to vector<1x1x128xf32>
    %9 = tpu.iota {dimensions = array<i32: 0>} : vector<8x8xi32>
    %10 = tpu.iota {dimensions = array<i32: 1>} : vector<8x8xi32>
    %11 = arith.cmpi sle, %10, %9 : vector<8x8xi32>
    %cst = arith.constant 0.000000e+00 : f32
    %cst_3 = arith.constant -1.000000e+30 : f32
    %12 = vector.broadcast %cst : f32 to vector<8x8xf32>
    %13 = vector.broadcast %cst_3 : f32 to vector<8x8xf32>
    %14 = arith.select %11, %12, %13 : vector<8x8xi1>, vector<8x8xf32>
    %cst_4 = arith.constant dense<0.000000e+00> : vector<2x8xf32>
    %15 = vector.multi_reduction <add>, %3, %cst_4 [2] : vector<2x8x128xf32> to vector<2x8xf32>
    %16 = vector.shape_cast %15 : vector<2x8xf32> to vector<2x8x1xf32>
    %cst_5 = arith.constant 0.020833334 : f32
    %17 = vector.broadcast %cst_5 : f32 to vector<2x8x1xf32>
    %18 = arith.mulf %16, %17 : vector<2x8x1xf32>
    %19 = vector.broadcast %18 : vector<2x8x1xf32> to vector<2x8x128xf32>
    %20 = arith.subf %3, %19 : vector<2x8x128xf32>
    %21 = arith.mulf %20, %20 : vector<2x8x128xf32>
    %22 = vector.broadcast %8 : vector<1x1x128xf32> to vector<2x8x128xf32>
    %23 = arith.mulf %21, %22 : vector<2x8x128xf32>
    %cst_6 = arith.constant dense<0.000000e+00> : vector<2x8xf32>
    %24 = vector.multi_reduction <add>, %23, %cst_6 [2] : vector<2x8x128xf32> to vector<2x8xf32>
    %25 = vector.shape_cast %24 : vector<2x8xf32> to vector<2x8x1xf32>
    %cst_7 = arith.constant 0.020833334 : f32
    %26 = vector.broadcast %cst_7 : f32 to vector<2x8x1xf32>
    %27 = arith.mulf %25, %26 : vector<2x8x1xf32>
    %cst_8 = arith.constant 9.99999974E-6 : f32
    %28 = vector.broadcast %cst_8 : f32 to vector<2x8x1xf32>
    %29 = arith.addf %27, %28 : vector<2x8x1xf32>
    %30 = math.rsqrt %29 : vector<2x8x1xf32>
    %31 = vector.broadcast %30 : vector<2x8x1xf32> to vector<2x8x128xf32>
    %32 = arith.mulf %20, %31 : vector<2x8x128xf32>
    %c0_9 = arith.constant 0 : index
    %c0_10 = arith.constant 0 : index
    %c0_11 = arith.constant 0 : index
    %33 = vector.load %arg4[%c0_9, %c0_10, %c0_11] : memref<1x1x128xf32, #tpu.memory_space<vmem>>, vector<1x1x128xf32>
    %34 = vector.shape_cast %33 : vector<1x1x128xf32> to vector<1x128xf32>
    %35 = vector.shape_cast %34 : vector<1x128xf32> to vector<1x1x128xf32>
    %36 = vector.broadcast %35 : vector<1x1x128xf32> to vector<2x8x128xf32>
    %37 = arith.mulf %32, %36 : vector<2x8x128xf32>
    %c0_12 = arith.constant 0 : index
    %c0_13 = arith.constant 0 : index
    %c0_14 = arith.constant 0 : index
    %38 = vector.load %arg5[%c0_12, %c0_13, %c0_14] : memref<1x1x128xf32, #tpu.memory_space<vmem>>, vector<1x1x128xf32>
    %39 = vector.shape_cast %38 : vector<1x1x128xf32> to vector<1x128xf32>
    %40 = vector.shape_cast %39 : vector<1x128xf32> to vector<1x1x128xf32>
    %41 = vector.broadcast %40 : vector<1x1x128xf32> to vector<2x8x128xf32>
    %42 = arith.addf %37, %41 : vector<2x8x128xf32>
    %c0_15 = arith.constant 0 : index
    %c0_16 = arith.constant 0 : index
    %c0_17 = arith.constant 0 : index
    %43 = vector.load %arg6[%c0_15, %c0_16, %c0_17] : memref<1x128x256xbf16, #tpu.memory_space<vmem>>, vector<1x128x256xbf16>
    %44 = vector.shape_cast %43 : vector<1x128x256xbf16> to vector<128x256xbf16>
    %45 = vector.shape_cast %42 : vector<2x8x128xf32> to vector<16x128xf32>
    %46 = arith.truncf %45 : vector<16x128xf32> to vector<16x128xbf16>
    %cst_18 = arith.constant dense<0.000000e+00> : vector<16x256xf32>
    %47 = tpu.matmul %46, %44, %cst_18 {dimension_numbers = #tpu.dot_dimension_numbers<[1], [0], [0], [1], [0, 0, 1, 1], [], []>} : vector<16x128xbf16>, vector<128x256xbf16>, vector<16x256xf32> -> vector<16x256xf32>
    %48 = vector.shape_cast %47 : vector<16x256xf32> to vector<2x8x256xf32>
    %c0_19 = arith.constant 0 : index
    %c0_20 = arith.constant 0 : index
    %c0_21 = arith.constant 0 : index
    %49 = vector.load %arg7[%c0_19, %c0_20, %c0_21] : memref<1x1x256xf32, #tpu.memory_space<vmem>>, vector<1x1x256xf32>
    %50 = vector.shape_cast %49 : vector<1x1x256xf32> to vector<1x256xf32>
    %51 = vector.shape_cast %50 : vector<1x256xf32> to vector<1x1x256xf32>
    %52 = vector.broadcast %51 : vector<1x1x256xf32> to vector<2x8x256xf32>
    %53 = arith.addf %48, %52 : vector<2x8x256xf32>
    %54 = arith.truncf %53 : vector<2x8x256xf32> to vector<2x8x256xbf16>
    %55 = vector.extract_strided_slice %54 {offsets = [0, 0, 0], sizes = [2, 8, 16], strides = [1, 1, 1]} : vector<2x8x256xbf16> to vector<2x8x16xbf16>
    %56 = vector.extract_strided_slice %54 {offsets = [0, 0, 16], sizes = [2, 8, 16], strides = [1, 1, 1]} : vector<2x8x256xbf16> to vector<2x8x16xbf16>
    %57 = vector.extract_strided_slice %54 {offsets = [0, 0, 32], sizes = [2, 8, 16], strides = [1, 1, 1]} : vector<2x8x256xbf16> to vector<2x8x16xbf16>
    %58 = tpu.concatenate %55, %56, %57 in 0 : vector<2x8x16xbf16>, vector<2x8x16xbf16>, vector<2x8x16xbf16> -> vector<6x8x16xbf16>
    %59 = vector.extract_strided_slice %54 {offsets = [0, 0, 48], sizes = [2, 8, 16], strides = [1, 1, 1]} : vector<2x8x256xbf16> to vector<2x8x16xbf16>
    %60 = vector.extract_strided_slice %54 {offsets = [0, 0, 64], sizes = [2, 8, 16], strides = [1, 1, 1]} : vector<2x8x256xbf16> to vector<2x8x16xbf16>
    %61 = vector.extract_strided_slice %54 {offsets = [0, 0, 80], sizes = [2, 8, 16], strides = [1, 1, 1]} : vector<2x8x256xbf16> to vector<2x8x16xbf16>
    %62 = tpu.concatenate %59, %60, %61 in 0 : vector<2x8x16xbf16>, vector<2x8x16xbf16>, vector<2x8x16xbf16> -> vector<6x8x16xbf16>
    %63 = vector.extract_strided_slice %54 {offsets = [0, 0, 96], sizes = [2, 8, 16], strides = [1, 1, 1]} : vector<2x8x256xbf16> to vector<2x8x16xbf16>
    %64 = vector.extract_strided_slice %54 {offsets = [0, 0, 112], sizes = [2, 8, 16], strides = [1, 1, 1]} : vector<2x8x256xbf16> to vector<2x8x16xbf16>
    %65 = vector.extract_strided_slice %54 {offsets = [0, 0, 128], sizes = [2, 8, 16], strides = [1, 1, 1]} : vector<2x8x256xbf16> to vector<2x8x16xbf16>
    %66 = tpu.concatenate %63, %64, %65 in 0 : vector<2x8x16xbf16>, vector<2x8x16xbf16>, vector<2x8x16xbf16> -> vector<6x8x16xbf16>
    "tpu.trace_start"() <{level = 10 : i32, message = "ztd,zsd->zts"}> : () -> ()
    %cst_22 = arith.constant dense<0.000000e+00> : vector<6x8x8xf32>
    %67 = tpu.matmul %58, %62, %cst_22 {dimension_numbers = #tpu.dot_dimension_numbers<[2], [2], [1], [1], [0, 0, 0, 1, 1, 1], [0], [0]>} : vector<6x8x16xbf16>, vector<6x8x16xbf16>, vector<6x8x8xf32> -> vector<6x8x8xf32>
    "tpu.trace_stop"() : () -> ()
    %cst_23 = arith.constant 2.500000e-01 : f32
    %68 = vector.broadcast %cst_23 : f32 to vector<6x8x8xf32>
    %69 = arith.mulf %67, %68 : vector<6x8x8xf32>
    %70 = vector.shape_cast %14 : vector<8x8xf32> to vector<1x8x8xf32>
    %71 = vector.broadcast %70 : vector<1x8x8xf32> to vector<6x8x8xf32>
    %72 = arith.addf %69, %71 : vector<6x8x8xf32>
    %cst_24 = arith.constant dense<0xFF800000> : vector<6x8xf32>
    %73 = vector.multi_reduction <maximumf>, %72, %cst_24 [2] : vector<6x8x8xf32> to vector<6x8xf32>
    %74 = vector.shape_cast %73 : vector<6x8xf32> to vector<6x8x1xf32>
    %75 = vector.broadcast %74 : vector<6x8x1xf32> to vector<6x8x8xf32>
    %76 = arith.subf %72, %75 : vector<6x8x8xf32>
    %77 = math.exp %76 : vector<6x8x8xf32>
    %cst_25 = arith.constant dense<0.000000e+00> : vector<6x8xf32>
    %78 = vector.multi_reduction <add>, %77, %cst_25 [2] : vector<6x8x8xf32> to vector<6x8xf32>
    %79 = vector.shape_cast %78 : vector<6x8xf32> to vector<6x8x1xf32>
    %80 = tpu.reciprocal %79 {approx = true} : vector<6x8x1xf32> -> vector<6x8x1xf32>
    %81 = vector.broadcast %80 : vector<6x8x1xf32> to vector<6x8x8xf32>
    %82 = arith.mulf %77, %81 : vector<6x8x8xf32>
    %83 = arith.truncf %82 : vector<6x8x8xf32> to vector<6x8x8xbf16>
    "tpu.trace_start"() <{level = 10 : i32, message = "zts,zsd->ztd"}> : () -> ()
    %cst_26 = arith.constant dense<0.000000e+00> : vector<6x8x16xf32>
    %84 = tpu.matmul %83, %66, %cst_26 {dimension_numbers = #tpu.dot_dimension_numbers<[2], [1], [1], [2], [0, 0, 0, 1, 1, 2], [0], [0]>} : vector<6x8x8xbf16>, vector<6x8x16xbf16>, vector<6x8x16xf32> -> vector<6x8x16xf32>
    "tpu.trace_stop"() : () -> ()
    %85 = vector.extract_strided_slice %84 {offsets = [0, 0, 0], sizes = [2, 8, 16], strides = [1, 1, 1]} : vector<6x8x16xf32> to vector<2x8x16xf32>
    %86 = vector.extract_strided_slice %84 {offsets = [2, 0, 0], sizes = [2, 8, 16], strides = [1, 1, 1]} : vector<6x8x16xf32> to vector<2x8x16xf32>
    %87 = vector.extract_strided_slice %84 {offsets = [4, 0, 0], sizes = [2, 8, 16], strides = [1, 1, 1]} : vector<6x8x16xf32> to vector<2x8x16xf32>
    %88 = tpu.concatenate %85, %86, %87 in 2 : vector<2x8x16xf32>, vector<2x8x16xf32>, vector<2x8x16xf32> -> vector<2x8x48xf32>
    %c0_27 = arith.constant 0 : index
    %c0_28 = arith.constant 0 : index
    %c0_29 = arith.constant 0 : index
    %89 = vector.load %arg8[%c0_27, %c0_28, %c0_29] : memref<1x48x128xbf16, #tpu.memory_space<vmem>>, vector<1x48x128xbf16>
    %90 = vector.shape_cast %89 : vector<1x48x128xbf16> to vector<48x128xbf16>
    %91 = vector.shape_cast %88 : vector<2x8x48xf32> to vector<16x48xf32>
    %92 = arith.truncf %91 : vector<16x48xf32> to vector<16x48xbf16>
    %cst_30 = arith.constant dense<0.000000e+00> : vector<16x128xf32>
    %93 = tpu.matmul %92, %90, %cst_30 {dimension_numbers = #tpu.dot_dimension_numbers<[1], [0], [0], [1], [0, 0, 1, 1], [], []>} : vector<16x48xbf16>, vector<48x128xbf16>, vector<16x128xf32> -> vector<16x128xf32>
    %94 = vector.shape_cast %93 : vector<16x128xf32> to vector<2x8x128xf32>
    %95 = arith.addf %3, %94 : vector<2x8x128xf32>
    %c0_31 = arith.constant 0 : index
    %c0_32 = arith.constant 0 : index
    %c0_33 = arith.constant 0 : index
    %96 = vector.load %arg9[%c0_31, %c0_32, %c0_33] : memref<1x1x128xf32, #tpu.memory_space<vmem>>, vector<1x1x128xf32>
    %97 = vector.shape_cast %96 : vector<1x1x128xf32> to vector<1x128xf32>
    %98 = vector.shape_cast %97 : vector<1x128xf32> to vector<1x1x128xf32>
    %99 = vector.broadcast %98 : vector<1x1x128xf32> to vector<2x8x128xf32>
    %100 = arith.addf %95, %99 : vector<2x8x128xf32>
    %cst_34 = arith.constant dense<0.000000e+00> : vector<2x8xf32>
    %101 = vector.multi_reduction <add>, %100, %cst_34 [2] : vector<2x8x128xf32> to vector<2x8xf32>
    %102 = vector.shape_cast %101 : vector<2x8xf32> to vector<2x8x1xf32>
    %cst_35 = arith.constant 0.020833334 : f32
    %103 = vector.broadcast %cst_35 : f32 to vector<2x8x1xf32>
    %104 = arith.mulf %102, %103 : vector<2x8x1xf32>
    %105 = vector.broadcast %104 : vector<2x8x1xf32> to vector<2x8x128xf32>
    %106 = arith.subf %100, %105 : vector<2x8x128xf32>
    %107 = arith.mulf %106, %106 : vector<2x8x128xf32>
    %108 = vector.broadcast %8 : vector<1x1x128xf32> to vector<2x8x128xf32>
    %109 = arith.mulf %107, %108 : vector<2x8x128xf32>
    %cst_36 = arith.constant dense<0.000000e+00> : vector<2x8xf32>
    %110 = vector.multi_reduction <add>, %109, %cst_36 [2] : vector<2x8x128xf32> to vector<2x8xf32>
    %111 = vector.shape_cast %110 : vector<2x8xf32> to vector<2x8x1xf32>
    %cst_37 = arith.constant 0.020833334 : f32
    %112 = vector.broadcast %cst_37 : f32 to vector<2x8x1xf32>
    %113 = arith.mulf %111, %112 : vector<2x8x1xf32>
    %cst_38 = arith.constant 9.99999974E-6 : f32
    %114 = vector.broadcast %cst_38 : f32 to vector<2x8x1xf32>
    %115 = arith.addf %113, %114 : vector<2x8x1xf32>
    %116 = math.rsqrt %115 : vector<2x8x1xf32>
    %117 = vector.broadcast %116 : vector<2x8x1xf32> to vector<2x8x128xf32>
    %118 = arith.mulf %106, %117 : vector<2x8x128xf32>
    %c0_39 = arith.constant 0 : index
    %c0_40 = arith.constant 0 : index
    %c0_41 = arith.constant 0 : index
    %119 = vector.load %arg10[%c0_39, %c0_40, %c0_41] : memref<1x1x128xf32, #tpu.memory_space<vmem>>, vector<1x1x128xf32>
    %120 = vector.shape_cast %119 : vector<1x1x128xf32> to vector<1x128xf32>
    %121 = vector.shape_cast %120 : vector<1x128xf32> to vector<1x1x128xf32>
    %122 = vector.broadcast %121 : vector<1x1x128xf32> to vector<2x8x128xf32>
    %123 = arith.mulf %118, %122 : vector<2x8x128xf32>
    %c0_42 = arith.constant 0 : index
    %c0_43 = arith.constant 0 : index
    %c0_44 = arith.constant 0 : index
    %124 = vector.load %arg11[%c0_42, %c0_43, %c0_44] : memref<1x1x128xf32, #tpu.memory_space<vmem>>, vector<1x1x128xf32>
    %125 = vector.shape_cast %124 : vector<1x1x128xf32> to vector<1x128xf32>
    %126 = vector.shape_cast %125 : vector<1x128xf32> to vector<1x1x128xf32>
    %127 = vector.broadcast %126 : vector<1x1x128xf32> to vector<2x8x128xf32>
    %128 = arith.addf %123, %127 : vector<2x8x128xf32>
    %c0_45 = arith.constant 0 : index
    %c0_46 = arith.constant 0 : index
    %c0_47 = arith.constant 0 : index
    %129 = vector.load %arg12[%c0_45, %c0_46, %c0_47] : memref<1x128x256xbf16, #tpu.memory_space<vmem>>, vector<1x128x256xbf16>
    %130 = vector.shape_cast %129 : vector<1x128x256xbf16> to vector<128x256xbf16>
    %131 = vector.shape_cast %128 : vector<2x8x128xf32> to vector<16x128xf32>
    %132 = arith.truncf %131 : vector<16x128xf32> to vector<16x128xbf16>
    %cst_48 = arith.constant dense<0.000000e+00> : vector<16x256xf32>
    %133 = tpu.matmul %132, %130, %cst_48 {dimension_numbers = #tpu.dot_dimension_numbers<[1], [0], [0], [1], [0, 0, 1, 1], [], []>} : vector<16x128xbf16>, vector<128x256xbf16>, vector<16x256xf32> -> vector<16x256xf32>
    %134 = vector.shape_cast %133 : vector<16x256xf32> to vector<2x8x256xf32>
    %c0_49 = arith.constant 0 : index
    %c0_50 = arith.constant 0 : index
    %c0_51 = arith.constant 0 : index
    %135 = vector.load %arg13[%c0_49, %c0_50, %c0_51] : memref<1x1x256xf32, #tpu.memory_space<vmem>>, vector<1x1x256xf32>
    %136 = vector.shape_cast %135 : vector<1x1x256xf32> to vector<1x256xf32>
    %137 = vector.shape_cast %136 : vector<1x256xf32> to vector<1x1x256xf32>
    %138 = vector.broadcast %137 : vector<1x1x256xf32> to vector<2x8x256xf32>
    %139 = arith.addf %134, %138 : vector<2x8x256xf32>
    %cst_52 = arith.constant 5.000000e-01 : f32
    %140 = vector.broadcast %cst_52 : f32 to vector<2x8x256xf32>
    %141 = arith.mulf %140, %139 : vector<2x8x256xf32>
    %cst_53 = arith.constant 4.471500e-02 : f32
    %142 = vector.broadcast %cst_53 : f32 to vector<2x8x256xf32>
    %143 = arith.mulf %142, %139 : vector<2x8x256xf32>
    %144 = arith.mulf %143, %139 : vector<2x8x256xf32>
    %145 = arith.mulf %144, %139 : vector<2x8x256xf32>
    %146 = arith.addf %139, %145 : vector<2x8x256xf32>
    %cst_54 = arith.constant 0.797884583 : f32
    %147 = vector.broadcast %cst_54 : f32 to vector<2x8x256xf32>
    %148 = arith.mulf %147, %146 : vector<2x8x256xf32>
    %149 = math.tanh %148 : vector<2x8x256xf32>
    %cst_55 = arith.constant 1.000000e+00 : f32
    %150 = vector.broadcast %cst_55 : f32 to vector<2x8x256xf32>
    %151 = arith.addf %150, %149 : vector<2x8x256xf32>
    %152 = arith.mulf %141, %151 : vector<2x8x256xf32>
    %c0_56 = arith.constant 0 : index
    %c0_57 = arith.constant 0 : index
    %c0_58 = arith.constant 0 : index
    %153 = vector.load %arg14[%c0_56, %c0_57, %c0_58] : memref<1x256x128xbf16, #tpu.memory_space<vmem>>, vector<1x256x128xbf16>
    %154 = vector.shape_cast %153 : vector<1x256x128xbf16> to vector<256x128xbf16>
    %155 = vector.shape_cast %152 : vector<2x8x256xf32> to vector<16x256xf32>
    %156 = arith.truncf %155 : vector<16x256xf32> to vector<16x256xbf16>
    %cst_59 = arith.constant dense<0.000000e+00> : vector<16x128xf32>
    %157 = tpu.matmul %156, %154, %cst_59 {dimension_numbers = #tpu.dot_dimension_numbers<[1], [0], [0], [1], [0, 0, 1, 1], [], []>} : vector<16x256xbf16>, vector<256x128xbf16>, vector<16x128xf32> -> vector<16x128xf32>
    %158 = vector.shape_cast %157 : vector<16x128xf32> to vector<2x8x128xf32>
    %159 = arith.addf %100, %158 : vector<2x8x128xf32>
    %c0_60 = arith.constant 0 : index
    %c0_61 = arith.constant 0 : index
    %c0_62 = arith.constant 0 : index
    %160 = vector.load %arg15[%c0_60, %c0_61, %c0_62] : memref<1x1x128xf32, #tpu.memory_space<vmem>>, vector<1x1x128xf32>
    %161 = vector.shape_cast %160 : vector<1x1x128xf32> to vector<1x128xf32>
    %162 = vector.shape_cast %161 : vector<1x128xf32> to vector<1x1x128xf32>
    %163 = vector.broadcast %162 : vector<1x1x128xf32> to vector<2x8x128xf32>
    %164 = arith.addf %159, %163 : vector<2x8x128xf32>
    %c0_63 = arith.constant 0 : index
    %c0_64 = arith.constant 0 : index
    %c0_65 = arith.constant 0 : index
    %165 = vector.load %arg19[%c0_63, %c0_64, %c0_65] : memref<2x8x128xf32, #tpu.memory_space<vmem>>, vector<2x8x128xf32>
    tpu.vector_store %arg19[%c0_63, %c0_64, %c0_65], %164 {strides = array<i32>} : memref<2x8x128xf32, #tpu.memory_space<vmem>>, vector<2x8x128xf32>,
    %c2_i32 = arith.constant 2 : i32
    %166 = arith.cmpi eq, %arg0, %c2_i32 : i32
    %167 = arith.extui %166 : i1 to i32
    %c0_i32_66 = arith.constant 0 : i32
    %168 = arith.cmpi ne, %167, %c0_i32_66 : i32
    scf.if %168 {
      %cst_67 = arith.constant dense<0.000000e+00> : vector<2x8xf32>
      %169 = vector.multi_reduction <add>, %164, %cst_67 [2] : vector<2x8x128xf32> to vector<2x8xf32>
      %170 = vector.shape_cast %169 : vector<2x8xf32> to vector<2x8x1xf32>
      %cst_68 = arith.constant 0.020833334 : f32
      %171 = vector.broadcast %cst_68 : f32 to vector<2x8x1xf32>
      %172 = arith.mulf %170, %171 : vector<2x8x1xf32>
      %173 = vector.broadcast %172 : vector<2x8x1xf32> to vector<2x8x128xf32>
      %174 = arith.subf %164, %173 : vector<2x8x128xf32>
      %175 = arith.mulf %174, %174 : vector<2x8x128xf32>
      %176 = vector.broadcast %8 : vector<1x1x128xf32> to vector<2x8x128xf32>
      %177 = arith.mulf %175, %176 : vector<2x8x128xf32>
      %cst_69 = arith.constant dense<0.000000e+00> : vector<2x8xf32>
      %178 = vector.multi_reduction <add>, %177, %cst_69 [2] : vector<2x8x128xf32> to vector<2x8xf32>
      %179 = vector.shape_cast %178 : vector<2x8xf32> to vector<2x8x1xf32>
      %cst_70 = arith.constant 0.020833334 : f32
      %180 = vector.broadcast %cst_70 : f32 to vector<2x8x1xf32>
      %181 = arith.mulf %179, %180 : vector<2x8x1xf32>
      %cst_71 = arith.constant 9.99999974E-6 : f32
      %182 = vector.broadcast %cst_71 : f32 to vector<2x8x1xf32>
      %183 = arith.addf %181, %182 : vector<2x8x1xf32>
      %184 = math.rsqrt %183 : vector<2x8x1xf32>
      %185 = vector.broadcast %184 : vector<2x8x1xf32> to vector<2x8x128xf32>
      %186 = arith.mulf %174, %185 : vector<2x8x128xf32>
      %c0_72 = arith.constant 0 : index
      %c0_73 = arith.constant 0 : index
      %187 = vector.load %arg16[%c0_72, %c0_73] : memref<128x128xbf16, #tpu.memory_space<vmem>>, vector<128x128xbf16>
      %188 = vector.shape_cast %186 : vector<2x8x128xf32> to vector<16x128xf32>
      %189 = arith.truncf %188 : vector<16x128xf32> to vector<16x128xbf16>
      %cst_74 = arith.constant dense<0.000000e+00> : vector<16x128xf32>
      %190 = tpu.matmul %189, %187, %cst_74 {dimension_numbers = #tpu.dot_dimension_numbers<[1], [0], [0], [1], [0, 0, 1, 1], [], []>} : vector<16x128xbf16>, vector<128x128xbf16>, vector<16x128xf32> -> vector<16x128xf32>
      %191 = vector.shape_cast %190 : vector<16x128xf32> to vector<2x8x128xf32>
      %c0_75 = arith.constant 0 : index
      %c0_76 = arith.constant 0 : index
      %192 = vector.load %arg17[%c0_75, %c0_76] : memref<1x128xf32, #tpu.memory_space<vmem>>, vector<1x128xf32>
      %193 = vector.shape_cast %192 : vector<1x128xf32> to vector<1x1x128xf32>
      %194 = vector.broadcast %193 : vector<1x1x128xf32> to vector<2x8x128xf32>
      %195 = arith.addf %191, %194 : vector<2x8x128xf32>
      %c0_77 = arith.constant 0 : index
      %c0_78 = arith.constant 0 : index
      %c0_79 = arith.constant 0 : index
      %196 = vector.load %arg18[%c0_77, %c0_78, %c0_79] : memref<2x8x128xf32, #tpu.memory_space<vmem>>, vector<2x8x128xf32>
      tpu.vector_store %arg18[%c0_77, %c0_78, %c0_79], %195 {strides = array<i32>} : memref<2x8x128xf32, #tpu.memory_space<vmem>>, vector<2x8x128xf32>,
    } else {
    }
    return
  }
  func.func @transform_0(%arg0: i32) -> (i32, i32) {
    %c0_i32 = arith.constant 0 : i32
    %c0_i32_0 = arith.constant 0 : i32
    %c0_i32_1 = arith.constant 0 : i32
    return %c0_i32, %c0_i32_0 : i32, i32
  }
  func.func @transform_1(%arg0: i32) -> (i32, i32) {
    %c0_i32 = arith.constant 0 : i32
    %c0_i32_0 = arith.constant 0 : i32
    %c0_i32_1 = arith.constant 0 : i32
    return %c0_i32, %c0_i32_0 : i32, i32
  }
  func.func @transform_2(%arg0: i32) -> (i32, i32) {
    %c0_i32 = arith.constant 0 : i32
    %c0_i32_0 = arith.constant 0 : i32
    %c0_i32_1 = arith.constant 0 : i32
    return %c0_i32, %c0_i32_0 : i32, i32
  }
  func.func @transform_3(%arg0: i32) -> (i32, i32, i32) {
    %c0_i32 = arith.constant 0 : i32
    %c0_i32_0 = arith.constant 0 : i32
    %c0_i32_1 = arith.constant 0 : i32
    return %arg0, %c0_i32, %c0_i32_0 : i32, i32, i32
  }
  func.func @transform_4(%arg0: i32) -> (i32, i32, i32) {
    %c0_i32 = arith.constant 0 : i32
    %c0_i32_0 = arith.constant 0 : i32
    %c0_i32_1 = arith.constant 0 : i32
    return %arg0, %c0_i32, %c0_i32_0 : i32, i32, i32
  }
  func.func @transform_5(%arg0: i32) -> (i32, i32, i32) {
    %c0_i32 = arith.constant 0 : i32
    %c0_i32_0 = arith.constant 0 : i32
    %c0_i32_1 = arith.constant 0 : i32
    return %arg0, %c0_i32, %c0_i32_0 : i32, i32, i32
  }
  func.func @transform_6(%arg0: i32) -> (i32, i32, i32) {
    %c0_i32 = arith.constant 0 : i32
    %c0_i32_0 = arith.constant 0 : i32
    %c0_i32_1 = arith.constant 0 : i32
    return %arg0, %c0_i32, %c0_i32_0 : i32, i32, i32
  }
  func.func @transform_7(%arg0: i32) -> (i32, i32, i32) {
    %c0_i32 = arith.constant 0 : i32
    %c0_i32_0 = arith.constant 0 : i32
    %c0_i32_1 = arith.constant 0 : i32
    return %arg0, %c0_i32, %c0_i32_0 : i32, i32, i32
  }
  func.func @transform_8(%arg0: i32) -> (i32, i32, i32) {
    %c0_i32 = arith.constant 0 : i32
    %c0_i32_0 = arith.constant 0 : i32
    %c0_i32_1 = arith.constant 0 : i32
    return %arg0, %c0_i32, %c0_i32_0 : i32, i32, i32
  }
  func.func @transform_9(%arg0: i32) -> (i32, i32, i32) {
    %c0_i32 = arith.constant 0 : i32
    %c0_i32_0 = arith.constant 0 : i32
    %c0_i32_1 = arith.constant 0 : i32
    return %arg0, %c0_i32, %c0_i32_0 : i32, i32, i32
  }
  func.func @transform_10(%arg0: i32) -> (i32, i32, i32) {
    %c0_i32 = arith.constant 0 : i32
    %c0_i32_0 = arith.constant 0 : i32
    %c0_i32_1 = arith.constant 0 : i32
    return %arg0, %c0_i32, %c0_i32_0 : i32, i32, i32
  }
  func.func @transform_11(%arg0: i32) -> (i32, i32, i32) {
    %c0_i32 = arith.constant 0 : i32
    %c0_i32_0 = arith.constant 0 : i32
    %c0_i32_1 = arith.constant 0 : i32
    return %arg0, %c0_i32, %c0_i32_0 : i32, i32, i32
  }
  func.func @transform_12(%arg0: i32) -> (i32, i32, i32) {
    %c0_i32 = arith.constant 0 : i32
    %c0_i32_0 = arith.constant 0 : i32
    %c0_i32_1 = arith.constant 0 : i32
    return %arg0, %c0_i32, %c0_i32_0 : i32, i32, i32
  }
  func.func @transform_13(%arg0: i32) -> (i32, i32, i32) {
    %c0_i32 = arith.constant 0 : i32
    %c0_i32_0 = arith.constant 0 : i32
    %c0_i32_1 = arith.constant 0 : i32
    return %arg0, %c0_i32, %c0_i32_0 : i32, i32, i32
  }
  func.func @transform_14(%arg0: i32) -> (i32, i32, i32) {
    %c0_i32 = arith.constant 0 : i32
    %c0_i32_0 = arith.constant 0 : i32
    %c0_i32_1 = arith.constant 0 : i32
    return %arg0, %c0_i32, %c0_i32_0 : i32, i32, i32
  }
  func.func @transform_15(%arg0: i32) -> (i32, i32) {
    %c0_i32 = arith.constant 0 : i32
    %c0_i32_0 = arith.constant 0 : i32
    %c0_i32_1 = arith.constant 0 : i32
    return %c0_i32, %c0_i32_0 : i32, i32
  }
  func.func @transform_16(%arg0: i32) -> (i32, i32) {
    %c0_i32 = arith.constant 0 : i32
    %c0_i32_0 = arith.constant 0 : i32
    %c0_i32_1 = arith.constant 0 : i32
    return %c0_i32, %c0_i32_0 : i32, i32
  }
  func.func @transform_17(%arg0: i32) -> (i32, i32, i32) {
    %c0_i32 = arith.constant 0 : i32
    %c0_i32_0 = arith.constant 0 : i32
    %c0_i32_1 = arith.constant 0 : i32
    %c0_i32_2 = arith.constant 0 : i32
    return %c0_i32, %c0_i32_0, %c0_i32_1 : i32, i32, i32
  }
}

</mosaic_0001>

<llo_original>
// kernel: gpt_forward.1
$region0: #{gpt_forward.1}
  #allocation0 [shape = 'u32[]', space=smem, size = 0x4, offset = 0x4, fixed_abs, tag = 'smem constant byte address 0x4 - core index']
  #allocation1 [shape = 'u32[72,128]{1,0:T(1,128)}', space=vmem, size = 0x9000, scoped, tag = 'internal scratch']
  #allocation2 [shape = 'f32[2,8,128]{2,1,0:T(8,128)}', space=vmem, size = 0x2000, scoped, tag = 'scratch operand']
  %s0 = inlined_call_operand.hbm [shape: s32[2,8], index: 0, kind: input, shape index: {}]
  %s1 = inlined_call_operand.hbm [shape: f32[128,128], index: 1, kind: input, shape index: {}]
  %s2 = inlined_call_operand.vmem [shape: f32[8,128], index: 2, kind: input, shape index: {}]
  %s3 = inlined_call_operand.vmem [shape: f32[3,1,128], index: 3, kind: input, shape index: {}]
  %s4 = inlined_call_operand.hbm [shape: f32[3,1,128], index: 4, kind: input, shape index: {}]
  %s5 = inlined_call_operand.hbm [shape: bf16[3,128,256], index: 5, kind: input, shape index: {}]
  %s6 = inlined_call_operand.hbm [shape: f32[3,1,256], index: 6, kind: input, shape index: {}]
  %s7 = inlined_call_operand.hbm [shape: bf16[3,48,128], index: 7, kind: input, shape index: {}]
  %s8 = inlined_call_operand.hbm [shape: f32[3,1,128], index: 8, kind: input, shape index: {}]
  %s9 = inlined_call_operand.vmem [shape: f32[3,1,128], index: 9, kind: input, shape index: {}]
  %s10 = inlined_call_operand.hbm [shape: f32[3,1,128], index: 10, kind: input, shape index: {}]
  %s11 = inlined_call_operand.hbm [shape: bf16[3,128,256], index: 11, kind: input, shape index: {}]
  %s12 = inlined_call_operand.hbm [shape: f32[3,1,256], index: 12, kind: input, shape index: {}]
  %s13 = inlined_call_operand.hbm [shape: bf16[3,256,128], index: 13, kind: input, shape index: {}]
  %s14 = inlined_call_operand.hbm [shape: f32[3,1,128], index: 14, kind: input, shape index: {}]
  %s15 = inlined_call_operand.hbm [shape: bf16[128,128], index: 15, kind: input, shape index: {}]
  %s16 = inlined_call_operand.hbm [shape: f32[1,128], index: 16, kind: input, shape index: {}]
  %s17 = inlined_call_operand.hbm [shape: f32[2,8,128], index: 17, kind: output, shape index: {}]
  %s18 = sld [smem:[#allocation0]]
  $region165: #{gpt_forward.1} parent=0
    _
  %s20 = ssub.s32 1, %s18
  %s21 = scalar_select 0, %s20, %s18
  $region1: #{gpt_forward.1} parent=0
    #allocation3 [shape = 'u8[1024]{0}', space=smem, size = 0x400, scoped, tag = 'input window, operand 0, single buffered']
    #allocation4 [shape = 's32[2]{0}', space=sflag, size = 0x8, scoped, tag = 'scoped memory for gpt_forward.1']
    #allocation5 [shape = 's32[2]{0}', space=sflag, size = 0x8, scoped, tag = 'scoped memory for gpt_forward.1']
    #allocation6 [shape = 's32[2]{0}', space=sflag, size = 0x8, scoped, tag = 'scoped memory for gpt_forward.1']
    #allocation7 [shape = 'u8[65536]{0}', space=vmem, size = 0x10000, scoped, tag = 'input window, operand 1, single buffered']
    #allocation8 [shape = 'u8[1024]{0}', space=vmem, size = 0x400, scoped, tag = 'input window, operand 4']
    #allocation9 [shape = 's32[2]{0}', space=sflag, size = 0x8, scoped, tag = 'scoped memory for gpt_forward.1']
    #allocation10 [shape = 'u8[131072]{0}', space=vmem, size = 0x20000, scoped, tag = 'input window, operand 5']
    #allocation11 [shape = 'u8[2048]{0}', space=vmem, size = 0x800, scoped, tag = 'input window, operand 6']
    #allocation12 [shape = 's32[2]{0}', space=sflag, size = 0x8, scoped, tag = 'scoped memory for gpt_forward.1']
    #allocation13 [shape = 'u8[24576]{0}', space=vmem, size = 0x6000, scoped, tag = 'input window, operand 7']
    #allocation14 [shape = 'u8[1024]{0}', space=vmem, size = 0x400, scoped, tag = 'input window, operand 8']
    #allocation15 [shape = 's32[2]{0}', space=sflag, size = 0x8, scoped, tag = 'scoped memory for gpt_forward.1']
    #allocation16 [shape = 'u8[1024]{0}', space=vmem, size = 0x400, scoped, tag = 'input window, operand 10']
    #allocation17 [shape = 'u8[131072]{0}', space=vmem, size = 0x20000, scoped, tag = 'input window, operand 11']
    #allocation18 [shape = 's32[2]{0}', space=sflag, size = 0x8, scoped, tag = 'scoped memory for gpt_forward.1']
    #allocation19 [shape = 'u8[2048]{0}', space=vmem, size = 0x800, scoped, tag = 'input window, operand 12']
    #allocation20 [shape = 'u8[131072]{0}', space=vmem, size = 0x20000, scoped, tag = 'input window, operand 13']
    #allocation21 [shape = 's32[2]{0}', space=sflag, size = 0x8, scoped, tag = 'scoped memory for gpt_forward.1']
    #allocation22 [shape = 'u8[1024]{0}', space=vmem, size = 0x400, scoped, tag = 'input window, operand 14']
    #allocation23 [shape = 'u8[32768]{0}', space=vmem, size = 0x8000, scoped, tag = 'input window, operand 15, single buffered']
    #allocation24 [shape = 's32[1]{0}', space=sflag, size = 0x4, scoped, tag = 'scoped memory for gpt_forward.1']
    #allocation25 [shape = 'u8[512]{0}', space=vmem, size = 0x400, scoped, tag = 'input window, operand 16, single buffered']
    #allocation26 [shape = 'u8[8192]{0}', space=vmem, size = 0x2000, scoped, tag = 'output window, operand 0, single buffered']
    %22 = vsyncpa [#allocation6], 0
    %23 = vsyncpa [#allocation4], 0
    %24 = vsyncpa [#allocation9], 0
    %s25 = scalar_lea.sflag [#allocation9], 1
    %26 = vsyncpa %s25, 0
    %27 = vsyncpa [#allocation12], 0
    %s28 = scalar_lea.sflag [#allocation12], 1
    %29 = vsyncpa %s28, 0
    %30 = vsyncpa [#allocation15], 0
    %s31 = scalar_lea.sflag [#allocation15], 1
    %32 = vsyncpa %s31, 0
    %33 = vsyncpa [#allocation18], 0
    %s34 = scalar_lea.sflag [#allocation18], 1
    %35 = vsyncpa %s34, 0
    %36 = vsyncpa [#allocation21], 0
    %s37 = scalar_lea.sflag [#allocation21], 1
    %38 = vsyncpa %s37, 0
    %39 = vsyncpa [#allocation24], 0
    %40 = vsyncpa [#allocation5], 0
    loop: start=0, step=1, limit=5
    $region2: #{gpt_forward.1} parent=1 // loop_pre_header
      _
    $region3: #{gpt_forward.1} parent=1 // loop_header
      %s42 = sphi 0, %s46
      %p43 = scmp.ge.s32.totalorder %s42, 5
      %s50 = sphi 0, %s50
      %s52 = sphi 0, %s50
      %s53 = sphi 0, %s52
      %s67 = sphi 0, %s53
      %s71 = sphi 0, %s71
      %s73 = sphi 0, %s71
      %s74 = sphi 0, %s73
      %s88 = sphi 0, %s74
      %s92 = sphi 0, %s92
      %s94 = sphi 0, %s92
      %s95 = sphi 0, %s94
      %s109 = sphi 0, %s95
      %s115 = sphi 0, %s117
      %s118 = sphi 0, %s115
      %s119 = sphi 0, %s118
      %s135 = sphi 0, %s119
      %s141 = sphi 0, %s143
      %s144 = sphi 0, %s141
      %s145 = sphi 0, %s144
      %s161 = sphi 0, %s145
      %s167 = sphi 0, %s169
      %s170 = sphi 0, %s167
      %s171 = sphi 0, %s170
      %s187 = sphi 0, %s171
      %s193 = sphi 0, %s195
      %s196 = sphi 0, %s193
      %s197 = sphi 0, %s196
      %s213 = sphi 0, %s197
      %s219 = sphi 0, %s221
      %s222 = sphi 0, %s219
      %s223 = sphi 0, %s222
      %s239 = sphi 0, %s223
      %s245 = sphi 0, %s247
      %s248 = sphi 0, %s245
      %s249 = sphi 0, %s248
      %s265 = sphi 0, %s249
      %s271 = sphi 0, %s273
      %s274 = sphi 0, %s271
      %s275 = sphi 0, %s274
      %s291 = sphi 0, %s275
      %s297 = sphi 0, %s299
      %s300 = sphi 0, %s297
      %s301 = sphi 0, %s300
      %s317 = sphi 0, %s301
      %s323 = sphi 0, %s325
      %s326 = sphi 0, %s323
      %s327 = sphi 0, %s326
      %s343 = sphi 0, %s327
      %s349 = sphi 0, %s351
      %s352 = sphi 0, %s349
      %s353 = sphi 0, %s352
      %s369 = sphi 0, %s353
      %s375 = sphi 0, %s377
      %s378 = sphi 0, %s375
      %s379 = sphi 0, %s378
      %s395 = sphi 0, %s379
      %s401 = sphi 0, %s403
      %s404 = sphi 0, %s401
      %s405 = sphi 0, %s404
      %s421 = sphi 0, %s405
      %s425 = sphi 0, %s425
      %s427 = sphi 0, %s425
      %s428 = sphi 0, %s427
      %s442 = sphi 0, %s428
      %s446 = sphi 0, %s446
      %s448 = sphi 0, %s446
      %s449 = sphi 0, %s448
      %s463 = sphi 0, %s449
      %s467 = sphi 0, %s467
      %s469 = sphi 0, %s467
      %s470 = sphi 0, %s469
      %s484 = sphi 0, %s470
    $region4: #{gpt_forward.1} parent=1 // loop_header_branch
      %45 = sbr.rel (%p43) target = $region8
    $region5: #{gpt_forward.1} parent=1 // loop_body
      %s47 = ssub.s32 %s42, 1
      %s48 = ssub.s32 %s42, 2
      %s49 = sadd.s32 %s42, 1
      %s51 = sadd.s32 %s50, 1
      %p54 = scmp.eq.s32.totalorder %s42, 2
      %p55 = scmp.ne.s32.totalorder %s50, %s52
      %p56 = scmp.eq.s32.totalorder %s42, 0
      %p57 = por %p55, %p56
      %p58 = scmp.ne.s32.totalorder %s50, %s52
      %p59 = scmp.eq.s32.totalorder %s47, 2
      %p60 = por %p58, %p59
      %p61 = scmp.ne.s32.totalorder %s52, %s53
      %p62 = scmp.eq.s32.totalorder %s47, 0
      %p63 = por %p61, %p62
      %p64 = scmp.ne.s32.totalorder %s52, %s53
      %p65 = scmp.eq.s32.totalorder %s48, 2
      %p66 = por %p64, %p65
      %p68 = scmp.ne.s32.totalorder %s53, %s67
      %p69 = scmp.eq.s32.totalorder %s48, 0
      %p70 = por %p68, %p69
      %s72 = sadd.s32 %s71, 1
      %p75 = scmp.eq.s32.totalorder %s42, 2
      %p76 = scmp.ne.s32.totalorder %s71, %s73
      %p77 = scmp.eq.s32.totalorder %s42, 0
      %p78 = por %p76, %p77
      %p79 = scmp.ne.s32.totalorder %s71, %s73
      %p80 = scmp.eq.s32.totalorder %s47, 2
      %p81 = por %p79, %p80
      %p82 = scmp.ne.s32.totalorder %s73, %s74
      %p83 = scmp.eq.s32.totalorder %s47, 0
      %p84 = por %p82, %p83
      %p85 = scmp.ne.s32.totalorder %s73, %s74
      %p86 = scmp.eq.s32.totalorder %s48, 2
      %p87 = por %p85, %p86
      %p89 = scmp.ne.s32.totalorder %s74, %s88
      %p90 = scmp.eq.s32.totalorder %s48, 0
      %p91 = por %p89, %p90
      %s93 = sadd.s32 %s92, 1
      %p96 = scmp.eq.s32.totalorder %s42, 2
      %p97 = scmp.ne.s32.totalorder %s92, %s94
      %p98 = scmp.eq.s32.totalorder %s42, 0
      %p99 = por %p97, %p98
      %p100 = scmp.ne.s32.totalorder %s92, %s94
      %p101 = scmp.eq.s32.totalorder %s47, 2
      %p102 = por %p100, %p101
      %p103 = scmp.ne.s32.totalorder %s94, %s95
      %p104 = scmp.eq.s32.totalorder %s47, 0
      %p105 = por %p103, %p104
      %p106 = scmp.ne.s32.totalorder %s94, %s95
      %p107 = scmp.eq.s32.totalorder %s48, 2
      %p108 = por %p106, %p107
      %p110 = scmp.ne.s32.totalorder %s95, %s109
      %p111 = scmp.eq.s32.totalorder %s48, 0
      %p112 = por %p110, %p111
      %s113 = ssub.s32 %s42, %s49
      %p114 = scmp.eq.s32.totalorder %s113, 0
      %s116 = sadd.s32 %s115, 1
      %s117 = scalar_select %p114, %s115, %s116
      %p120 = pneg %p114
      %p121 = scmp.eq.s32.totalorder %s42, 2
      %p122 = por %p120, %p121
      %p123 = scmp.ne.s32.totalorder %s115, %s118
      %p124 = scmp.eq.s32.totalorder %s42, 0
      %p125 = por %p123, %p124
      %p126 = scmp.ne.s32.totalorder %s115, %s118
      %p127 = scmp.eq.s32.totalorder %s47, 2
      %p128 = por %p126, %p127
      %p129 = scmp.ne.s32.totalorder %s118, %s119
      %p130 = scmp.eq.s32.totalorder %s47, 0
      %p131 = por %p129, %p130
      %p132 = scmp.ne.s32.totalorder %s118, %s119
      %p133 = scmp.eq.s32.totalorder %s48, 2
      %p134 = por %p132, %p133
      %p136 = scmp.ne.s32.totalorder %s119, %s135
      %p137 = scmp.eq.s32.totalorder %s48, 0
      %p138 = por %p136, %p137
      %s139 = ssub.s32 %s42, %s49
      %p140 = scmp.eq.s32.totalorder %s139, 0
      %s142 = sadd.s32 %s141, 1
      %s143 = scalar_select %p140, %s141, %s142
      %p146 = pneg %p140
      %p147 = scmp.eq.s32.totalorder %s42, 2
      %p148 = por %p146, %p147
      %p149 = scmp.ne.s32.totalorder %s141, %s144
      %p150 = scmp.eq.s32.totalorder %s42, 0
      %p151 = por %p149, %p150
      %p152 = scmp.ne.s32.totalorder %s141, %s144
      %p153 = scmp.eq.s32.totalorder %s47, 2
      %p154 = por %p152, %p153
      %p155 = scmp.ne.s32.totalorder %s144, %s145
      %p156 = scmp.eq.s32.totalorder %s47, 0
      %p157 = por %p155, %p156
      %p158 = scmp.ne.s32.totalorder %s144, %s145
      %p159 = scmp.eq.s32.totalorder %s48, 2
      %p160 = por %p158, %p159
      %p162 = scmp.ne.s32.totalorder %s145, %s161
      %p163 = scmp.eq.s32.totalorder %s48, 0
      %p164 = por %p162, %p163
      %s165 = ssub.s32 %s42, %s49
      %p166 = scmp.eq.s32.totalorder %s165, 0
      %s168 = sadd.s32 %s167, 1
      %s169 = scalar_select %p166, %s167, %s168
      %p172 = pneg %p166
      %p173 = scmp.eq.s32.totalorder %s42, 2
      %p174 = por %p172, %p173
      %p175 = scmp.ne.s32.totalorder %s167, %s170
      %p176 = scmp.eq.s32.totalorder %s42, 0
      %p177 = por %p175, %p176
      %p178 = scmp.ne.s32.totalorder %s167, %s170
      %p179 = scmp.eq.s32.totalorder %s47, 2
      %p180 = por %p178, %p179
      %p181 = scmp.ne.s32.totalorder %s170, %s171
      %p182 = scmp.eq.s32.totalorder %s47, 0
      %p183 = por %p181, %p182
      %p184 = scmp.ne.s32.totalorder %s170, %s171
      %p185 = scmp.eq.s32.totalorder %s48, 2
      %p186 = por %p184, %p185
      %p188 = scmp.ne.s32.totalorder %s171, %s187
      %p189 = scmp.eq.s32.totalorder %s48, 0
      %p190 = por %p188, %p189
      %s191 = ssub.s32 %s42, %s49
      %p192 = scmp.eq.s32.totalorder %s191, 0
      %s194 = sadd.s32 %s193, 1
      %s195 = scalar_select %p192, %s193, %s194
      %p198 = pneg %p192
      %p199 = scmp.eq.s32.totalorder %s42, 2
      %p200 = por %p198, %p199
      %p201 = scmp.ne.s32.totalorder %s193, %s196
      %p202 = scmp.eq.s32.totalorder %s42, 0
      %p203 = por %p201, %p202
      %p204 = scmp.ne.s32.totalorder %s193, %s196
      %p205 = scmp.eq.s32.totalorder %s47, 2
      %p206 = por %p204, %p205
      %p207 = scmp.ne.s32.totalorder %s196, %s197
      %p208 = scmp.eq.s32.totalorder %s47, 0
      %p209 = por %p207, %p208
      %p210 = scmp.ne.s32.totalorder %s196, %s197
      %p211 = scmp.eq.s32.totalorder %s48, 2
      %p212 = por %p210, %p211
      %p214 = scmp.ne.s32.totalorder %s197, %s213
      %p215 = scmp.eq.s32.totalorder %s48, 0
      %p216 = por %p214, %p215
      %s217 = ssub.s32 %s42, %s49
      %p218 = scmp.eq.s32.totalorder %s217, 0
      %s220 = sadd.s32 %s219, 1
      %s221 = scalar_select %p218, %s219, %s220
      %p224 = pneg %p218
      %p225 = scmp.eq.s32.totalorder %s42, 2
      %p226 = por %p224, %p225
      %p227 = scmp.ne.s32.totalorder %s219, %s222
      %p228 = scmp.eq.s32.totalorder %s42, 0
      %p229 = por %p227, %p228
      %p230 = scmp.ne.s32.totalorder %s219, %s222
      %p231 = scmp.eq.s32.totalorder %s47, 2
      %p232 = por %p230, %p231
      %p233 = scmp.ne.s32.totalorder %s222, %s223
      %p234 = scmp.eq.s32.totalorder %s47, 0
      %p235 = por %p233, %p234
      %p236 = scmp.ne.s32.totalorder %s222, %s223
      %p237 = scmp.eq.s32.totalorder %s48, 2
      %p238 = por %p236, %p237
      %p240 = scmp.ne.s32.totalorder %s223, %s239
      %p241 = scmp.eq.s32.totalorder %s48, 0
      %p242 = por %p240, %p241
      %s243 = ssub.s32 %s42, %s49
      %p244 = scmp.eq.s32.totalorder %s243, 0
      %s246 = sadd.s32 %s245, 1
      %s247 = scalar_select %p244, %s245, %s246
      %p250 = pneg %p244
      %p251 = scmp.eq.s32.totalorder %s42, 2
      %p252 = por %p250, %p251
      %p253 = scmp.ne.s32.totalorder %s245, %s248
      %p254 = scmp.eq.s32.totalorder %s42, 0
      %p255 = por %p253, %p254
      %p256 = scmp.ne.s32.totalorder %s245, %s248
      %p257 = scmp.eq.s32.totalorder %s47, 2
      %p258 = por %p256, %p257
      %p259 = scmp.ne.s32.totalorder %s248, %s249
      %p260 = scmp.eq.s32.totalorder %s47, 0
      %p261 = por %p259, %p260
      %p262 = scmp.ne.s32.totalorder %s248, %s249
      %p263 = scmp.eq.s32.totalorder %s48, 2
      %p264 = por %p262, %p263
      %p266 = scmp.ne.s32.totalorder %s249, %s265
      %p267 = scmp.eq.s32.totalorder %s48, 0
      %p268 = por %p266, %p267
      %s269 = ssub.s32 %s42, %s49
      %p270 = scmp.eq.s32.totalorder %s269, 0
      %s272 = sadd.s32 %s271, 1
      %s273 = scalar_select %p270, %s271, %s272
      %p276 = pneg %p270
      %p277 = scmp.eq.s32.totalorder %s42, 2
      %p278 = por %p276, %p277
      %p279 = scmp.ne.s32.totalorder %s271, %s274
      %p280 = scmp.eq.s32.totalorder %s42, 0
      %p281 = por %p279, %p280
      %p282 = scmp.ne.s32.totalorder %s271, %s274
      %p283 = scmp.eq.s32.totalorder %s47, 2
      %p284 = por %p282, %p283
      %p285 = scmp.ne.s32.totalorder %s274, %s275
      %p286 = scmp.eq.s32.totalorder %s47, 0
      %p287 = por %p285, %p286
      %p288 = scmp.ne.s32.totalorder %s274, %s275
      %p289 = scmp.eq.s32.totalorder %s48, 2
      %p290 = por %p288, %p289
      %p292 = scmp.ne.s32.totalorder %s275, %s291
      %p293 = scmp.eq.s32.totalorder %s48, 0
      %p294 = por %p292, %p293
      %s295 = ssub.s32 %s42, %s49
      %p296 = scmp.eq.s32.totalorder %s295, 0
      %s298 = sadd.s32 %s297, 1
      %s299 = scalar_select %p296, %s297, %s298
      %p302 = pneg %p296
      %p303 = scmp.eq.s32.totalorder %s42, 2
      %p304 = por %p302, %p303
      %p305 = scmp.ne.s32.totalorder %s297, %s300
      %p306 = scmp.eq.s32.totalorder %s42, 0
      %p307 = por %p305, %p306
      %p308 = scmp.ne.s32.totalorder %s297, %s300
      %p309 = scmp.eq.s32.totalorder %s47, 2
      %p310 = por %p308, %p309
      %p311 = scmp.ne.s32.totalorder %s300, %s301
      %p312 = scmp.eq.s32.totalorder %s47, 0
      %p313 = por %p311, %p312
      %p314 = scmp.ne.s32.totalorder %s300, %s301
      %p315 = scmp.eq.s32.totalorder %s48, 2
      %p316 = por %p314, %p315
      %p318 = scmp.ne.s32.totalorder %s301, %s317
      %p319 = scmp.eq.s32.totalorder %s48, 0
      %p320 = por %p318, %p319
      %s321 = ssub.s32 %s42, %s49
      %p322 = scmp.eq.s32.totalorder %s321, 0
      %s324 = sadd.s32 %s323, 1
      %s325 = scalar_select %p322, %s323, %s324
      %p328 = pneg %p322
      %p329 = scmp.eq.s32.totalorder %s42, 2
      %p330 = por %p328, %p329
      %p331 = scmp.ne.s32.totalorder %s323, %s326
      %p332 = scmp.eq.s32.totalorder %s42, 0
      %p333 = por %p331, %p332
      %p334 = scmp.ne.s32.totalorder %s323, %s326
      %p335 = scmp.eq.s32.totalorder %s47, 2
      %p336 = por %p334, %p335
      %p337 = scmp.ne.s32.totalorder %s326, %s327
      %p338 = scmp.eq.s32.totalorder %s47, 0
      %p339 = por %p337, %p338
      %p340 = scmp.ne.s32.totalorder %s326, %s327
      %p341 = scmp.eq.s32.totalorder %s48, 2
      %p342 = por %p340, %p341
      %p344 = scmp.ne.s32.totalorder %s327, %s343
      %p345 = scmp.eq.s32.totalorder %s48, 0
      %p346 = por %p344, %p345
      %s347 = ssub.s32 %s42, %s49
      %p348 = scmp.eq.s32.totalorder %s347, 0
      %s350 = sadd.s32 %s349, 1
      %s351 = scalar_select %p348, %s349, %s350
      %p354 = pneg %p348
      %p355 = scmp.eq.s32.totalorder %s42, 2
      %p356 = por %p354, %p355
      %p357 = scmp.ne.s32.totalorder %s349, %s352
      %p358 = scmp.eq.s32.totalorder %s42, 0
      %p359 = por %p357, %p358
      %p360 = scmp.ne.s32.totalorder %s349, %s352
      %p361 = scmp.eq.s32.totalorder %s47, 2
      %p362 = por %p360, %p361
      %p363 = scmp.ne.s32.totalorder %s352, %s353
      %p364 = scmp.eq.s32.totalorder %s47, 0
      %p365 = por %p363, %p364
      %p366 = scmp.ne.s32.totalorder %s352, %s353
      %p367 = scmp.eq.s32.totalorder %s48, 2
      %p368 = por %p366, %p367
      %p370 = scmp.ne.s32.totalorder %s353, %s369
      %p371 = scmp.eq.s32.totalorder %s48, 0
      %p372 = por %p370, %p371
      %s373 = ssub.s32 %s42, %s49
      %p374 = scmp.eq.s32.totalorder %s373, 0
      %s376 = sadd.s32 %s375, 1
      %s377 = scalar_select %p374, %s375, %s376
      %p380 = pneg %p374
      %p381 = scmp.eq.s32.totalorder %s42, 2
      %p382 = por %p380, %p381
      %p383 = scmp.ne.s32.totalorder %s375, %s378
      %p384 = scmp.eq.s32.totalorder %s42, 0
      %p385 = por %p383, %p384
      %p386 = scmp.ne.s32.totalorder %s375, %s378
      %p387 = scmp.eq.s32.totalorder %s47, 2
      %p388 = por %p386, %p387
      %p389 = scmp.ne.s32.totalorder %s378, %s379
      %p390 = scmp.eq.s32.totalorder %s47, 0
      %p391 = por %p389, %p390
      %p392 = scmp.ne.s32.totalorder %s378, %s379
      %p393 = scmp.eq.s32.totalorder %s48, 2
      %p394 = por %p392, %p393
      %p396 = scmp.ne.s32.totalorder %s379, %s395
      %p397 = scmp.eq.s32.totalorder %s48, 0
      %p398 = por %p396, %p397
      %s399 = ssub.s32 %s42, %s49
      %p400 = scmp.eq.s32.totalorder %s399, 0
      %s402 = sadd.s32 %s401, 1
      %s403 = scalar_select %p400, %s401, %s402
      %p406 = pneg %p400
      %p407 = scmp.eq.s32.totalorder %s42, 2
      %p408 = por %p406, %p407
      %p409 = scmp.ne.s32.totalorder %s401, %s404
      %p410 = scmp.eq.s32.totalorder %s42, 0
      %p411 = por %p409, %p410
      %p412 = scmp.ne.s32.totalorder %s401, %s404
      %p413 = scmp.eq.s32.totalorder %s47, 2
      %p414 = por %p412, %p413
      %p415 = scmp.ne.s32.totalorder %s404, %s405
      %p416 = scmp.eq.s32.totalorder %s47, 0
      %p417 = por %p415, %p416
      %p418 = scmp.ne.s32.totalorder %s404, %s405
      %p419 = scmp.eq.s32.totalorder %s48, 2
      %p420 = por %p418, %p419
      %p422 = scmp.ne.s32.totalorder %s405, %s421
      %p423 = scmp.eq.s32.totalorder %s48, 0
      %p424 = por %p422, %p423
      %s426 = sadd.s32 %s425, 1
      %p429 = scmp.eq.s32.totalorder %s42, 2
      %p430 = scmp.ne.s32.totalorder %s425, %s427
      %p431 = scmp.eq.s32.totalorder %s42, 0
      %p432 = por %p430, %p431
      %p433 = scmp.ne.s32.totalorder %s425, %s427
      %p434 = scmp.eq.s32.totalorder %s47, 2
      %p435 = por %p433, %p434
      %p436 = scmp.ne.s32.totalorder %s427, %s428
      %p437 = scmp.eq.s32.totalorder %s47, 0
      %p438 = por %p436, %p437
      %p439 = scmp.ne.s32.totalorder %s427, %s428
      %p440 = scmp.eq.s32.totalorder %s48, 2
      %p441 = por %p439, %p440
      %p443 = scmp.ne.s32.totalorder %s428, %s442
      %p444 = scmp.eq.s32.totalorder %s48, 0
      %p445 = por %p443, %p444
      %s447 = sadd.s32 %s446, 1
      %p450 = scmp.eq.s32.totalorder %s42, 2
      %p451 = scmp.ne.s32.totalorder %s446, %s448
      %p452 = scmp.eq.s32.totalorder %s42, 0
      %p453 = por %p451, %p452
      %p454 = scmp.ne.s32.totalorder %s446, %s448
      %p455 = scmp.eq.s32.totalorder %s47, 2
      %p456 = por %p454, %p455
      %p457 = scmp.ne.s32.totalorder %s448, %s449
      %p458 = scmp.eq.s32.totalorder %s47, 0
      %p459 = por %p457, %p458
      %p460 = scmp.ne.s32.totalorder %s448, %s449
      %p461 = scmp.eq.s32.totalorder %s48, 2
      %p462 = por %p460, %p461
      %p464 = scmp.ne.s32.totalorder %s449, %s463
      %p465 = scmp.eq.s32.totalorder %s48, 0
      %p466 = por %p464, %p465
      %s468 = sadd.s32 %s467, 1
      %p471 = scmp.eq.s32.totalorder %s42, 2
      %p472 = scmp.ne.s32.totalorder %s467, %s469
      %p473 = scmp.eq.s32.totalorder %s42, 0
      %p474 = por %p472, %p473
      %p475 = scmp.ne.s32.totalorder %s467, %s469
      %p476 = scmp.eq.s32.totalorder %s47, 2
      %p477 = por %p475, %p476
      %p478 = scmp.ne.s32.totalorder %s469, %s470
      %p479 = scmp.eq.s32.totalorder %s47, 0
      %p480 = por %p478, %p479
      %p481 = scmp.ne.s32.totalorder %s469, %s470
      %p482 = scmp.eq.s32.totalorder %s48, 2
      %p483 = por %p481, %p482
      %p485 = scmp.ne.s32.totalorder %s470, %s484
      %p486 = scmp.eq.s32.totalorder %s48, 0
      %p487 = por %p485, %p486
      %p488 = scmp.le.s32.totalorder 1, %s42
      %p489 = scmp.lt.s32.totalorder %s42, 4
      %p490 = pnand %p488, %p489
      %p491 = pneg %p490
      // Predicated region
      $region9: #{gpt_forward.1} parent=5 // pred_check
        _
      $region10: #{gpt_forward.1} parent=5 // pred_check_branch
        %493 = sbr.rel (%p490) target = $region12
      $region11: #{gpt_forward.1} parent=5 // pred_region
        %s494 = ssub.s32 %s42, 1
        // Predicated region
        $region13: #{gpt_forward.1} parent=11 // pred_check
          %p495 = pneg %p63
        $region14: #{gpt_forward.1} parent=11 // pred_check_branch
          %497 = sbr.rel (%p495) target = $region16
        $region15: #{gpt_forward.1} parent=11 // pred_region
          %499 = vsyncadd [#allocation6], 0
          %s501 = sshll.u32 %s0, 4
          %s502 = int_to_ptr.hbm [resolvable:$true] %s501
          %504 = dma.hbm_to_smem %s502, 32, [#allocation3], [#allocation6]
        $region16: #{gpt_forward.1} parent=11 // pred_fallthru
          _
        // Predicated region
        $region17: #{gpt_forward.1} parent=11 // pred_check
          %p505 = pneg %p84
        $region18: #{gpt_forward.1} parent=11 // pred_check_branch
          %507 = sbr.rel (%p505) target = $region20
        $region19: #{gpt_forward.1} parent=11 // pred_region
          %509 = vsyncadd [#allocation4], 0
          %s510 = sshll.u32 %s1, 4
          %s511 = int_to_ptr.hbm [resolvable:$true] %s510
          %s512 = sshll.u32 [#allocation7], 4
          %s513 = int_to_ptr.vmem [resolvable:$true] %s512
          %518 = dma.hbm_to_vmem [thread:$0]  %s511, 2048, %s513, [#allocation4], 128, 128, 8
        $region20: #{gpt_forward.1} parent=11 // pred_fallthru
          _
        // Predicated region
        $region21: #{gpt_forward.1} parent=11 // pred_check
          %p519 = pneg %p105
        $region22: #{gpt_forward.1} parent=11 // pred_check_branch
          %521 = sbr.rel (%p519) target = $region24
        $region23: #{gpt_forward.1} parent=11 // pred_region
          _
        $region24: #{gpt_forward.1} parent=11 // pred_fallthru
          _
        // Predicated region
        $region25: #{gpt_forward.1} parent=11 // pred_check
          %p522 = pneg %p438
        $region26: #{gpt_forward.1} parent=11 // pred_check_branch
          %524 = sbr.rel (%p522) target = $region28
        $region27: #{gpt_forward.1} parent=11 // pred_region
          %526 = vsyncadd [#allocation24], 0
          %s527 = sshll.u32 %s15, 4
          %s528 = int_to_ptr.hbm [resolvable:$true] %s527
          %s529 = sshll.u32 [#allocation23], 4
          %s530 = int_to_ptr.vmem [resolvable:$true] %s529
          %535 = dma.hbm_to_vmem [thread:$0]  %s528, 1024, %s530, [#allocation24], 64, 64, 4
        $region28: #{gpt_forward.1} parent=11 // pred_fallthru
          _
        // Predicated region
        $region29: #{gpt_forward.1} parent=11 // pred_check
          %p536 = pneg %p459
        $region30: #{gpt_forward.1} parent=11 // pred_check_branch
          %538 = sbr.rel (%p536) target = $region32
        $region31: #{gpt_forward.1} parent=11 // pred_region
          %540 = vsyncadd [#allocation24], 0
          %s542 = sshll.u32 %s16, 4
          %s543 = int_to_ptr.hbm [resolvable:$true] %s542
          %s544 = sshll.u32 [#allocation25], 4
          %s545 = int_to_ptr.vmem [resolvable:$true] %s544
          %547 = dma.hbm_to_vmem [thread:$0]  %s543, 16, %s545, [#allocation24]
        $region32: #{gpt_forward.1} parent=11 // pred_fallthru
          _
      $region12: #{gpt_forward.1} parent=5 // pred_fallthru
        _
      %p548 = scmp.lt.s32.totalorder %s42, 3
      // Predicated region
      $region33: #{gpt_forward.1} parent=5 // pred_check
        %p549 = pneg %p548
      $region34: #{gpt_forward.1} parent=5 // pred_check_branch
        %551 = sbr.rel (%p549) target = $region36
      $region35: #{gpt_forward.1} parent=5 // pred_region
        // Predicated region
        $region37: #{gpt_forward.1} parent=35 // pred_check
          %p552 = pneg %p125
        $region38: #{gpt_forward.1} parent=35 // pred_check_branch
          %554 = sbr.rel (%p552) target = $region40
        $region39: #{gpt_forward.1} parent=35 // pred_region
          %p555 = scmp.lt.s32.totalorder %s42, 2
          %s556 = scalar_select %p555, %s42, 2
          %s557 = scalar_lea.vmem %s3, %s556
        $region40: #{gpt_forward.1} parent=35 // pred_fallthru
          _
        // Predicated region
        $region41: #{gpt_forward.1} parent=35 // pred_check
          %p558 = pneg %p151
        $region42: #{gpt_forward.1} parent=35 // pred_check_branch
          %560 = sbr.rel (%p558) target = $region44
        $region43: #{gpt_forward.1} parent=35 // pred_region
          %s561 = sand.u32 %s42, 1
          %s562 = scalar_lea.sflag [#allocation9], %s561
          %s563 = sand.u32 %s141, 1
          %s564 = scalar_lea.vmem [#allocation8], %s563
          %566 = vsyncadd %s562, 0
          %s567 = scalar_lea.hbm %s4, %s42
          %s569 = sshll.u32 %s567, 4
          %s570 = int_to_ptr.hbm [resolvable:$true] %s569
          %s571 = sshll.u32 %s564, 4
          %s572 = int_to_ptr.vmem [resolvable:$true] %s571
          %574 = dma.hbm_to_vmem [thread:$0]  %s570, 16, %s572, %s562
        $region44: #{gpt_forward.1} parent=35 // pred_fallthru
          _
        // Predicated region
        $region45: #{gpt_forward.1} parent=35 // pred_check
          %p575 = pneg %p177
        $region46: #{gpt_forward.1} parent=35 // pred_check_branch
          %577 = sbr.rel (%p575) target = $region48
        $region47: #{gpt_forward.1} parent=35 // pred_region
          %s578 = sand.u32 %s42, 1
          %s579 = scalar_lea.sflag [#allocation9], %s578
          %s580 = sand.u32 %s167, 1
          %s581 = smul.addr %s580, 128
          %s582 = scalar_lea.vmem [#allocation10], %s581
          %584 = vsyncadd %s579, 0
          %s585 = smul.addr %s42, 32
          %s586 = smul.addr %s585, 4
          %s587 = scalar_lea.hbm %s5, %s586
          %s588 = sshll.u32 %s587, 4
          %s589 = int_to_ptr.hbm [resolvable:$true] %s588
          %s590 = sshll.u32 %s582, 4
          %s591 = int_to_ptr.vmem [resolvable:$true] %s590
          %596 = dma.hbm_to_vmem [thread:$0]  %s589, 2048, %s591, %s579, 128, 128, 8
        $region48: #{gpt_forward.1} parent=35 // pred_fallthru
          _
        // Predicated region
        $region49: #{gpt_forward.1} parent=35 // pred_check
          %p597 = pneg %p203
        $region50: #{gpt_forward.1} parent=35 // pred_check_branch
          %599 = sbr.rel (%p597) target = $region52
        $region51: #{gpt_forward.1} parent=35 // pred_region
          %s600 = sand.u32 %s42, 1
          %s601 = scalar_lea.sflag [#allocation12], %s600
          %s602 = sand.u32 %s193, 1
          %s603 = smul.addr %s602, 2
          %s604 = scalar_lea.vmem [#allocation11], %s603
          %606 = vsyncadd %s601, 0
          %s607 = smul.addr %s42, 2
          %s608 = scalar_lea.hbm %s6, %s607
          %s610 = sshll.u32 %s608, 4
          %s611 = int_to_ptr.hbm [resolvable:$true] %s610
          %s612 = sshll.u32 %s604, 4
          %s613 = int_to_ptr.vmem [resolvable:$true] %s612
          %615 = dma.hbm_to_vmem [thread:$0]  %s611, 32, %s613, %s601
        $region52: #{gpt_forward.1} parent=35 // pred_fallthru
          _
        // Predicated region
        $region53: #{gpt_forward.1} parent=35 // pred_check
          %p616 = pneg %p229
        $region54: #{gpt_forward.1} parent=35 // pred_check_branch
          %618 = sbr.rel (%p616) target = $region56
        $region55: #{gpt_forward.1} parent=35 // pred_region
          %s619 = sand.u32 %s42, 1
          %s620 = scalar_lea.sflag [#allocation12], %s619
          %s621 = sand.u32 %s219, 1
          %s622 = smul.addr %s621, 24
          %s623 = scalar_lea.vmem [#allocation13], %s622
          %625 = vsyncadd %s620, 0
          %s626 = smul.addr %s42, 6
          %s627 = smul.addr %s626, 4
          %s628 = scalar_lea.hbm %s7, %s627
          %s629 = sshll.u32 %s628, 4
          %s630 = int_to_ptr.hbm [resolvable:$true] %s629
          %s631 = sshll.u32 %s623, 4
          %s632 = int_to_ptr.vmem [resolvable:$true] %s631
          %637 = dma.hbm_to_vmem [thread:$0]  %s630, 384, %s632, %s620, 64, 64, 4
        $region56: #{gpt_forward.1} parent=35 // pred_fallthru
          _
        // Predicated region
        $region57: #{gpt_forward.1} parent=35 // pred_check
          %p638 = pneg %p255
        $region58: #{gpt_forward.1} parent=35 // pred_check_branch
          %640 = sbr.rel (%p638) target = $region60
        $region59: #{gpt_forward.1} parent=35 // pred_region
          %s641 = sand.u32 %s42, 1
          %s642 = scalar_lea.sflag [#allocation15], %s641
          %s643 = sand.u32 %s245, 1
          %s644 = scalar_lea.vmem [#allocation14], %s643
          %646 = vsyncadd %s642, 0
          %s647 = scalar_lea.hbm %s8, %s42
          %s649 = sshll.u32 %s647, 4
          %s650 = int_to_ptr.hbm [resolvable:$true] %s649
          %s651 = sshll.u32 %s644, 4
          %s652 = int_to_ptr.vmem [resolvable:$true] %s651
          %654 = dma.hbm_to_vmem [thread:$0]  %s650, 16, %s652, %s642
        $region60: #{gpt_forward.1} parent=35 // pred_fallthru
          _
        // Predicated region
        $region61: #{gpt_forward.1} parent=35 // pred_check
          %p655 = pneg %p281
        $region62: #{gpt_forward.1} parent=35 // pred_check_branch
          %657 = sbr.rel (%p655) target = $region64
        $region63: #{gpt_forward.1} parent=35 // pred_region
          %p658 = scmp.lt.s32.totalorder %s42, 2
          %s659 = scalar_select %p658, %s42, 2
          %s660 = scalar_lea.vmem %s9, %s659
        $region64: #{gpt_forward.1} parent=35 // pred_fallthru
          _
        // Predicated region
        $region65: #{gpt_forward.1} parent=35 // pred_check
          %p661 = pneg %p307
        $region66: #{gpt_forward.1} parent=35 // pred_check_branch
          %663 = sbr.rel (%p661) target = $region68
        $region67: #{gpt_forward.1} parent=35 // pred_region
          %s664 = sand.u32 %s42, 1
          %s665 = scalar_lea.sflag [#allocation15], %s664
          %s666 = sand.u32 %s297, 1
          %s667 = scalar_lea.vmem [#allocation16], %s666
          %669 = vsyncadd %s665, 0
          %s670 = scalar_lea.hbm %s10, %s42
          %s672 = sshll.u32 %s670, 4
          %s673 = int_to_ptr.hbm [resolvable:$true] %s672
          %s674 = sshll.u32 %s667, 4
          %s675 = int_to_ptr.vmem [resolvable:$true] %s674
          %677 = dma.hbm_to_vmem [thread:$0]  %s673, 16, %s675, %s665
        $region68: #{gpt_forward.1} parent=35 // pred_fallthru
          _
        // Predicated region
        $region69: #{gpt_forward.1} parent=35 // pred_check
          %p678 = pneg %p333
        $region70: #{gpt_forward.1} parent=35 // pred_check_branch
          %680 = sbr.rel (%p678) target = $region72
        $region71: #{gpt_forward.1} parent=35 // pred_region
          %s681 = sand.u32 %s42, 1
          %s682 = scalar_lea.sflag [#allocation18], %s681
          %s683 = sand.u32 %s323, 1
          %s684 = smul.addr %s683, 128
          %s685 = scalar_lea.vmem [#allocation17], %s684
          %687 = vsyncadd %s682, 0
          %s688 = smul.addr %s42, 32
          %s689 = smul.addr %s688, 4
          %s690 = scalar_lea.hbm %s11, %s689
          %s691 = sshll.u32 %s690, 4
          %s692 = int_to_ptr.hbm [resolvable:$true] %s691
          %s693 = sshll.u32 %s685, 4
          %s694 = int_to_ptr.vmem [resolvable:$true] %s693
          %699 = dma.hbm_to_vmem [thread:$0]  %s692, 2048, %s694, %s682, 128, 128, 8
        $region72: #{gpt_forward.1} parent=35 // pred_fallthru
          _
        // Predicated region
        $region73: #{gpt_forward.1} parent=35 // pred_check
          %p700 = pneg %p359
        $region74: #{gpt_forward.1} parent=35 // pred_check_branch
          %702 = sbr.rel (%p700) target = $region76
        $region75: #{gpt_forward.1} parent=35 // pred_region
          %s703 = sand.u32 %s42, 1
          %s704 = scalar_lea.sflag [#allocation18], %s703
          %s705 = sand.u32 %s349, 1
          %s706 = smul.addr %s705, 2
          %s707 = scalar_lea.vmem [#allocation19], %s706
          %709 = vsyncadd %s704, 0
          %s710 = smul.addr %s42, 2
          %s711 = scalar_lea.hbm %s12, %s710
          %s713 = sshll.u32 %s711, 4
          %s714 = int_to_ptr.hbm [resolvable:$true] %s713
          %s715 = sshll.u32 %s707, 4
          %s716 = int_to_ptr.vmem [resolvable:$true] %s715
          %718 = dma.hbm_to_vmem [thread:$0]  %s714, 32, %s716, %s704
        $region76: #{gpt_forward.1} parent=35 // pred_fallthru
          _
        // Predicated region
        $region77: #{gpt_forward.1} parent=35 // pred_check
          %p719 = pneg %p385
        $region78: #{gpt_forward.1} parent=35 // pred_check_branch
          %721 = sbr.rel (%p719) target = $region80
        $region79: #{gpt_forward.1} parent=35 // pred_region
          %s722 = sand.u32 %s42, 1
          %s723 = scalar_lea.sflag [#allocation21], %s722
          %s724 = sand.u32 %s375, 1
          %s725 = smul.addr %s724, 128
          %s726 = scalar_lea.vmem [#allocation20], %s725
          %728 = vsyncadd %s723, 0
          %s729 = smul.addr %s42, 32
          %s730 = smul.addr %s729, 4
          %s731 = scalar_lea.hbm %s13, %s730
          %s732 = sshll.u32 %s731, 4
          %s733 = int_to_ptr.hbm [resolvable:$true] %s732
          %s734 = sshll.u32 %s726, 4
          %s735 = int_to_ptr.vmem [resolvable:$true] %s734
          %740 = dma.hbm_to_vmem [thread:$0]  %s733, 2048, %s735, %s723, 64, 64, 4
        $region80: #{gpt_forward.1} parent=35 // pred_fallthru
          _
        // Predicated region
        $region81: #{gpt_forward.1} parent=35 // pred_check
          %p741 = pneg %p411
        $region82: #{gpt_forward.1} parent=35 // pred_check_branch
          %743 = sbr.rel (%p741) target = $region84
        $region83: #{gpt_forward.1} parent=35 // pred_region
          %s744 = sand.u32 %s42, 1
          %s745 = scalar_lea.sflag [#allocation21], %s744
          %s746 = sand.u32 %s401, 1
          %s747 = scalar_lea.vmem [#allocation22], %s746
          %749 = vsyncadd %s745, 0
          %s750 = scalar_lea.hbm %s14, %s42
          %s752 = sshll.u32 %s750, 4
          %s753 = int_to_ptr.hbm [resolvable:$true] %s752
          %s754 = sshll.u32 %s747, 4
          %s755 = int_to_ptr.vmem [resolvable:$true] %s754
          %757 = dma.hbm_to_vmem [thread:$0]  %s753, 16, %s755, %s745
        $region84: #{gpt_forward.1} parent=35 // pred_fallthru
          _
      $region36: #{gpt_forward.1} parent=5 // pred_fallthru
        _
      %p758 = scmp.le.s32.totalorder 1, %s42
      %p759 = scmp.lt.s32.totalorder %s42, 4
      %p760 = pnand %p758, %p759
      %p761 = pneg %p760
      // Predicated region
      $region85: #{gpt_forward.1} parent=5 // pred_check
        _
      $region86: #{gpt_forward.1} parent=5 // pred_check_branch
        %763 = sbr.rel (%p760) target = $region88
      $region87: #{gpt_forward.1} parent=5 // pred_region
        %s764 = ssub.s32 %s42, 1
        // Predicated region
        $region89: #{gpt_forward.1} parent=87 // pred_check
          %p765 = pneg %p63
        $region90: #{gpt_forward.1} parent=87 // pred_check_branch
          %767 = sbr.rel (%p765) target = $region92
        $region91: #{gpt_forward.1} parent=87 // pred_region
          %769 = dma.done [#allocation6], 32
        $region92: #{gpt_forward.1} parent=87 // pred_fallthru
          _
        // Predicated region
        $region93: #{gpt_forward.1} parent=87 // pred_check
          %p770 = pneg %p84
        $region94: #{gpt_forward.1} parent=87 // pred_check_branch
          %772 = sbr.rel (%p770) target = $region96
        $region95: #{gpt_forward.1} parent=87 // pred_region
          %774 = dma.done [#allocation4], 2048
        $region96: #{gpt_forward.1} parent=87 // pred_fallthru
          _
        %s775 = sand.u32 %s47, 1
        %s776 = scalar_lea.sflag [#allocation9], %s775
        %s777 = sand.u32 %s144, 1
        %s778 = scalar_lea.vmem [#allocation8], %s777
        // Predicated region
        $region97: #{gpt_forward.1} parent=87 // pred_check
          %p779 = pneg %p157
        $region98: #{gpt_forward.1} parent=87 // pred_check_branch
          %781 = sbr.rel (%p779) target = $region100
        $region99: #{gpt_forward.1} parent=87 // pred_region
          %783 = dma.done %s776, 16
        $region100: #{gpt_forward.1} parent=87 // pred_fallthru
          _
        %s784 = sand.u32 %s47, 1
        %s785 = scalar_lea.sflag [#allocation9], %s784
        %s786 = sand.u32 %s170, 1
        %s787 = smul.addr %s786, 128
        %s788 = scalar_lea.vmem [#allocation10], %s787
        // Predicated region
        $region101: #{gpt_forward.1} parent=87 // pred_check
          %p789 = pneg %p183
        $region102: #{gpt_forward.1} parent=87 // pred_check_branch
          %791 = sbr.rel (%p789) target = $region104
        $region103: #{gpt_forward.1} parent=87 // pred_region
          %793 = dma.done %s785, 2048
        $region104: #{gpt_forward.1} parent=87 // pred_fallthru
          _
        %s794 = sand.u32 %s47, 1
        %s795 = scalar_lea.sflag [#allocation12], %s794
        %s796 = sand.u32 %s196, 1
        %s797 = smul.addr %s796, 2
        %s798 = scalar_lea.vmem [#allocation11], %s797
        // Predicated region
        $region105: #{gpt_forward.1} parent=87 // pred_check
          %p799 = pneg %p209
        $region106: #{gpt_forward.1} parent=87 // pred_check_branch
          %801 = sbr.rel (%p799) target = $region108
        $region107: #{gpt_forward.1} parent=87 // pred_region
          %803 = dma.done %s795, 32
        $region108: #{gpt_forward.1} parent=87 // pred_fallthru
          _
        %s804 = sand.u32 %s47, 1
        %s805 = scalar_lea.sflag [#allocation12], %s804
        %s806 = sand.u32 %s222, 1
        %s807 = smul.addr %s806, 24
        %s808 = scalar_lea.vmem [#allocation13], %s807
        // Predicated region
        $region109: #{gpt_forward.1} parent=87 // pred_check
          %p809 = pneg %p235
        $region110: #{gpt_forward.1} parent=87 // pred_check_branch
          %811 = sbr.rel (%p809) target = $region112
        $region111: #{gpt_forward.1} parent=87 // pred_region
          %813 = dma.done %s805, 384
        $region112: #{gpt_forward.1} parent=87 // pred_fallthru
          _
        %s814 = sand.u32 %s47, 1
        %s815 = scalar_lea.sflag [#allocation15], %s814
        %s816 = sand.u32 %s248, 1
        %s817 = scalar_lea.vmem [#allocation14], %s816
        // Predicated region
        $region113: #{gpt_forward.1} parent=87 // pred_check
          %p818 = pneg %p261
        $region114: #{gpt_forward.1} parent=87 // pred_check_branch
          %820 = sbr.rel (%p818) target = $region116
        $region115: #{gpt_forward.1} parent=87 // pred_region
          %822 = dma.done %s815, 16
        $region116: #{gpt_forward.1} parent=87 // pred_fallthru
          _
        %s823 = sand.u32 %s47, 1
        %s824 = scalar_lea.sflag [#allocation15], %s823
        %s825 = sand.u32 %s300, 1
        %s826 = scalar_lea.vmem [#allocation16], %s825
        // Predicated region
        $region117: #{gpt_forward.1} parent=87 // pred_check
          %p827 = pneg %p313
        $region118: #{gpt_forward.1} parent=87 // pred_check_branch
          %829 = sbr.rel (%p827) target = $region120
        $region119: #{gpt_forward.1} parent=87 // pred_region
          %831 = dma.done %s824, 16
        $region120: #{gpt_forward.1} parent=87 // pred_fallthru
          _
        %s832 = sand.u32 %s47, 1
        %s833 = scalar_lea.sflag [#allocation18], %s832
        %s834 = sand.u32 %s326, 1
        %s835 = smul.addr %s834, 128
        %s836 = scalar_lea.vmem [#allocation17], %s835
        // Predicated region
        $region121: #{gpt_forward.1} parent=87 // pred_check
          %p837 = pneg %p339
        $region122: #{gpt_forward.1} parent=87 // pred_check_branch
          %839 = sbr.rel (%p837) target = $region124
        $region123: #{gpt_forward.1} parent=87 // pred_region
          %841 = dma.done %s833, 2048
        $region124: #{gpt_forward.1} parent=87 // pred_fallthru
          _
        %s842 = sand.u32 %s47, 1
        %s843 = scalar_lea.sflag [#allocation18], %s842
        %s844 = sand.u32 %s352, 1
        %s845 = smul.addr %s844, 2
        %s846 = scalar_lea.vmem [#allocation19], %s845
        // Predicated region
        $region125: #{gpt_forward.1} parent=87 // pred_check
          %p847 = pneg %p365
        $region126: #{gpt_forward.1} parent=87 // pred_check_branch
          %849 = sbr.rel (%p847) target = $region128
        $region127: #{gpt_forward.1} parent=87 // pred_region
          %851 = dma.done %s843, 32
        $region128: #{gpt_forward.1} parent=87 // pred_fallthru
          _
        %s852 = sand.u32 %s47, 1
        %s853 = scalar_lea.sflag [#allocation21], %s852
        %s854 = sand.u32 %s378, 1
        %s855 = smul.addr %s854, 128
        %s856 = scalar_lea.vmem [#allocation20], %s855
        // Predicated region
        $region129: #{gpt_forward.1} parent=87 // pred_check
          %p857 = pneg %p391
        $region130: #{gpt_forward.1} parent=87 // pred_check_branch
          %859 = sbr.rel (%p857) target = $region132
        $region131: #{gpt_forward.1} parent=87 // pred_region
          %861 = dma.done %s853, 2048
        $region132: #{gpt_forward.1} parent=87 // pred_fallthru
          _
        %s862 = sand.u32 %s47, 1
        %s863 = scalar_lea.sflag [#allocation21], %s862
        %s864 = sand.u32 %s404, 1
        %s865 = scalar_lea.vmem [#allocation22], %s864
        // Predicated region
        $region133: #{gpt_forward.1} parent=87 // pred_check
          %p866 = pneg %p417
        $region134: #{gpt_forward.1} parent=87 // pred_check_branch
          %868 = sbr.rel (%p866) target = $region136
        $region135: #{gpt_forward.1} parent=87 // pred_region
          %870 = dma.done %s863, 16
        $region136: #{gpt_forward.1} parent=87 // pred_fallthru
          _
        // Predicated region
        $region137: #{gpt_forward.1} parent=87 // pred_check
          %p871 = pneg %p438
        $region138: #{gpt_forward.1} parent=87 // pred_check_branch
          %873 = sbr.rel (%p871) target = $region140
        $region139: #{gpt_forward.1} parent=87 // pred_region
          %875 = dma.done [#allocation24], 1024
        $region140: #{gpt_forward.1} parent=87 // pred_fallthru
          _
        // Predicated region
        $region141: #{gpt_forward.1} parent=87 // pred_check
          %p876 = pneg %p459
        $region142: #{gpt_forward.1} parent=87 // pred_check_branch
          %878 = sbr.rel (%p876) target = $region144
        $region143: #{gpt_forward.1} parent=87 // pred_region
          %880 = dma.done [#allocation24], 16
        $region144: #{gpt_forward.1} parent=87 // pred_fallthru
          _
        %881 = sfence
        %p882 = pneg %p63
        %p883 = pneg %p60
        %p884 = pneg %p84
        %p885 = pneg %p81
        %p886 = pneg %p105
        %p887 = pneg %p102
        %p888 = scmp.lt.s32.totalorder %s47, 2
        %s889 = scalar_select %p888, %s47, 2
        %s890 = scalar_lea.vmem %s3, %s889
        %p891 = pneg %p131
        %p892 = pneg %p128
        %s893 = sand.u32 %s47, 1
        %s894 = scalar_lea.sflag [#allocation9], %s893
        %s895 = sand.u32 %s144, 1
        %s896 = scalar_lea.vmem [#allocation8], %s895
        %p897 = pneg %p157
        %p898 = pneg %p154
        %s899 = sand.u32 %s47, 1
        %s900 = scalar_lea.sflag [#allocation9], %s899
        %s901 = sand.u32 %s170, 1
        %s902 = smul.addr %s901, 128
        %s903 = scalar_lea.vmem [#allocation10], %s902
        %p904 = pneg %p183
        %p905 = pneg %p180
        %s906 = sand.u32 %s47, 1
        %s907 = scalar_lea.sflag [#allocation12], %s906
        %s908 = sand.u32 %s196, 1
        %s909 = smul.addr %s908, 2
        %s910 = scalar_lea.vmem [#allocation11], %s909
        %p911 = pneg %p209
        %p912 = pneg %p206
        %s913 = sand.u32 %s47, 1
        %s914 = scalar_lea.sflag [#allocation12], %s913
        %s915 = sand.u32 %s222, 1
        %s916 = smul.addr %s915, 24
        %s917 = scalar_lea.vmem [#allocation13], %s916
        %p918 = pneg %p235
        %p919 = pneg %p232
        %s920 = sand.u32 %s47, 1
        %s921 = scalar_lea.sflag [#allocation15], %s920
        %s922 = sand.u32 %s248, 1
        %s923 = scalar_lea.vmem [#allocation14], %s922
        %p924 = pneg %p261
        %p925 = pneg %p258
        %p926 = scmp.lt.s32.totalorder %s47, 2
        %s927 = scalar_select %p926, %s47, 2
        %s928 = scalar_lea.vmem %s9, %s927
        %p929 = pneg %p287
        %p930 = pneg %p284
        %s931 = sand.u32 %s47, 1
        %s932 = scalar_lea.sflag [#allocation15], %s931
        %s933 = sand.u32 %s300, 1
        %s934 = scalar_lea.vmem [#allocation16], %s933
        %p935 = pneg %p313
        %p936 = pneg %p310
        %s937 = sand.u32 %s47, 1
        %s938 = scalar_lea.sflag [#allocation18], %s937
        %s939 = sand.u32 %s326, 1
        %s940 = smul.addr %s939, 128
        %s941 = scalar_lea.vmem [#allocation17], %s940
        %p942 = pneg %p339
        %p943 = pneg %p336
        %s944 = sand.u32 %s47, 1
        %s945 = scalar_lea.sflag [#allocation18], %s944
        %s946 = sand.u32 %s352, 1
        %s947 = smul.addr %s946, 2
        %s948 = scalar_lea.vmem [#allocation19], %s947
        %p949 = pneg %p365
        %p950 = pneg %p362
        %s951 = sand.u32 %s47, 1
        %s952 = scalar_lea.sflag [#allocation21], %s951
        %s953 = sand.u32 %s378, 1
        %s954 = smul.addr %s953, 128
        %s955 = scalar_lea.vmem [#allocation20], %s954
        %p956 = pneg %p391
        %p957 = pneg %p388
        %s958 = sand.u32 %s47, 1
        %s959 = scalar_lea.sflag [#allocation21], %s958
        %s960 = sand.u32 %s404, 1
        %s961 = scalar_lea.vmem [#allocation22], %s960
        %p962 = pneg %p417
        %p963 = pneg %p414
        %p964 = pneg %p438
        %p965 = pneg %p435
        %p966 = pneg %p459
        %p967 = pneg %p456
        %p968 = pneg %p480
        %p969 = pneg %p477
        %p970 = scmp.lt.s32.totalorder %s47, 2
        %s971 = scalar_select %p970, %s47, 2
        %s972 = scalar_lea.vmem %s3, %s971
        %p973 = scmp.lt.s32.totalorder %s47, 2
        %s974 = scalar_select %p973, %s47, 2
        %s975 = scalar_lea.vmem %s9, %s974
        %p977 = scmp.eq.s32.totalorder %s47, 0
        // Predicated region
        $region145: #{gpt_forward.1} parent=87 // pred_check
          %p978 = pneg %p977
        $region146: #{gpt_forward.1} parent=87 // pred_check_branch
          %980 = sbr.rel (%p978) target = $region148
        $region147: #{gpt_forward.1} parent=87 // pred_region
          %s981 = sld [smem:[#allocation3]]
          %s982 = scalar_lea.vmem [#allocation7], %s981
          %v983 = vld [vmem:[%s982] sm:$0x1]
          %v984 = vld [vmem:[%s2] sm:$0x1]
          %v985 = vadd.f32 %v983, %v984
          %986 = vst [vmem:[#allocation2] sm:$0x1] %v985
          %s987 = sld [smem:[#allocation3 + $0x1]]
          %s988 = scalar_lea.vmem [#allocation7], %s987
          %v989 = vld [vmem:[%s988] sm:$0x1]
          %v990 = vld [vmem:[%s2 + $0x1] sm:$0x1]
          %v991 = vadd.f32 %v989, %v990
          %992 = vst [vmem:[#allocation2 + $0x1] sm:$0x1] %v991
          %s993 = sld [smem:[#allocation3 + $0x2]]
          %s994 = scalar_lea.vmem [#allocation7], %s993
          %v995 = vld [vmem:[%s994] sm:$0x1]
          %v996 = vld [vmem:[%s2 + $0x2] sm:$0x1]
          %v997 = vadd.f32 %v995, %v996
          %998 = vst [vmem:[#allocation2 + $0x2] sm:$0x1] %v997
          %s999 = sld [smem:[#allocation3 + $0x3]]
          %s1000 = scalar_lea.vmem [#allocation7], %s999
          %v1001 = vld [vmem:[%s1000] sm:$0x1]
          %v1002 = vld [vmem:[%s2 + $0x3] sm:$0x1]
          %v1003 = vadd.f32 %v1001, %v1002
          %1004 = vst [vmem:[#allocation2 + $0x3] sm:$0x1] %v1003
          %s1005 = sld [smem:[#allocation3 + $0x4]]
          %s1006 = scalar_lea.vmem [#allocation7], %s1005
          %v1007 = vld [vmem:[%s1006] sm:$0x1]
          %v1008 = vld [vmem:[%s2 + $0x4] sm:$0x1]
          %v1009 = vadd.f32 %v1007, %v1008
          %1010 = vst [vmem:[#allocation2 + $0x4] sm:$0x1] %v1009
          %s1011 = sld [smem:[#allocation3 + $0x5]]
          %s1012 = scalar_lea.vmem [#allocation7], %s1011
          %v1013 = vld [vmem:[%s1012] sm:$0x1]
          %v1014 = vld [vmem:[%s2 + $0x5] sm:$0x1]
          %v1015 = vadd.f32 %v1013, %v1014
          %1016 = vst [vmem:[#allocation2 + $0x5] sm:$0x1] %v1015
          %s1017 = sld [smem:[#allocation3 + $0x6]]
          %s1018 = scalar_lea.vmem [#allocation7], %s1017
          %v1019 = vld [vmem:[%s1018] sm:$0x1]
          %v1020 = vld [vmem:[%s2 + $0x6] sm:$0x1]
          %v1021 = vadd.f32 %v1019, %v1020
          %1022 = vst [vmem:[#allocation2 + $0x6] sm:$0x1] %v1021
          %s1023 = sld [smem:[#allocation3 + $0x7]]
          %s1024 = scalar_lea.vmem [#allocation7], %s1023
          %v1025 = vld [vmem:[%s1024] sm:$0x1]
          %v1026 = vld [vmem:[%s2 + $0x7] sm:$0x1]
          %v1027 = vadd.f32 %v1025, %v1026
          %1028 = vst [vmem:[#allocation2 + $0x7] sm:$0x1] %v1027
          %s1029 = sld [smem:[#allocation3 + $0x80]]
          %s1030 = scalar_lea.vmem [#allocation7], %s1029
          %v1031 = vld [vmem:[%s1030] sm:$0x1]
          %v1032 = vld [vmem:[%s2] sm:$0x1]
          %v1033 = vadd.f32 %v1031, %v1032
          %s1034 = scalar_lea.vmem [#allocation2], 8
          %1035 = vst [vmem:[%s1034] sm:$0x1] %v1033
          %s1036 = sld [smem:[#allocation3 + $0x81]]
          %s1037 = scalar_lea.vmem [#allocation7], %s1036
          %v1038 = vld [vmem:[%s1037] sm:$0x1]
          %v1039 = vld [vmem:[%s2 + $0x1] sm:$0x1]
          %v1040 = vadd.f32 %v1038, %v1039
          %1041 = vst [vmem:[%s1034 + $0x1] sm:$0x1] %v1040
          %s1042 = sld [smem:[#allocation3 + $0x82]]
          %s1043 = scalar_lea.vmem [#allocation7], %s1042
          %v1044 = vld [vmem:[%s1043] sm:$0x1]
          %v1045 = vld [vmem:[%s2 + $0x2] sm:$0x1]
          %v1046 = vadd.f32 %v1044, %v1045
          %1047 = vst [vmem:[%s1034 + $0x2] sm:$0x1] %v1046
          %s1048 = sld [smem:[#allocation3 + $0x83]]
          %s1049 = scalar_lea.vmem [#allocation7], %s1048
          %v1050 = vld [vmem:[%s1049] sm:$0x1]
          %v1051 = vld [vmem:[%s2 + $0x3] sm:$0x1]
          %v1052 = vadd.f32 %v1050, %v1051
          %1053 = vst [vmem:[%s1034 + $0x3] sm:$0x1] %v1052
          %s1054 = sld [smem:[#allocation3 + $0x84]]
          %s1055 = scalar_lea.vmem [#allocation7], %s1054
          %v1056 = vld [vmem:[%s1055] sm:$0x1]
          %v1057 = vld [vmem:[%s2 + $0x4] sm:$0x1]
          %v1058 = vadd.f32 %v1056, %v1057
          %1059 = vst [vmem:[%s1034 + $0x4] sm:$0x1] %v1058
          %s1060 = sld [smem:[#allocation3 + $0x85]]
          %s1061 = scalar_lea.vmem [#allocation7], %s1060
          %v1062 = vld [vmem:[%s1061] sm:$0x1]
          %v1063 = vld [vmem:[%s2 + $0x5] sm:$0x1]
          %v1064 = vadd.f32 %v1062, %v1063
          %1065 = vst [vmem:[%s1034 + $0x5] sm:$0x1] %v1064
          %s1066 = sld [smem:[#allocation3 + $0x86]]
          %s1067 = scalar_lea.vmem [#allocation7], %s1066
          %v1068 = vld [vmem:[%s1067] sm:$0x1]
          %v1069 = vld [vmem:[%s2 + $0x6] sm:$0x1]
          %v1070 = vadd.f32 %v1068, %v1069
          %1071 = vst [vmem:[%s1034 + $0x6] sm:$0x1] %v1070
          %s1072 = sld [smem:[#allocation3 + $0x87]]
          %s1073 = scalar_lea.vmem [#allocation7], %s1072
          %v1074 = vld [vmem:[%s1073] sm:$0x1]
          %v1075 = vld [vmem:[%s2 + $0x7] sm:$0x1]
          %v1076 = vadd.f32 %v1074, %v1075
          %1077 = vst [vmem:[%s1034 + $0x7] sm:$0x1] %v1076
        $region148: #{gpt_forward.1} parent=87 // pred_fallthru
          _
        %v1078 = vld [vmem:[#allocation2] sm:$0xff]
        %v1079 = vld [vmem:[#allocation2 + $0x8] sm:$0xff]
        %v1080 = vlaneseq
        %v1081 = vand.u32 %v1080, 127
        %vm1082 = vcmp.lt.s32.totalorder %v1081, 48
        %v1083 = vsel %vm1082, 1, 0
        %v1084 = vcvt.s32.f32 %v1083
        %v1085 = vlaneseq
        %v1086 = vshrl.u32 %v1085, 7
        %vm1087 = vcmp.le.s32.totalorder %v1081, %v1086
        %v1088 = vsel %vm1087, 0.0, -1e+30
        %1089 = vadd.xlane.f32.xlu0 %v1078
        %v1090 = vpop.xlane.xlu0 %1089
        %1091 = vadd.xlane.f32.xlu0 %v1079
        %v1092 = vpop.xlane.xlu0 %1091
        %v1093 = vmul.f32 %v1090, 0.020833334
        %v1094 = vmul.f32 %v1092, 0.020833334
        %v1095 = vsub.f32 %v1078, %v1093
        %v1096 = vsub.f32 %v1079, %v1094
        %v1097 = vmul.f32 %v1095, %v1095
        %v1098 = vmul.f32 %v1096, %v1096
        %v1099 = vmul.f32 %v1097, %v1084
        %v1100 = vmul.f32 %v1098, %v1084
        %1101 = vadd.xlane.f32.xlu0 %v1099
        %v1102 = vpop.xlane.xlu0 %1101
        %1103 = vadd.xlane.f32.xlu0 %v1100
        %v1104 = vpop.xlane.xlu0 %1103
        %v1105 = vmul.f32 %v1102, 0.020833334
        %v1106 = vmul.f32 %v1104, 0.020833334
        %v1107 = vadd.f32 %v1105, 1e-05
        %v1108 = vadd.f32 %v1106, 1e-05
        %v1109 = vrsqrt.pop %v1107
        %v1110 = vmul.f32 %v1109, %v1107
        %v1111 = vmul.f32 %v1110, %v1109
        %v1112 = vmul.f32 0.5, %v1111
        %v1113 = vsub.f32 1.5, %v1112
        %v1114 = vmul.f32 %v1109, %v1113
        %vm1115 = vweird.f32 %v1107
        %vm1116 = vweird.f32 %v1109
        %vm1117 = vmor %vm1115, %vm1116
        %v1118 = vsel %vm1117, %v1109, %v1114
        %v1119 = vrsqrt.pop %v1108
        %v1120 = vmul.f32 %v1119, %v1108
        %v1121 = vmul.f32 %v1120, %v1119
        %v1122 = vmul.f32 0.5, %v1121
        %v1123 = vsub.f32 1.5, %v1122
        %v1124 = vmul.f32 %v1119, %v1123
        %vm1125 = vweird.f32 %v1108
        %vm1126 = vweird.f32 %v1119
        %vm1127 = vmor %vm1125, %vm1126
        %v1128 = vsel %vm1127, %v1119, %v1124
        %v1129 = vmul.f32 %v1095, %v1118
        %v1130 = vmul.f32 %v1096, %v1128
        %v1131 = vld [vmem:[%s972] sm:$0x1]
        %v1133 = vperm.slane %v1131, 0
        %v1135 = vmul.f32 %v1129, %v1133
        %v1136 = vmul.f32 %v1130, %v1133
        %v1137 = vld [vmem:[%s778] sm:$0x1]
        %v1139 = vperm.slane %v1137, 0
        %v1141 = vadd.f32 %v1135, %v1139
        %v1142 = vadd.f32 %v1136, %v1139
        %v1143 = vld [vmem:[%s788] sm:$0xff]
        %v1144 = vld [vmem:[%s788 + $0x8] sm:$0xff]
        %v1145 = vld [vmem:[%s788 + $0x10] sm:$0xff]
        %v1146 = vld [vmem:[%s788 + $0x18] sm:$0xff]
        %v1147 = vld [vmem:[%s788 + $0x20] sm:$0xff]
        %v1148 = vld [vmem:[%s788 + $0x28] sm:$0xff]
        %v1149 = vld [vmem:[%s788 + $0x30] sm:$0xff]
        %v1150 = vld [vmem:[%s788 + $0x38] sm:$0xff]
        %v1151 = vld [vmem:[%s788 + $0x40] sm:$0xff]
        %v1152 = vld [vmem:[%s788 + $0x48] sm:$0xff]
        %v1153 = vld [vmem:[%s788 + $0x50] sm:$0xff]
        %v1154 = vld [vmem:[%s788 + $0x58] sm:$0xff]
        %v1155 = vld [vmem:[%s788 + $0x60] sm:$0xff]
        %v1156 = vld [vmem:[%s788 + $0x68] sm:$0xff]
        %v1157 = vld [vmem:[%s788 + $0x70] sm:$0xff]
        %v1158 = vld [vmem:[%s788 + $0x78] sm:$0xff]
        %v1159 = vpack.c.bf16 %v1142, %v1141
        %v1176 = vunpack.c.l.b16 %v1143
        %v1177 = vunpack.c.h.b16 %v1143
        %v1178 = vunpack.c.l.b16 %v1144
        %v1179 = vunpack.c.h.b16 %v1144
        %v1180 = vunpack.c.l.b16 %v1145
        %v1181 = vunpack.c.h.b16 %v1145
        %v1182 = vunpack.c.l.b16 %v1146
        %v1183 = vunpack.c.h.b16 %v1146
        %v1184 = vunpack.c.l.b16 %v1147
        %v1185 = vunpack.c.h.b16 %v1147
        %v1186 = vunpack.c.l.b16 %v1148
        %v1187 = vunpack.c.h.b16 %v1148
        %v1188 = vunpack.c.l.b16 %v1149
        %v1189 = vunpack.c.h.b16 %v1149
        %v1190 = vunpack.c.l.b16 %v1150
        %v1191 = vunpack.c.h.b16 %v1150
        %v1192 = vunpack.c.l.b16 %v1151
        %v1193 = vunpack.c.h.b16 %v1151
        %v1194 = vunpack.c.l.b16 %v1152
        %v1195 = vunpack.c.h.b16 %v1152
        %v1196 = vunpack.c.l.b16 %v1153
        %v1197 = vunpack.c.h.b16 %v1153
        %v1198 = vunpack.c.l.b16 %v1154
        %v1199 = vunpack.c.h.b16 %v1154
        %v1200 = vunpack.c.l.b16 %v1155
        %v1201 = vunpack.c.h.b16 %v1155
        %v1202 = vunpack.c.l.b16 %v1156
        %v1203 = vunpack.c.h.b16 %v1156
        %v1204 = vunpack.c.l.b16 %v1157
        %v1205 = vunpack.c.h.b16 %v1157
        %v1206 = vunpack.c.l.b16 %v1158
        %v1207 = vunpack.c.h.b16 %v1158
        %v1208 = vpack.c.b16 %v1178, %v1176
        %v1209 = vpack.c.b16 %v1179, %v1177
        %v1210 = vpack.c.b16 %v1182, %v1180
        %v1211 = vpack.c.b16 %v1183, %v1181
        %v1212 = vpack.c.b16 %v1186, %v1184
        %v1213 = vpack.c.b16 %v1187, %v1185
        %v1214 = vpack.c.b16 %v1190, %v1188
        %v1215 = vpack.c.b16 %v1191, %v1189
        %v1216 = vpack.c.b16 %v1194, %v1192
        %v1217 = vpack.c.b16 %v1195, %v1193
        %v1218 = vpack.c.b16 %v1198, %v1196
        %v1219 = vpack.c.b16 %v1199, %v1197
        %v1220 = vpack.c.b16 %v1202, %v1200
        %v1221 = vpack.c.b16 %v1203, %v1201
        %v1222 = vpack.c.b16 %v1206, %v1204
        %v1223 = vpack.c.b16 %v1207, %v1205
        %1240 = vmatpush.bf16.msra.mxu0 %v1222
        %1241 = vmatpush.bf16.msra.mxu0 %v1220
        %1242 = vmatpush.bf16.msra.mxu0 %v1218
        %1243 = vmatpush.bf16.msra.mxu0 %v1216
        %1244 = vmatpush.bf16.msra.mxu0 %v1214
        %1245 = vmatpush.bf16.msra.mxu0 %v1212
        %1246 = vmatpush.bf16.msra.mxu0 %v1210
        %1247 = vmatpush.bf16.msra.mxu0 %v1208
        %1248 = vmatmul.bf16.gmra.mxu0 %v1159
        %v1249 = vpop.f32.mrf.mxu0
        %v1250 = vadd.f32 0.0, %v1249
        %v1251 = vpop.f32.mrf.mxu0
        %v1252 = vadd.f32 0.0, %v1251
        %1253 = vdwg.mxu0
        %1254 = vmatpush.bf16.msra.mxu0 %v1223
        %1255 = vmatpush.bf16.msra.mxu0 %v1221
        %1256 = vmatpush.bf16.msra.mxu0 %v1219
        %1257 = vmatpush.bf16.msra.mxu0 %v1217
        %1258 = vmatpush.bf16.msra.mxu0 %v1215
        %1259 = vmatpush.bf16.msra.mxu0 %v1213
        %1260 = vmatpush.bf16.msra.mxu0 %v1211
        %1261 = vmatpush.bf16.msra.mxu0 %v1209
        %1262 = vmatmul.bf16.gmra.mxu0 %v1159
        %v1263 = vpop.f32.mrf.mxu0
        %v1264 = vadd.f32 0.0, %v1263
        %v1265 = vpop.f32.mrf.mxu0
        %v1266 = vadd.f32 0.0, %v1265
        %1267 = vdwg.mxu0
        %v1268 = vld [vmem:[%s798] sm:$0x3]
        %v1270 = vperm.slane %v1268, 0
        %v1271 = vperm.slane %v1268, 1
        %v1274 = vadd.f32 %v1250, %v1270
        %v1275 = vadd.f32 %v1264, %v1271
        %v1276 = vadd.f32 %v1252, %v1270
        %v1277 = vadd.f32 %v1266, %v1271
        %v1278 = vpack.c.bf16 %v1275, %v1274
        %v1279 = vpack.c.bf16 %v1277, %v1276
        %1282 = vrot.lane.b32.xlu0 %v1278, 112
        %v1283 = vpop.permute.xlu0 %1282
        %1284 = vrot.lane.b32.xlu0 %v1279, 112
        %v1285 = vpop.permute.xlu0 %1284
        %1286 = vrot.lane.b32.xlu0 %v1278, 96
        %v1287 = vpop.permute.xlu0 %1286
        %1288 = vrot.lane.b32.xlu0 %v1279, 96
        %v1289 = vpop.permute.xlu0 %1288
        %v1290 = vrot.slane %v1287, 4
        %v1291 = vrot.slane %v1289, 4
        %vm1292 = vcmask 785408
        %v1293 = vsel %vm1292, %v1287, %v1290
        %v1294 = vsel %vm1292, %v1289, %v1291
        %v1295 = vunpack.c.l.b16 %v1278
        %v1296 = vpack.c.b16 %v1295, %v1295
        %1297 = vrot.lane.b32.xlu0 %v1296, 80
        %v1298 = vpop.permute.xlu0 %1297
        %vm1299 = vcmask 130048
        %v1301 = vsel %vm1299, %v1278, 0
        %v1304 = vsel %vm1299, %v1298, 0
        %1306 = vmatpush.bf16.xpose.msra.mxu0 0
        %1307 = vmatpush.bf16.xpose.msra.mxu0 0
        %1308 = vmatpush.bf16.xpose.msra.mxu0 0
        %1309 = vmatpush.bf16.xpose.msra.mxu0 0
        %1310 = vmatpush.bf16.xpose.msra.mxu0 0
        %1311 = vmatpush.bf16.xpose.msra.mxu0 0
        %1312 = vmatpush.bf16.xpose.msra.mxu0 0
        %1313 = vmatpush.bf16.xpose.msra.mxu0 %v1304
        %1314 = vmatmul.bf16.gmra.mxu0 %v1301
        %v1315 = vpop.f32.mrf.mxu0
        %v1316 = vadd.f32 0.0, %v1315
        %v1317 = vpop.f32.mrf.mxu0
        %1318 = vdwg.mxu0
        %v1319 = vunpack.c.l.b16 %v1279
        %v1320 = vpack.c.b16 %v1319, %v1319
        %1321 = vrot.lane.b32.xlu0 %v1320, 80
        %v1322 = vpop.permute.xlu0 %1321
        %v1324 = vsel %vm1299, %v1279, 0
        %v1327 = vsel %vm1299, %v1322, 0
        %1329 = vmatpush.bf16.xpose.msra.mxu0 0
        %1330 = vmatpush.bf16.xpose.msra.mxu0 0
        %1331 = vmatpush.bf16.xpose.msra.mxu0 0
        %1332 = vmatpush.bf16.xpose.msra.mxu0 0
        %1333 = vmatpush.bf16.xpose.msra.mxu0 0
        %1334 = vmatpush.bf16.xpose.msra.mxu0 0
        %1335 = vmatpush.bf16.xpose.msra.mxu0 0
        %1336 = vmatpush.bf16.xpose.msra.mxu0 %v1327
        %1337 = vmatmul.bf16.gmra.mxu0 %v1324
        %v1338 = vpop.f32.mrf.mxu0
        %v1339 = vadd.f32 0.0, %v1338
        %v1340 = vpop.f32.mrf.mxu0
        %1341 = vdwg.mxu0
        %v1342 = vunpack.c.l.b16 %v1283
        %v1343 = vpack.c.b16 %v1342, %v1342
        %1344 = vrot.lane.b32.xlu0 %v1343, 80
        %v1345 = vpop.permute.xlu0 %1344
        %v1347 = vsel %vm1299, %v1283, 0
        %v1350 = vsel %vm1299, %v1345, 0
        %1352 = vmatpush.bf16.xpose.msra.mxu0 0
        %1353 = vmatpush.bf16.xpose.msra.mxu0 0
        %1354 = vmatpush.bf16.xpose.msra.mxu0 0
        %1355 = vmatpush.bf16.xpose.msra.mxu0 0
        %1356 = vmatpush.bf16.xpose.msra.mxu0 0
        %1357 = vmatpush.bf16.xpose.msra.mxu0 0
        %1358 = vmatpush.bf16.xpose.msra.mxu0 0
        %1359 = vmatpush.bf16.xpose.msra.mxu0 %v1350
        %1360 = vmatmul.bf16.gmra.mxu0 %v1347
        %v1361 = vpop.f32.mrf.mxu0
        %v1362 = vadd.f32 0.0, %v1361
        %v1363 = vpop.f32.mrf.mxu0
        %1364 = vdwg.mxu0
        %v1365 = vunpack.c.l.b16 %v1285
        %v1366 = vpack.c.b16 %v1365, %v1365
        %1367 = vrot.lane.b32.xlu0 %v1366, 80
        %v1368 = vpop.permute.xlu0 %1367
        %v1370 = vsel %vm1299, %v1285, 0
        %v1373 = vsel %vm1299, %v1368, 0
        %1375 = vmatpush.bf16.xpose.msra.mxu0 0
        %1376 = vmatpush.bf16.xpose.msra.mxu0 0
        %1377 = vmatpush.bf16.xpose.msra.mxu0 0
        %1378 = vmatpush.bf16.xpose.msra.mxu0 0
        %1379 = vmatpush.bf16.xpose.msra.mxu0 0
        %1380 = vmatpush.bf16.xpose.msra.mxu0 0
        %1381 = vmatpush.bf16.xpose.msra.mxu0 0
        %1382 = vmatpush.bf16.xpose.msra.mxu0 %v1373
        %1383 = vmatmul.bf16.gmra.mxu0 %v1370
        %v1384 = vpop.f32.mrf.mxu0
        %v1385 = vadd.f32 0.0, %v1384
        %v1386 = vpop.f32.mrf.mxu0
        %1387 = vdwg.mxu0
        %v1388 = vunpack.c.l.b16 %v1287
        %v1389 = vpack.c.b16 %v1388, %v1388
        %1390 = vrot.lane.b32.xlu0 %v1389, 80
        %v1391 = vpop.permute.xlu0 %1390
        %v1393 = vsel %vm1299, %v1287, 0
        %v1396 = vsel %vm1299, %v1391, 0
        %1398 = vmatpush.bf16.xpose.msra.mxu0 0
        %1399 = vmatpush.bf16.xpose.msra.mxu0 0
        %1400 = vmatpush.bf16.xpose.msra.mxu0 0
        %1401 = vmatpush.bf16.xpose.msra.mxu0 0
        %1402 = vmatpush.bf16.xpose.msra.mxu0 0
        %1403 = vmatpush.bf16.xpose.msra.mxu0 0
        %1404 = vmatpush.bf16.xpose.msra.mxu0 0
        %1405 = vmatpush.bf16.xpose.msra.mxu0 %v1396
        %1406 = vmatmul.bf16.gmra.mxu0 %v1393
        %v1407 = vpop.f32.mrf.mxu0
        %v1408 = vadd.f32 0.0, %v1407
        %v1409 = vpop.f32.mrf.mxu0
        %1410 = vdwg.mxu0
        %v1411 = vunpack.c.l.b16 %v1289
        %v1412 = vpack.c.b16 %v1411, %v1411
        %1413 = vrot.lane.b32.xlu0 %v1412, 80
        %v1414 = vpop.permute.xlu0 %1413
        %v1416 = vsel %vm1299, %v1289, 0
        %v1419 = vsel %vm1299, %v1414, 0
        %1421 = vmatpush.bf16.xpose.msra.mxu0 0
        %1422 = vmatpush.bf16.xpose.msra.mxu0 0
        %1423 = vmatpush.bf16.xpose.msra.mxu0 0
        %1424 = vmatpush.bf16.xpose.msra.mxu0 0
        %1425 = vmatpush.bf16.xpose.msra.mxu0 0
        %1426 = vmatpush.bf16.xpose.msra.mxu0 0
        %1427 = vmatpush.bf16.xpose.msra.mxu0 0
        %1428 = vmatpush.bf16.xpose.msra.mxu0 %v1419
        %1429 = vmatmul.bf16.gmra.mxu0 %v1416
        %v1430 = vpop.f32.mrf.mxu0
        %v1431 = vadd.f32 0.0, %v1430
        %v1432 = vpop.f32.mrf.mxu0
        %1433 = vdwg.mxu0
        %v1434 = vmul.f32 %v1316, 0.25
        %v1435 = vmul.f32 %v1339, 0.25
        %v1436 = vmul.f32 %v1362, 0.25
        %v1437 = vmul.f32 %v1385, 0.25
        %v1438 = vmul.f32 %v1408, 0.25
        %v1439 = vmul.f32 %v1431, 0.25
        %v1440 = vadd.f32 %v1434, %v1088
        %v1441 = vadd.f32 %v1435, %v1088
        %v1442 = vadd.f32 %v1436, %v1088
        %v1443 = vadd.f32 %v1437, %v1088
        %v1444 = vadd.f32 %v1438, %v1088
        %v1445 = vadd.f32 %v1439, %v1088
        %vm1446 = vcmask 64512
        %v1447 = vsel %vm1446, %v1440, -inf
        %1448 = vmax.xlane.f32.xlu0 %v1447
        %v1449 = vpop.xlane.xlu0 %1448
        %v1450 = vsel %vm1446, %v1441, -inf
        %1451 = vmax.xlane.f32.xlu0 %v1450
        %v1452 = vpop.xlane.xlu0 %1451
        %v1453 = vsel %vm1446, %v1442, -inf
        %1454 = vmax.xlane.f32.xlu0 %v1453
        %v1455 = vpop.xlane.xlu0 %1454
        %v1456 = vsel %vm1446, %v1443, -inf
        %1457 = vmax.xlane.f32.xlu0 %v1456
        %v1458 = vpop.xlane.xlu0 %1457
        %v1459 = vsel %vm1446, %v1444, -inf
        %1460 = vmax.xlane.f32.xlu0 %v1459
        %v1461 = vpop.xlane.xlu0 %1460
        %v1462 = vsel %vm1446, %v1445, -inf
        %1463 = vmax.xlane.f32.xlu0 %v1462
        %v1464 = vpop.xlane.xlu0 %1463
        %v1465 = vsub.f32 %v1440, %v1449
        %v1466 = vsub.f32 %v1441, %v1452
        %v1467 = vsub.f32 %v1442, %v1455
        %v1468 = vsub.f32 %v1443, %v1458
        %v1469 = vsub.f32 %v1444, %v1461
        %v1470 = vsub.f32 %v1445, %v1464
        %v1471 = vmul.f32 %v1465, 1.442695
        %v1472 = vpow.pop %v1471
        %v1473 = vmul.f32 %v1466, 1.442695
        %v1474 = vpow.pop %v1473
        %v1475 = vmul.f32 %v1467, 1.442695
        %v1476 = vpow.pop %v1475
        %v1477 = vmul.f32 %v1468, 1.442695
        %v1478 = vpow.pop %v1477
        %v1479 = vmul.f32 %v1469, 1.442695
        %v1480 = vpow.pop %v1479
        %v1481 = vmul.f32 %v1470, 1.442695
        %v1482 = vpow.pop %v1481
        %v1483 = vsel %vm1446, %v1472, 0.0
        %1484 = vadd.xlane.f32.xlu0 %v1483
        %v1485 = vpop.xlane.xlu0 %1484
        %v1486 = vsel %vm1446, %v1474, 0.0
        %1487 = vadd.xlane.f32.xlu0 %v1486
        %v1488 = vpop.xlane.xlu0 %1487
        %v1489 = vsel %vm1446, %v1476, 0.0
        %1490 = vadd.xlane.f32.xlu0 %v1489
        %v1491 = vpop.xlane.xlu0 %1490
        %v1492 = vsel %vm1446, %v1478, 0.0
        %1493 = vadd.xlane.f32.xlu0 %v1492
        %v1494 = vpop.xlane.xlu0 %1493
        %v1495 = vsel %vm1446, %v1480, 0.0
        %1496 = vadd.xlane.f32.xlu0 %v1495
        %v1497 = vpop.xlane.xlu0 %1496
        %v1498 = vsel %vm1446, %v1482, 0.0
        %1499 = vadd.xlane.f32.xlu0 %v1498
        %v1500 = vpop.xlane.xlu0 %1499
        %v1501 = vrcp.pop %v1485
        %v1502 = vrcp.pop %v1488
        %v1503 = vrcp.pop %v1491
        %v1504 = vrcp.pop %v1494
        %v1505 = vrcp.pop %v1497
        %v1506 = vrcp.pop %v1500
        %v1507 = vmul.f32 %v1472, %v1501
        %v1508 = vmul.f32 %v1474, %v1502
        %v1509 = vmul.f32 %v1476, %v1503
        %v1510 = vmul.f32 %v1478, %v1504
        %v1511 = vmul.f32 %v1480, %v1505
        %v1512 = vmul.f32 %v1482, %v1506
        %v1513 = vpack.c.bf16 %v1507, %v1507
        %v1514 = vpack.c.bf16 %v1508, %v1508
        %v1515 = vpack.c.bf16 %v1509, %v1509
        %v1516 = vpack.c.bf16 %v1510, %v1510
        %v1517 = vpack.c.bf16 %v1511, %v1511
        %v1518 = vpack.c.bf16 %v1512, %v1512
        %1519 = vrot.lane.b32.xlu0 %v1296, 32
        %v1520 = vpop.permute.xlu0 %1519
        %v1522 = vsel %vm1446, %v1513, 0
        %vm1524 = vcmask 1043456
        %v1526 = vsel %vm1524, %v1520, 0
        %1528 = vmatpush.bf16.msra.mxu0 0
        %1529 = vmatpush.bf16.msra.mxu0 0
        %1530 = vmatpush.bf16.msra.mxu0 0
        %1531 = vmatpush.bf16.msra.mxu0 0
        %1532 = vmatpush.bf16.msra.mxu0 0
        %1533 = vmatpush.bf16.msra.mxu0 0
        %1534 = vmatpush.bf16.msra.mxu0 0
        %1535 = vmatpush.bf16.msra.mxu0 %v1526
        %1536 = vmatmul.bf16.gmra.mxu0 %v1522
        %v1537 = vpop.f32.mrf.mxu0
        %v1538 = vadd.f32 0.0, %v1537
        %v1539 = vpop.f32.mrf.mxu0
        %1540 = vdwg.mxu0
        %1541 = vrot.lane.b32.xlu0 %v1320, 32
        %v1542 = vpop.permute.xlu0 %1541
        %v1544 = vsel %vm1446, %v1514, 0
        %v1547 = vsel %vm1524, %v1542, 0
        %1549 = vmatpush.bf16.msra.mxu0 0
        %1550 = vmatpush.bf16.msra.mxu0 0
        %1551 = vmatpush.bf16.msra.mxu0 0
        %1552 = vmatpush.bf16.msra.mxu0 0
        %1553 = vmatpush.bf16.msra.mxu0 0
        %1554 = vmatpush.bf16.msra.mxu0 0
        %1555 = vmatpush.bf16.msra.mxu0 0
        %1556 = vmatpush.bf16.msra.mxu0 %v1547
        %1557 = vmatmul.bf16.gmra.mxu0 %v1544
        %v1558 = vpop.f32.mrf.mxu0
        %v1559 = vadd.f32 0.0, %v1558
        %v1560 = vpop.f32.mrf.mxu0
        %1561 = vdwg.mxu0
        %1562 = vrot.lane.b32.xlu0 %v1343, 32
        %v1563 = vpop.permute.xlu0 %1562
        %v1565 = vsel %vm1446, %v1515, 0
        %v1568 = vsel %vm1524, %v1563, 0
        %1570 = vmatpush.bf16.msra.mxu0 0
        %1571 = vmatpush.bf16.msra.mxu0 0
        %1572 = vmatpush.bf16.msra.mxu0 0
        %1573 = vmatpush.bf16.msra.mxu0 0
        %1574 = vmatpush.bf16.msra.mxu0 0
        %1575 = vmatpush.bf16.msra.mxu0 0
        %1576 = vmatpush.bf16.msra.mxu0 0
        %1577 = vmatpush.bf16.msra.mxu0 %v1568
        %1578 = vmatmul.bf16.gmra.mxu0 %v1565
        %v1579 = vpop.f32.mrf.mxu0
        %v1580 = vadd.f32 0.0, %v1579
        %v1581 = vpop.f32.mrf.mxu0
        %1582 = vdwg.mxu0
        %1583 = vrot.lane.b32.xlu0 %v1366, 32
        %v1584 = vpop.permute.xlu0 %1583
        %v1586 = vsel %vm1446, %v1516, 0
        %v1589 = vsel %vm1524, %v1584, 0
        %1591 = vmatpush.bf16.msra.mxu0 0
        %1592 = vmatpush.bf16.msra.mxu0 0
        %1593 = vmatpush.bf16.msra.mxu0 0
        %1594 = vmatpush.bf16.msra.mxu0 0
        %1595 = vmatpush.bf16.msra.mxu0 0
        %1596 = vmatpush.bf16.msra.mxu0 0
        %1597 = vmatpush.bf16.msra.mxu0 0
        %1598 = vmatpush.bf16.msra.mxu0 %v1589
        %1599 = vmatmul.bf16.gmra.mxu0 %v1586
        %v1600 = vpop.f32.mrf.mxu0
        %v1601 = vadd.f32 0.0, %v1600
        %v1602 = vpop.f32.mrf.mxu0
        %1603 = vdwg.mxu0
        %v1604 = vunpack.c.l.b16 %v1293
        %v1605 = vpack.c.b16 %v1604, %v1604
        %1606 = vrot.lane.b32.xlu0 %v1605, 32
        %v1607 = vpop.permute.xlu0 %1606
        %v1609 = vsel %vm1446, %v1517, 0
        %v1612 = vsel %vm1524, %v1607, 0
        %1614 = vmatpush.bf16.msra.mxu0 0
        %1615 = vmatpush.bf16.msra.mxu0 0
        %1616 = vmatpush.bf16.msra.mxu0 0
        %1617 = vmatpush.bf16.msra.mxu0 0
        %1618 = vmatpush.bf16.msra.mxu0 0
        %1619 = vmatpush.bf16.msra.mxu0 0
        %1620 = vmatpush.bf16.msra.mxu0 0
        %1621 = vmatpush.bf16.msra.mxu0 %v1612
        %1622 = vmatmul.bf16.gmra.mxu0 %v1609
        %v1623 = vpop.f32.mrf.mxu0
        %v1624 = vadd.f32 0.0, %v1623
        %v1625 = vpop.f32.mrf.mxu0
        %1626 = vdwg.mxu0
        %v1627 = vunpack.c.l.b16 %v1294
        %v1628 = vpack.c.b16 %v1627, %v1627
        %1629 = vrot.lane.b32.xlu0 %v1628, 32
        %v1630 = vpop.permute.xlu0 %1629
        %v1632 = vsel %vm1446, %v1518, 0
        %v1635 = vsel %vm1524, %v1630, 0
        %1637 = vmatpush.bf16.msra.mxu0 0
        %1638 = vmatpush.bf16.msra.mxu0 0
        %1639 = vmatpush.bf16.msra.mxu0 0
        %1640 = vmatpush.bf16.msra.mxu0 0
        %1641 = vmatpush.bf16.msra.mxu0 0
        %1642 = vmatpush.bf16.msra.mxu0 0
        %1643 = vmatpush.bf16.msra.mxu0 0
        %1644 = vmatpush.bf16.msra.mxu0 %v1635
        %1645 = vmatmul.bf16.gmra.mxu0 %v1632
        %v1646 = vpop.f32.mrf.mxu0
        %v1647 = vadd.f32 0.0, %v1646
        %v1648 = vpop.f32.mrf.mxu0
        %1649 = vdwg.mxu0
        %1652 = vrot.lane.b32.xlu0 %v1580, 16
        %v1653 = vpop.permute.xlu0 %1652
        %1654 = vrot.lane.b32.xlu0 %v1601, 16
        %v1655 = vpop.permute.xlu0 %1654
        %1660 = vrot.lane.b32.xlu0 %v1624, 32
        %v1661 = vpop.permute.xlu0 %1660
        %1662 = vrot.lane.b32.xlu0 %v1647, 32
        %v1663 = vpop.permute.xlu0 %1662
        %v1666 = vsel %vm1299, %v1538, %v1653
        %v1667 = vsel %vm1299, %v1559, %v1655
        %vm1668 = vcmask 261120
        %v1669 = vsel %vm1668, %v1666, %v1661
        %v1670 = vsel %vm1668, %v1667, %v1663
        %v1671 = vld [vmem:[%s808] sm:$0xf]
        %v1672 = vld [vmem:[%s808 + $0x4] sm:$0xf]
        %v1673 = vld [vmem:[%s808 + $0x8] sm:$0xf]
        %v1674 = vld [vmem:[%s808 + $0xc] sm:$0xf]
        %v1675 = vld [vmem:[%s808 + $0x10] sm:$0xf]
        %v1676 = vld [vmem:[%s808 + $0x14] sm:$0xf]
        %v1677 = vpack.c.bf16 %v1670, %v1669
        %v1684 = vunpack.c.l.b16 %v1671
        %v1685 = vunpack.c.l.b16 %v1672
        %v1686 = vunpack.c.l.b16 %v1673
        %v1687 = vunpack.c.l.b16 %v1674
        %v1688 = vunpack.c.l.b16 %v1675
        %v1689 = vunpack.c.l.b16 %v1676
        %v1690 = vpack.c.b16 %v1685, %v1684
        %v1691 = vpack.c.b16 %v1687, %v1686
        %v1692 = vpack.c.b16 %v1689, %v1688
        %vm1696 = vcmask 392192
        %v1698 = vsel %vm1696, %v1677, 0
        %1700 = vmatpush.bf16.msra.mxu0 0
        %1701 = vmatpush.bf16.msra.mxu0 0
        %1702 = vmatpush.bf16.msra.mxu0 0
        %1703 = vmatpush.bf16.msra.mxu0 0
        %1704 = vmatpush.bf16.msra.mxu0 0
        %1705 = vmatpush.bf16.msra.mxu0 %v1692
        %1706 = vmatpush.bf16.msra.mxu0 %v1691
        %1707 = vmatpush.bf16.msra.mxu0 %v1690
        %1708 = vmatmul.bf16.gmra.mxu0 %v1698
        %v1709 = vpop.f32.mrf.mxu0
        %v1710 = vadd.f32 0.0, %v1709
        %v1711 = vpop.f32.mrf.mxu0
        %v1712 = vadd.f32 0.0, %v1711
        %1713 = vdwg.mxu0
        %v1714 = vadd.f32 %v1078, %v1710
        %v1715 = vadd.f32 %v1079, %v1712
        %v1716 = vld [vmem:[%s817] sm:$0x1]
        %v1718 = vperm.slane %v1716, 0
        %v1720 = vadd.f32 %v1714, %v1718
        %v1721 = vadd.f32 %v1715, %v1718
        %1722 = vadd.xlane.f32.xlu0 %v1720
        %v1723 = vpop.xlane.xlu0 %1722
        %1724 = vadd.xlane.f32.xlu0 %v1721
        %v1725 = vpop.xlane.xlu0 %1724
        %v1726 = vmul.f32 %v1723, 0.020833334
        %v1727 = vmul.f32 %v1725, 0.020833334
        %v1728 = vsub.f32 %v1720, %v1726
        %v1729 = vsub.f32 %v1721, %v1727
        %v1730 = vmul.f32 %v1728, %v1728
        %v1731 = vmul.f32 %v1729, %v1729
        %v1732 = vmul.f32 %v1730, %v1084
        %v1733 = vmul.f32 %v1731, %v1084
        %1734 = vadd.xlane.f32.xlu0 %v1732
        %v1735 = vpop.xlane.xlu0 %1734
        %1736 = vadd.xlane.f32.xlu0 %v1733
        %v1737 = vpop.xlane.xlu0 %1736
        %v1738 = vmul.f32 %v1735, 0.020833334
        %v1739 = vmul.f32 %v1737, 0.020833334
        %v1740 = vadd.f32 %v1738, 1e-05
        %v1741 = vadd.f32 %v1739, 1e-05
        %v1742 = vrsqrt.pop %v1740
        %v1743 = vmul.f32 %v1742, %v1740
        %v1744 = vmul.f32 %v1743, %v1742
        %v1745 = vmul.f32 0.5, %v1744
        %v1746 = vsub.f32 1.5, %v1745
        %v1747 = vmul.f32 %v1742, %v1746
        %vm1748 = vweird.f32 %v1740
        %vm1749 = vweird.f32 %v1742
        %vm1750 = vmor %vm1748, %vm1749
        %v1751 = vsel %vm1750, %v1742, %v1747
        %v1752 = vrsqrt.pop %v1741
        %v1753 = vmul.f32 %v1752, %v1741
        %v1754 = vmul.f32 %v1753, %v1752
        %v1755 = vmul.f32 0.5, %v1754
        %v1756 = vsub.f32 1.5, %v1755
        %v1757 = vmul.f32 %v1752, %v1756
        %vm1758 = vweird.f32 %v1741
        %vm1759 = vweird.f32 %v1752
        %vm1760 = vmor %vm1758, %vm1759
        %v1761 = vsel %vm1760, %v1752, %v1757
        %v1762 = vmul.f32 %v1728, %v1751
        %v1763 = vmul.f32 %v1729, %v1761
        %v1764 = vld [vmem:[%s975] sm:$0x1]
        %v1766 = vperm.slane %v1764, 0
        %v1768 = vmul.f32 %v1762, %v1766
        %v1769 = vmul.f32 %v1763, %v1766
        %v1770 = vld [vmem:[%s826] sm:$0x1]
        %v1772 = vperm.slane %v1770, 0
        %v1774 = vadd.f32 %v1768, %v1772
        %v1775 = vadd.f32 %v1769, %v1772
        %v1776 = vld [vmem:[%s836] sm:$0xff]
        %v1777 = vld [vmem:[%s836 + $0x8] sm:$0xff]
        %v1778 = vld [vmem:[%s836 + $0x10] sm:$0xff]
        %v1779 = vld [vmem:[%s836 + $0x18] sm:$0xff]
        %v1780 = vld [vmem:[%s836 + $0x20] sm:$0xff]
        %v1781 = vld [vmem:[%s836 + $0x28] sm:$0xff]
        %v1782 = vld [vmem:[%s836 + $0x30] sm:$0xff]
        %v1783 = vld [vmem:[%s836 + $0x38] sm:$0xff]
        %v1784 = vld [vmem:[%s836 + $0x40] sm:$0xff]
        %v1785 = vld [vmem:[%s836 + $0x48] sm:$0xff]
        %v1786 = vld [vmem:[%s836 + $0x50] sm:$0xff]
        %v1787 = vld [vmem:[%s836 + $0x58] sm:$0xff]
        %v1788 = vld [vmem:[%s836 + $0x60] sm:$0xff]
        %v1789 = vld [vmem:[%s836 + $0x68] sm:$0xff]
        %v1790 = vld [vmem:[%s836 + $0x70] sm:$0xff]
        %v1791 = vld [vmem:[%s836 + $0x78] sm:$0xff]
        %v1792 = vpack.c.bf16 %v1775, %v1774
        %v1809 = vunpack.c.l.b16 %v1776
        %v1810 = vunpack.c.h.b16 %v1776
        %v1811 = vunpack.c.l.b16 %v1777
        %v1812 = vunpack.c.h.b16 %v1777
        %v1813 = vunpack.c.l.b16 %v1778
        %v1814 = vunpack.c.h.b16 %v1778
        %v1815 = vunpack.c.l.b16 %v1779
        %v1816 = vunpack.c.h.b16 %v1779
        %v1817 = vunpack.c.l.b16 %v1780
        %v1818 = vunpack.c.h.b16 %v1780
        %v1819 = vunpack.c.l.b16 %v1781
        %v1820 = vunpack.c.h.b16 %v1781
        %v1821 = vunpack.c.l.b16 %v1782
        %v1822 = vunpack.c.h.b16 %v1782
        %v1823 = vunpack.c.l.b16 %v1783
        %v1824 = vunpack.c.h.b16 %v1783
        %v1825 = vunpack.c.l.b16 %v1784
        %v1826 = vunpack.c.h.b16 %v1784
        %v1827 = vunpack.c.l.b16 %v1785
        %v1828 = vunpack.c.h.b16 %v1785
        %v1829 = vunpack.c.l.b16 %v1786
        %v1830 = vunpack.c.h.b16 %v1786
        %v1831 = vunpack.c.l.b16 %v1787
        %v1832 = vunpack.c.h.b16 %v1787
        %v1833 = vunpack.c.l.b16 %v1788
        %v1834 = vunpack.c.h.b16 %v1788
        %v1835 = vunpack.c.l.b16 %v1789
        %v1836 = vunpack.c.h.b16 %v1789
        %v1837 = vunpack.c.l.b16 %v1790
        %v1838 = vunpack.c.h.b16 %v1790
        %v1839 = vunpack.c.l.b16 %v1791
        %v1840 = vunpack.c.h.b16 %v1791
        %v1841 = vpack.c.b16 %v1811, %v1809
        %v1842 = vpack.c.b16 %v1812, %v1810
        %v1843 = vpack.c.b16 %v1815, %v1813
        %v1844 = vpack.c.b16 %v1816, %v1814
        %v1845 = vpack.c.b16 %v1819, %v1817
        %v1846 = vpack.c.b16 %v1820, %v1818
        %v1847 = vpack.c.b16 %v1823, %v1821
        %v1848 = vpack.c.b16 %v1824, %v1822
        %v1849 = vpack.c.b16 %v1827, %v1825
        %v1850 = vpack.c.b16 %v1828, %v1826
        %v1851 = vpack.c.b16 %v1831, %v1829
        %v1852 = vpack.c.b16 %v1832, %v1830
        %v1853 = vpack.c.b16 %v1835, %v1833
        %v1854 = vpack.c.b16 %v1836, %v1834
        %v1855 = vpack.c.b16 %v1839, %v1837
        %v1856 = vpack.c.b16 %v1840, %v1838
        %1873 = vmatpush.bf16.msra.mxu0 %v1855
        %1874 = vmatpush.bf16.msra.mxu0 %v1853
        %1875 = vmatpush.bf16.msra.mxu0 %v1851
        %1876 = vmatpush.bf16.msra.mxu0 %v1849
        %1877 = vmatpush.bf16.msra.mxu0 %v1847
        %1878 = vmatpush.bf16.msra.mxu0 %v1845
        %1879 = vmatpush.bf16.msra.mxu0 %v1843
        %1880 = vmatpush.bf16.msra.mxu0 %v1841
        %1881 = vmatmul.bf16.gmra.mxu0 %v1792
        %v1882 = vpop.f32.mrf.mxu0
        %v1883 = vadd.f32 0.0, %v1882
        %v1884 = vpop.f32.mrf.mxu0
        %v1885 = vadd.f32 0.0, %v1884
        %1886 = vdwg.mxu0
        %1887 = vmatpush.bf16.msra.mxu0 %v1856
        %1888 = vmatpush.bf16.msra.mxu0 %v1854
        %1889 = vmatpush.bf16.msra.mxu0 %v1852
        %1890 = vmatpush.bf16.msra.mxu0 %v1850
        %1891 = vmatpush.bf16.msra.mxu0 %v1848
        %1892 = vmatpush.bf16.msra.mxu0 %v1846
        %1893 = vmatpush.bf16.msra.mxu0 %v1844
        %1894 = vmatpush.bf16.msra.mxu0 %v1842
        %1895 = vmatmul.bf16.gmra.mxu0 %v1792
        %v1896 = vpop.f32.mrf.mxu0
        %v1897 = vadd.f32 0.0, %v1896
        %v1898 = vpop.f32.mrf.mxu0
        %v1899 = vadd.f32 0.0, %v1898
        %1900 = vdwg.mxu0
        %v1901 = vld [vmem:[%s846] sm:$0x3]
        %v1903 = vperm.slane %v1901, 0
        %v1904 = vperm.slane %v1901, 1
        %v1907 = vadd.f32 %v1883, %v1903
        %v1908 = vadd.f32 %v1897, %v1904
        %v1909 = vadd.f32 %v1885, %v1903
        %v1910 = vadd.f32 %v1899, %v1904
        %v1911 = vmul.f32 %v1907, 0.5
        %v1912 = vmul.f32 %v1908, 0.5
        %v1913 = vmul.f32 %v1909, 0.5
        %v1914 = vmul.f32 %v1910, 0.5
        %v1915 = vmul.f32 %v1907, 0.044715
        %v1916 = vmul.f32 %v1908, 0.044715
        %v1917 = vmul.f32 %v1909, 0.044715
        %v1918 = vmul.f32 %v1910, 0.044715
        %v1919 = vmul.f32 %v1915, %v1907
        %v1920 = vmul.f32 %v1916, %v1908
        %v1921 = vmul.f32 %v1917, %v1909
        %v1922 = vmul.f32 %v1918, %v1910
        %v1923 = vmul.f32 %v1919, %v1907
        %v1924 = vmul.f32 %v1920, %v1908
        %v1925 = vmul.f32 %v1921, %v1909
        %v1926 = vmul.f32 %v1922, %v1910
        %v1927 = vadd.f32 %v1907, %v1923
        %v1928 = vadd.f32 %v1908, %v1924
        %v1929 = vadd.f32 %v1909, %v1925
        %v1930 = vadd.f32 %v1910, %v1926
        %v1931 = vmul.f32 %v1927, 0.7978846
        %v1932 = vmul.f32 %v1928, 0.7978846
        %v1933 = vmul.f32 %v1929, 0.7978846
        %v1934 = vmul.f32 %v1930, 0.7978846
        %v1935 = vtanh.pop %v1931
        %v1936 = vtanh.pop %v1932
        %v1937 = vtanh.pop %v1933
        %v1938 = vtanh.pop %v1934
        %v1939 = vadd.f32 %v1935, 1.0
        %v1940 = vadd.f32 %v1936, 1.0
        %v1941 = vadd.f32 %v1937, 1.0
        %v1942 = vadd.f32 %v1938, 1.0
        %v1943 = vmul.f32 %v1911, %v1939
        %v1944 = vmul.f32 %v1912, %v1940
        %v1945 = vmul.f32 %v1913, %v1941
        %v1946 = vmul.f32 %v1914, %v1942
        %v1947 = vld [vmem:[%s856] sm:$0xf]
        %v1948 = vld [vmem:[%s856 + $0x4] sm:$0xf]
        %v1949 = vld [vmem:[%s856 + $0x8] sm:$0xf]
        %v1950 = vld [vmem:[%s856 + $0xc] sm:$0xf]
        %v1951 = vld [vmem:[%s856 + $0x10] sm:$0xf]
        %v1952 = vld [vmem:[%s856 + $0x14] sm:$0xf]
        %v1953 = vld [vmem:[%s856 + $0x18] sm:$0xf]
        %v1954 = vld [vmem:[%s856 + $0x1c] sm:$0xf]
        %v1955 = vld [vmem:[%s856 + $0x20] sm:$0xf]
        %v1956 = vld [vmem:[%s856 + $0x24] sm:$0xf]
        %v1957 = vld [vmem:[%s856 + $0x28] sm:$0xf]
        %v1958 = vld [vmem:[%s856 + $0x2c] sm:$0xf]
        %v1959 = vld [vmem:[%s856 + $0x30] sm:$0xf]
        %v1960 = vld [vmem:[%s856 + $0x34] sm:$0xf]
        %v1961 = vld [vmem:[%s856 + $0x38] sm:$0xf]
        %v1962 = vld [vmem:[%s856 + $0x3c] sm:$0xf]
        %v1963 = vld [vmem:[%s856 + $0x40] sm:$0xf]
        %v1964 = vld [vmem:[%s856 + $0x44] sm:$0xf]
        %v1965 = vld [vmem:[%s856 + $0x48] sm:$0xf]
        %v1966 = vld [vmem:[%s856 + $0x4c] sm:$0xf]
        %v1967 = vld [vmem:[%s856 + $0x50] sm:$0xf]
        %v1968 = vld [vmem:[%s856 + $0x54] sm:$0xf]
        %v1969 = vld [vmem:[%s856 + $0x58] sm:$0xf]
        %v1970 = vld [vmem:[%s856 + $0x5c] sm:$0xf]
        %v1971 = vld [vmem:[%s856 + $0x60] sm:$0xf]
        %v1972 = vld [vmem:[%s856 + $0x64] sm:$0xf]
        %v1973 = vld [vmem:[%s856 + $0x68] sm:$0xf]
        %v1974 = vld [vmem:[%s856 + $0x6c] sm:$0xf]
        %v1975 = vld [vmem:[%s856 + $0x70] sm:$0xf]
        %v1976 = vld [vmem:[%s856 + $0x74] sm:$0xf]
        %v1977 = vld [vmem:[%s856 + $0x78] sm:$0xf]
        %v1978 = vld [vmem:[%s856 + $0x7c] sm:$0xf]
        %v1979 = vpack.c.bf16 %v1945, %v1943
        %v1980 = vpack.c.bf16 %v1946, %v1944
        %v2013 = vunpack.c.l.b16 %v1947
        %v2014 = vunpack.c.l.b16 %v1948
        %v2015 = vunpack.c.l.b16 %v1949
        %v2016 = vunpack.c.l.b16 %v1950
        %v2017 = vunpack.c.l.b16 %v1951
        %v2018 = vunpack.c.l.b16 %v1952
        %v2019 = vunpack.c.l.b16 %v1953
        %v2020 = vunpack.c.l.b16 %v1954
        %v2021 = vunpack.c.l.b16 %v1955
        %v2022 = vunpack.c.l.b16 %v1956
        %v2023 = vunpack.c.l.b16 %v1957
        %v2024 = vunpack.c.l.b16 %v1958
        %v2025 = vunpack.c.l.b16 %v1959
        %v2026 = vunpack.c.l.b16 %v1960
        %v2027 = vunpack.c.l.b16 %v1961
        %v2028 = vunpack.c.l.b16 %v1962
        %v2029 = vunpack.c.l.b16 %v1963
        %v2030 = vunpack.c.l.b16 %v1964
        %v2031 = vunpack.c.l.b16 %v1965
        %v2032 = vunpack.c.l.b16 %v1966
        %v2033 = vunpack.c.l.b16 %v1967
        %v2034 = vunpack.c.l.b16 %v1968
        %v2035 = vunpack.c.l.b16 %v1969
        %v2036 = vunpack.c.l.b16 %v1970
        %v2037 = vunpack.c.l.b16 %v1971
        %v2038 = vunpack.c.l.b16 %v1972
        %v2039 = vunpack.c.l.b16 %v1973
        %v2040 = vunpack.c.l.b16 %v1974
        %v2041 = vunpack.c.l.b16 %v1975
        %v2042 = vunpack.c.l.b16 %v1976
        %v2043 = vunpack.c.l.b16 %v1977
        %v2044 = vunpack.c.l.b16 %v1978
        %v2045 = vpack.c.b16 %v2014, %v2013
        %v2046 = vpack.c.b16 %v2016, %v2015
        %v2047 = vpack.c.b16 %v2018, %v2017
        %v2048 = vpack.c.b16 %v2020, %v2019
        %v2049 = vpack.c.b16 %v2022, %v2021
        %v2050 = vpack.c.b16 %v2024, %v2023
        %v2051 = vpack.c.b16 %v2026, %v2025
        %v2052 = vpack.c.b16 %v2028, %v2027
        %v2053 = vpack.c.b16 %v2030, %v2029
        %v2054 = vpack.c.b16 %v2032, %v2031
        %v2055 = vpack.c.b16 %v2034, %v2033
        %v2056 = vpack.c.b16 %v2036, %v2035
        %v2057 = vpack.c.b16 %v2038, %v2037
        %v2058 = vpack.c.b16 %v2040, %v2039
        %v2059 = vpack.c.b16 %v2042, %v2041
        %v2060 = vpack.c.b16 %v2044, %v2043
        %2077 = vmatpush.bf16.msra.mxu0 %v2052
        %2078 = vmatpush.bf16.msra.mxu0 %v2051
        %2079 = vmatpush.bf16.msra.mxu0 %v2050
        %2080 = vmatpush.bf16.msra.mxu0 %v2049
        %2081 = vmatpush.bf16.msra.mxu0 %v2048
        %2082 = vmatpush.bf16.msra.mxu0 %v2047
        %2083 = vmatpush.bf16.msra.mxu0 %v2046
        %2084 = vmatpush.bf16.msra.mxu0 %v2045
        %2085 = vmatmul.bf16.gmra.mxu0 %v1979
        %v2086 = vpop.f32.mrf.mxu0
        %v2087 = vadd.f32 0.0, %v2086
        %v2088 = vpop.f32.mrf.mxu0
        %v2089 = vadd.f32 0.0, %v2088
        %2090 = vdwg.mxu0
        %2091 = vmatpush.bf16.msra.mxu0 %v2060
        %2092 = vmatpush.bf16.msra.mxu0 %v2059
        %2093 = vmatpush.bf16.msra.mxu0 %v2058
        %2094 = vmatpush.bf16.msra.mxu0 %v2057
        %2095 = vmatpush.bf16.msra.mxu0 %v2056
        %2096 = vmatpush.bf16.msra.mxu0 %v2055
        %2097 = vmatpush.bf16.msra.mxu0 %v2054
        %2098 = vmatpush.bf16.msra.mxu0 %v2053
        %2099 = vmatmul.bf16.gmra.mxu0 %v1980
        %v2100 = vpop.f32.mrf.mxu0
        %v2101 = vadd.f32 %v2087, %v2100
        %v2102 = vpop.f32.mrf.mxu0
        %v2103 = vadd.f32 %v2089, %v2102
        %2104 = vdwg.mxu0
        %v2105 = vadd.f32 %v1720, %v2101
        %v2106 = vadd.f32 %v1721, %v2103
        %v2107 = vld [vmem:[%s865] sm:$0x1]
        %v2109 = vperm.slane %v2107, 0
        %v2111 = vadd.f32 %v2105, %v2109
        %v2112 = vadd.f32 %v2106, %v2109
        %2113 = vst [vmem:[#allocation2] sm:$0xff] %v2111
        %2114 = vst [vmem:[#allocation2 + $0x8] sm:$0xff] %v2112
        %p2115 = scmp.eq.s32.totalorder %s47, 2
        // Predicated region
        $region149: #{gpt_forward.1} parent=87 // pred_check
          %p2116 = pneg %p2115
        $region150: #{gpt_forward.1} parent=87 // pred_check_branch
          %2118 = sbr.rel (%p2116) target = $region152
        $region151: #{gpt_forward.1} parent=87 // pred_region
          %2119 = vadd.xlane.f32.xlu0 %v2111
          %v2120 = vpop.xlane.xlu0 %2119
          %2121 = vadd.xlane.f32.xlu0 %v2112
          %v2122 = vpop.xlane.xlu0 %2121
          %v2123 = vmul.f32 %v2120, 0.020833334
          %v2124 = vmul.f32 %v2122, 0.020833334
          %v2125 = vsub.f32 %v2111, %v2123
          %v2126 = vsub.f32 %v2112, %v2124
          %v2127 = vmul.f32 %v2125, %v2125
          %v2128 = vmul.f32 %v2126, %v2126
          %v2129 = vmul.f32 %v2127, %v1084
          %v2130 = vmul.f32 %v2128, %v1084
          %2131 = vadd.xlane.f32.xlu0 %v2129
          %v2132 = vpop.xlane.xlu0 %2131
          %2133 = vadd.xlane.f32.xlu0 %v2130
          %v2134 = vpop.xlane.xlu0 %2133
          %v2135 = vmul.f32 %v2132, 0.020833334
          %v2136 = vmul.f32 %v2134, 0.020833334
          %v2137 = vadd.f32 %v2135, 1e-05
          %v2138 = vadd.f32 %v2136, 1e-05
          %v2139 = vrsqrt.pop %v2137
          %v2140 = vmul.f32 %v2139, %v2137
          %v2141 = vmul.f32 %v2140, %v2139
          %v2142 = vmul.f32 0.5, %v2141
          %v2143 = vsub.f32 1.5, %v2142
          %v2144 = vmul.f32 %v2139, %v2143
          %vm2145 = vweird.f32 %v2137
          %vm2146 = vweird.f32 %v2139
          %vm2147 = vmor %vm2145, %vm2146
          %v2148 = vsel %vm2147, %v2139, %v2144
          %v2149 = vrsqrt.pop %v2138
          %v2150 = vmul.f32 %v2149, %v2138
          %v2151 = vmul.f32 %v2150, %v2149
          %v2152 = vmul.f32 0.5, %v2151
          %v2153 = vsub.f32 1.5, %v2152
          %v2154 = vmul.f32 %v2149, %v2153
          %vm2155 = vweird.f32 %v2138
          %vm2156 = vweird.f32 %v2149
          %vm2157 = vmor %vm2155, %vm2156
          %v2158 = vsel %vm2157, %v2149, %v2154
          %v2159 = vmul.f32 %v2125, %v2148
          %v2160 = vmul.f32 %v2126, %v2158
          %v2161 = vld [vmem:[#allocation23] sm:$0xf]
          %v2162 = vld [vmem:[#allocation23 + $0x4] sm:$0xf]
          %v2163 = vld [vmem:[#allocation23 + $0x8] sm:$0xf]
          %v2164 = vld [vmem:[#allocation23 + $0xc] sm:$0xf]
          %v2165 = vld [vmem:[#allocation23 + $0x10] sm:$0xf]
          %v2166 = vld [vmem:[#allocation23 + $0x14] sm:$0xf]
          %v2167 = vld [vmem:[#allocation23 + $0x18] sm:$0xf]
          %v2168 = vld [vmem:[#allocation23 + $0x1c] sm:$0xf]
          %v2169 = vld [vmem:[#allocation23 + $0x20] sm:$0xf]
          %v2170 = vld [vmem:[#allocation23 + $0x24] sm:$0xf]
          %v2171 = vld [vmem:[#allocation23 + $0x28] sm:$0xf]
          %v2172 = vld [vmem:[#allocation23 + $0x2c] sm:$0xf]
          %v2173 = vld [vmem:[#allocation23 + $0x30] sm:$0xf]
          %v2174 = vld [vmem:[#allocation23 + $0x34] sm:$0xf]
          %v2175 = vld [vmem:[#allocation23 + $0x38] sm:$0xf]
          %v2176 = vld [vmem:[#allocation23 + $0x3c] sm:$0xf]
          %v2177 = vpack.c.bf16 %v2160, %v2159
          %v2194 = vunpack.c.l.b16 %v2161
          %v2195 = vunpack.c.l.b16 %v2162
          %v2196 = vunpack.c.l.b16 %v2163
          %v2197 = vunpack.c.l.b16 %v2164
          %v2198 = vunpack.c.l.b16 %v2165
          %v2199 = vunpack.c.l.b16 %v2166
          %v2200 = vunpack.c.l.b16 %v2167
          %v2201 = vunpack.c.l.b16 %v2168
          %v2202 = vunpack.c.l.b16 %v2169
          %v2203 = vunpack.c.l.b16 %v2170
          %v2204 = vunpack.c.l.b16 %v2171
          %v2205 = vunpack.c.l.b16 %v2172
          %v2206 = vunpack.c.l.b16 %v2173
          %v2207 = vunpack.c.l.b16 %v2174
          %v2208 = vunpack.c.l.b16 %v2175
          %v2209 = vunpack.c.l.b16 %v2176
          %v2210 = vpack.c.b16 %v2195, %v2194
          %v2211 = vpack.c.b16 %v2197, %v2196
          %v2212 = vpack.c.b16 %v2199, %v2198
          %v2213 = vpack.c.b16 %v2201, %v2200
          %v2214 = vpack.c.b16 %v2203, %v2202
          %v2215 = vpack.c.b16 %v2205, %v2204
          %v2216 = vpack.c.b16 %v2207, %v2206
          %v2217 = vpack.c.b16 %v2209, %v2208
          %2226 = vmatpush.bf16.msra.mxu0 %v2217
          %2227 = vmatpush.bf16.msra.mxu0 %v2216
          %2228 = vmatpush.bf16.msra.mxu0 %v2215
          %2229 = vmatpush.bf16.msra.mxu0 %v2214
          %2230 = vmatpush.bf16.msra.mxu0 %v2213
          %2231 = vmatpush.bf16.msra.mxu0 %v2212
          %2232 = vmatpush.bf16.msra.mxu0 %v2211
          %2233 = vmatpush.bf16.msra.mxu0 %v2210
          %2234 = vmatmul.bf16.gmra.mxu0 %v2177
          %v2235 = vpop.f32.mrf.mxu0
          %v2236 = vadd.f32 0.0, %v2235
          %v2237 = vpop.f32.mrf.mxu0
          %v2238 = vadd.f32 0.0, %v2237
          %2239 = vdwg.mxu0
          %v2240 = vld [vmem:[#allocation25] sm:$0x1]
          %v2242 = vperm.slane %v2240, 0
          %v2244 = vadd.f32 %v2236, %v2242
          %v2245 = vadd.f32 %v2238, %v2242
          %2246 = vst [vmem:[#allocation26] sm:$0xff] %v2244
          %2247 = vst [vmem:[#allocation26 + $0x8] sm:$0xff] %v2245
        $region152: #{gpt_forward.1} parent=87 // pred_fallthru
          _
        // Predicated region
        $region153: #{gpt_forward.1} parent=87 // pred_check
          %p2248 = pneg %p477
        $region154: #{gpt_forward.1} parent=87 // pred_check_branch
          %2250 = sbr.rel (%p2248) target = $region156
        $region155: #{gpt_forward.1} parent=87 // pred_region
          %2252 = vsyncadd [#allocation5], 0
          %s2253 = sshll.u32 [#allocation26], 4
          %s2254 = int_to_ptr.vmem [resolvable:$true] %s2253
          %s2255 = sshll.u32 %s17, 4
          %s2256 = int_to_ptr.hbm [resolvable:$true] %s2255
          %2261 = dma.vmem_to_hbm [thread:$0]  %s2254, 256, %s2256, [#allocation5], 128, 128, 8
        $region156: #{gpt_forward.1} parent=87 // pred_fallthru
          _
        // Predicated region
        $region157: #{gpt_forward.1} parent=87 // pred_check
          %p2262 = pneg %p477
        $region158: #{gpt_forward.1} parent=87 // pred_check_branch
          %2264 = sbr.rel (%p2262) target = $region160
        $region159: #{gpt_forward.1} parent=87 // pred_region
          %2266 = dma.done [#allocation5], 256
        $region160: #{gpt_forward.1} parent=87 // pred_fallthru
          _
      $region88: #{gpt_forward.1} parent=5 // pred_fallthru
        _
      %p2267 = scmp.le.s32.totalorder 2, %s42
      // Predicated region
      $region161: #{gpt_forward.1} parent=5 // pred_check
        %p2268 = pneg %p2267
      $region162: #{gpt_forward.1} parent=5 // pred_check_branch
        %2270 = sbr.rel (%p2268) target = $region164
      $region163: #{gpt_forward.1} parent=5 // pred_region
        %s2271 = ssub.s32 %s42, 2
      $region164: #{gpt_forward.1} parent=5 // pred_fallthru
        _
    $region6: #{gpt_forward.1} parent=1 // loop_footer
      %s46 = sadd.s32 1, %s42
    $region7: #{gpt_forward.1} parent=1 // loop_footer_branch
      %41 = sbr.rel target = $region3
    $region8: #{gpt_forward.1} parent=1 // loop_exit
      _
    %2272 = vsyncpa [#allocation4], 1
    %s2273 = scalar_lea.sflag [#allocation4], 1
    %2274 = vsyncpa %s2273, 1
    %2275 = vsyncpa [#allocation9], 1
    %s2276 = scalar_lea.sflag [#allocation9], 1
    %2277 = vsyncpa %s2276, 1
    %2278 = vsyncpa [#allocation12], 1
    %s2279 = scalar_lea.sflag [#allocation12], 1
    %2280 = vsyncpa %s2279, 1
    %2281 = vsyncpa [#allocation15], 1
    %s2282 = scalar_lea.sflag [#allocation15], 1
    %2283 = vsyncpa %s2282, 1
    %2284 = vsyncpa [#allocation18], 1
    %s2285 = scalar_lea.sflag [#allocation18], 1
    %2286 = vsyncpa %s2285, 1
    %2287 = vsyncpa [#allocation21], 1
    %s2288 = scalar_lea.sflag [#allocation21], 1
    %2289 = vsyncpa %s2288, 1
    %2290 = vsyncpa [#allocation24], 1
    %2291 = vsyncpa [#allocation5], 1
    %s2292 = scalar_lea.sflag [#allocation5], 1
    %2293 = vsyncpa %s2292, 1
    %2294 = vsyncpa [#allocation6], 1
    %s2295 = scalar_lea.sflag [#allocation6], 1
    %2296 = vsyncpa %s2295, 1

</llo_original>
